<compile_context>
chip_gen: v7x
topology: tpu7x:2x2x1
jax: 0.10.0
libtpu: 0.0.40
codegen_flags: <defaults>
</compile_context>

<pallas_src>
import numpy as np
import jax
import jax.numpy as jnp
from jax import lax
from jax.experimental import pallas as pl
from jax.experimental.pallas import tpu as pltpu

FEATURE_DIM = 32  # feature_dim of the module; final_weight has shape (feature_dim, 10)


# ----------------------------------------------------------------------------
# Fused kernel: whole network forward for one batch tile of `tb` samples.
# ----------------------------------------------------------------------------
def _net_fused_kernel(xv_ref, w1_ref, b1_ref, w2_ref, b2_ref,
                      wf1_ref, bf1_ref, wh_ref, ch_ref, out_ref):
    tb = out_ref.shape[0]

    # ---- conv1 as banded width-matmuls, 2x2 max-pool folded, + bias + ReLU ----
    # xv_ref[t]: (16*tb, 28); rows ordered (conv-half-row i, sample); view t holds
    # image rows t, t+2, ..., (rows >= 12 per sample are zero padding).
    xs = [xv_ref[t] for t in range(6)]
    acc1 = []
    for dr in range(2):                                   # output-row parity
        a = jnp.dot(xs[dr], w1_ref[0], preferred_element_type=jnp.float32)
        for kh in range(1, 5):
            a = a + jnp.dot(xs[dr + kh], w1_ref[kh],
                            preferred_element_type=jnp.float32)
        acc1.append(a)                                    # (16*tb, 240) lanes (dc, j, co)
    m1 = jnp.maximum(acc1[0], acc1[1])                    # pool over row parity
    m1 = jnp.maximum(m1[:, :120], m1[:, 120:])            # pool over col parity
    h1 = jnp.maximum(m1 + b1_ref[...], 0.0)               # (16*tb, 120) rows (i, sample)

    # ---- conv2 as banded width-matmuls, 2x2 max-pool folded, + bias + ReLU ----
    def gather_rows(t2):
        # h1 rows i = t2, t2+2, t2+4, t2+6 for every sample -> (4*tb, 120), rows (i2, sample)
        return jnp.concatenate(
            [h1[(t2 + 2 * m) * tb:(t2 + 2 * m + 1) * tb, :] for m in range(4)],
            axis=0)

    hs = [gather_rows(t2) for t2 in range(6)]
    acc2 = []
    for dr in range(2):
        a = jnp.dot(hs[dr], w2_ref[0], preferred_element_type=jnp.float32)
        for kh in range(1, 5):
            a = a + jnp.dot(hs[dr + kh], w2_ref[kh],
                            preferred_element_type=jnp.float32)
        acc2.append(a)                                    # (4*tb, 160) lanes (dc, jout, co)
    m2 = jnp.maximum(acc2[0], acc2[1])
    m2 = jnp.maximum(m2[:, :80], m2[:, 80:])
    h2 = jnp.maximum(m2 + b2_ref[...], 0.0)               # (4*tb, 80) rows (i2, sample)

    # ---- fc1 + ReLU (CHW->HWC permutation already folded into wf1 chunks) ----
    f = jnp.dot(h2[:tb, :], wf1_ref[0], preferred_element_type=jnp.float32)
    for i2 in range(1, 4):
        f = f + jnp.dot(h2[i2 * tb:(i2 + 1) * tb, :], wf1_ref[i2],
                        preferred_element_type=jnp.float32)
    f = jnp.maximum(f + bf1_ref[...], 0.0)                # (tb, 100)

    # ---- (fc2 @ final_weight) pre-folded into one weight + log_softmax ----
    logits = jnp.dot(f, wh_ref[...], preferred_element_type=jnp.float32) + ch_ref[...]
    m = jnp.max(logits, axis=-1, keepdims=True)
    lse = jnp.log(jnp.sum(jnp.exp(logits - m), axis=-1, keepdims=True)) + m
    out_ref[...] = logits - lse


# ----------------------------------------------------------------------------
# Wrapper-side weight preparation (pure JAX, done once per call outside kernel)
# ----------------------------------------------------------------------------
def _banded_conv1_weights(w1):
    # W1[kh, c_img, dc*120 + j*10 + co] = w1[co, 0, kh, c_img - (2j + dc)]  (0 if out of band)
    lane = np.arange(240)
    co = lane % 10
    j = (lane % 120) // 10
    dc = lane // 120
    out_col = 2 * j + dc
    c_img = np.arange(28)
    kw = c_img[:, None] - out_col[None, :]
    valid = (kw >= 0) & (kw <= 4)
    kwc = np.clip(kw, 0, 4)
    w1k = w1[:, 0, :, :]                                  # (10, 5, 5)  [co, kh, kw]
    gathered = w1k[co[None, None, :], np.arange(5)[:, None, None], kwc[None, :, :]]
    return jnp.where(jnp.asarray(valid)[None, :, :], gathered, 0.0)     # (5, 28, 240)


def _banded_conv2_weights(w2):
    # W2[kh, jin*10 + cin, dc*80 + jout*20 + co] = w2[co, cin, kh, jin - (2*jout + dc)]
    rin = np.arange(120)
    jin = rin // 10
    cin = rin % 10
    lane = np.arange(160)
    dc = lane // 80
    jout = (lane % 80) // 20
    co = lane % 20
    out_col = 2 * jout + dc
    kw = jin[:, None] - out_col[None, :]
    valid = (kw >= 0) & (kw <= 4)
    kwc = np.clip(kw, 0, 4)
    gathered = w2[co[None, None, :], cin[None, :, None],
                  np.arange(5)[:, None, None], kwc[None, :, :]]
    return jnp.where(jnp.asarray(valid)[None, :, :], gathered, 0.0)     # (5, 120, 160)


def _fc1_hwc_weights(wf1):
    # Wf1hwc[i2, jout*20 + co, n] = wf1[n, co*16 + i2*4 + jout]
    i2 = np.arange(4)
    l = np.arange(80)
    jout = l // 20
    co = l % 20
    chw = co[None, :] * 16 + i2[:, None] * 4 + jout[None, :]            # (4, 80)
    return jnp.transpose(wf1)[jnp.asarray(chw)]                         # (4, 80, 100)


def net_forward(x, params, final_weight, *, tb=None):
    """Equivalent of Net.forward(x, final_weight). x: (B,1,28,28) or (B,784)."""
    w1, b1, w2, b2, wf1, bf1, wf2, bf2 = params
    x_img = jnp.asarray(x, jnp.float32).reshape(-1, 28, 28)
    B = x_img.shape[0]
    if tb is None:
        tb = 64 if B >= 64 else 8
    G = -(-B // tb)
    Bp = G * tb
    if Bp != B:
        x_img = jnp.pad(x_img, ((0, Bp - B), (0, 0), (0, 0)))

    # Six stride-2 row-shifted views of the image (one per output-row-parity + kh
    # combination), padded to 16 rows per sample, rearranged so the kernel's matmul
    # rows are (conv-half-row, sample) with the sample index minor inside a tile.
    views = [jnp.pad(x_img[:, t:t + 23:2, :], ((0, 0), (0, 4), (0, 0)))
             for t in range(6)]                            # each (Bp, 16, 28)
    xv = jnp.stack(views, axis=0)                          # (6, Bp, 16, 28)
    xv = (xv.reshape(6, G, tb, 16, 28)
            .transpose(1, 0, 3, 2, 4)
            .reshape(G, 6, 16 * tb, 28))

    w1m = _banded_conv1_weights(w1)                        # (5, 28, 240)
    b1row = jnp.tile(b1, 12)[None, :]                      # (1, 120)  lane = j*10 + co
    w2m = _banded_conv2_weights(w2)                        # (5, 120, 160)
    b2row = jnp.tile(b2, 4)[None, :]                       # (1, 80)   lane = jout*20 + co
    wf1m = _fc1_hwc_weights(wf1)                           # (4, 80, 100)
    bf1row = bf1[None, :]                                  # (1, 100)
    # fc2 and the final_weight matmul have no nonlinearity between them -> fold.
    whead = jnp.dot(jnp.transpose(wf2), final_weight,
                    precision=lax.Precision.HIGHEST)       # (100, 10)
    chead = jnp.dot(bf2, final_weight,
                    precision=lax.Precision.HIGHEST)[None, :]  # (1, 10)

    out = pl.pallas_call(
        _net_fused_kernel,
        out_shape=jax.ShapeDtypeStruct((Bp, 10), jnp.float32),
        grid=(G,),
        in_specs=[
            pl.BlockSpec((None, 6, 16 * tb, 28), lambda g: (g, 0, 0, 0)),
            pl.BlockSpec((5, 28, 240), lambda g: (0, 0, 0)),
            pl.BlockSpec((1, 120), lambda g: (0, 0)),
            pl.BlockSpec((5, 120, 160), lambda g: (0, 0, 0)),
            pl.BlockSpec((1, 80), lambda g: (0, 0)),
            pl.BlockSpec((4, 80, 100), lambda g: (0, 0, 0)),
            pl.BlockSpec((1, 100), lambda g: (0, 0)),
            pl.BlockSpec((100, 10), lambda g: (0, 0)),
            pl.BlockSpec((1, 10), lambda g: (0, 0)),
        ],
        out_specs=pl.BlockSpec((tb, 10), lambda g: (g, 0)),
        compiler_params=pltpu.CompilerParams(dimension_semantics=("parallel",)),
    )(xv, w1m, b1row, w2m, b2row, wf1m, bf1row, whead, chead)
    return out[:B]


# ----------------------------------------------------------------------------
# Pure-JAX reference (independent of the kernel) for correctness checking
# ----------------------------------------------------------------------------
def reference_forward(x, params, final_weight):
    w1, b1, w2, b2, wf1, bf1, wf2, bf2 = params
    hp = lax.Precision.HIGHEST
    y = x.reshape(-1, 1, 28, 28).astype(jnp.float32)
    y = lax.conv_general_dilated(y, w1, (1, 1), "VALID",
                                 dimension_numbers=("NCHW", "OIHW", "NCHW"),
                                 precision=hp) + b1.reshape(1, -1, 1, 1)
    y = lax.reduce_window(y, -jnp.inf, lax.max, (1, 1, 2, 2), (1, 1, 2, 2), "VALID")
    y = jnp.maximum(y, 0.0)
    y = lax.conv_general_dilated(y, w2, (1, 1), "VALID",
                                 dimension_numbers=("NCHW", "OIHW", "NCHW"),
                                 precision=hp) + b2.reshape(1, -1, 1, 1)
    y = lax.reduce_window(y, -jnp.inf, lax.max, (1, 1, 2, 2), (1, 1, 2, 2), "VALID")
    y = jnp.maximum(y, 0.0)
    y = y.reshape(y.shape[0], 320)
    h = jnp.maximum(jnp.dot(y, wf1.T, precision=hp) + bf1, 0.0)
    f = jnp.dot(h, wf2.T, precision=hp) + bf2
    logits = jnp.dot(f, final_weight, precision=hp)
    return jax.nn.log_softmax(logits, axis=-1)


if __name__ == "__main__":
    B = 2
    F = FEATURE_DIM
    key = jax.random.PRNGKey(0)
    ks = jax.random.split(key, 10)

    # deterministic synthetic parameters (shapes from Net.__init__)
    w1 = jax.random.normal(ks[0], (10, 1, 5, 5), jnp.float32) * 0.1    # conv1.weight
    b1 = jax.random.normal(ks[1], (10,), jnp.float32) * 0.1            # conv1.bias
    w2 = jax.random.normal(ks[2], (20, 10, 5, 5), jnp.float32) * 0.1   # conv2.weight
    b2 = jax.random.normal(ks[3], (20,), jnp.float32) * 0.1            # conv2.bias
    wf1 = jax.random.normal(ks[4], (100, 320), jnp.float32) * 0.05     # fc1.weight
    bf1 = jax.random.normal(ks[5], (100,), jnp.float32) * 0.05         # fc1.bias
    wf2 = jax.random.normal(ks[6], (F, 100), jnp.float32) * 0.05       # fc2.weight
    bf2 = jax.random.normal(ks[7], (F,), jnp.float32) * 0.05           # fc2.bias
    # a "final_weight" sample (as produced from q_mu/q_diag in train()), shape (F, 10)
    final_weight = (jax.random.normal(ks[8], (F * 10,), jnp.float32) * 0.1).reshape(F, 10)

    x = jax.random.normal(ks[9], (B, 1, 28, 28), jnp.float32)
    params = (w1, b1, w2, b2, wf1, bf1, wf2, bf2)

    out = jax.jit(net_forward)(x, params, final_weight)
    out = jax.block_until_ready(out)

    ref = reference_forward(x, params, final_weight)
    np.testing.assert_allclose(np.asarray(out), np.asarray(ref), rtol=2e-2, atol=2e-2)

    print("KERNEL_OK")
</pallas_src>

<mosaic_0001>
module attributes {stable_mosaic.version = 11 : i64} {
  func.func @_net_fused_kernel(%arg0: i32, %arg1: memref<1x6x128x28xf32, #tpu.memory_space<vmem>>, %arg2: memref<5x28x240xf32, #tpu.memory_space<vmem>>, %arg3: memref<1x120xf32, #tpu.memory_space<vmem>>, %arg4: memref<5x120x160xf32, #tpu.memory_space<vmem>>, %arg5: memref<1x80xf32, #tpu.memory_space<vmem>>, %arg6: memref<4x80x100xf32, #tpu.memory_space<vmem>>, %arg7: memref<1x100xf32, #tpu.memory_space<vmem>>, %arg8: memref<100x10xf32, #tpu.memory_space<vmem>>, %arg9: memref<1x10xf32, #tpu.memory_space<vmem>>, %arg10: memref<8x10xf32, #tpu.memory_space<vmem>>) attributes {dimension_semantics = [#tpu.dimension_semantics<parallel>], iteration_bounds = array<i64: 1>, scalar_prefetch = 0 : i64, scratch_operands = 0 : i64, tpu.core_type = #tpu.core_type<tc>, window_params = [{transform_indices = @transform_0, window_bounds = array<i64: 1, 6, 128, 28>}, {pipeline_mode = #tpu.pipeline_mode<synchronous>, transform_indices = @transform_1, window_bounds = array<i64: 5, 28, 240>}, {pipeline_mode = #tpu.pipeline_mode<synchronous>, transform_indices = @transform_2, window_bounds = array<i64: 1, 120>}, {pipeline_mode = #tpu.pipeline_mode<synchronous>, transform_indices = @transform_3, window_bounds = array<i64: 5, 120, 160>}, {pipeline_mode = #tpu.pipeline_mode<synchronous>, transform_indices = @transform_4, window_bounds = array<i64: 1, 80>}, {pipeline_mode = #tpu.pipeline_mode<synchronous>, transform_indices = @transform_5, window_bounds = array<i64: 4, 80, 100>}, {pipeline_mode = #tpu.pipeline_mode<synchronous>, transform_indices = @transform_6, window_bounds = array<i64: 1, 100>}, {pipeline_mode = #tpu.pipeline_mode<synchronous>, transform_indices = @transform_7, window_bounds = array<i64: 100, 10>}, {pipeline_mode = #tpu.pipeline_mode<synchronous>, transform_indices = @transform_8, window_bounds = array<i64: 1, 10>}, {transform_indices = @transform_9, window_bounds = array<i64: 8, 10>}]} {
    %c0 = arith.constant 0 : index
    %c0_0 = arith.constant 0 : index
    %c0_1 = arith.constant 0 : index
    %c0_2 = arith.constant 0 : index
    %0 = vector.load %arg1[%c0, %c0_0, %c0_1, %c0_2] : memref<1x6x128x28xf32, #tpu.memory_space<vmem>>, vector<1x1x128x28xf32>
    %1 = vector.shape_cast %0 : vector<1x1x128x28xf32> to vector<128x28xf32>
    %c0_3 = arith.constant 0 : index
    %c1 = arith.constant 1 : index
    %c0_4 = arith.constant 0 : index
    %c0_5 = arith.constant 0 : index
    %2 = vector.load %arg1[%c0_3, %c1, %c0_4, %c0_5] : memref<1x6x128x28xf32, #tpu.memory_space<vmem>>, vector<1x1x128x28xf32>
    %3 = vector.shape_cast %2 : vector<1x1x128x28xf32> to vector<128x28xf32>
    %c0_6 = arith.constant 0 : index
    %c2 = arith.constant 2 : index
    %c0_7 = arith.constant 0 : index
    %c0_8 = arith.constant 0 : index
    %4 = vector.load %arg1[%c0_6, %c2, %c0_7, %c0_8] : memref<1x6x128x28xf32, #tpu.memory_space<vmem>>, vector<1x1x128x28xf32>
    %5 = vector.shape_cast %4 : vector<1x1x128x28xf32> to vector<128x28xf32>
    %c0_9 = arith.constant 0 : index
    %c3 = arith.constant 3 : index
    %c0_10 = arith.constant 0 : index
    %c0_11 = arith.constant 0 : index
    %6 = vector.load %arg1[%c0_9, %c3, %c0_10, %c0_11] : memref<1x6x128x28xf32, #tpu.memory_space<vmem>>, vector<1x1x128x28xf32>
    %7 = vector.shape_cast %6 : vector<1x1x128x28xf32> to vector<128x28xf32>
    %c0_12 = arith.constant 0 : index
    %c4 = arith.constant 4 : index
    %c0_13 = arith.constant 0 : index
    %c0_14 = arith.constant 0 : index
    %8 = vector.load %arg1[%c0_12, %c4, %c0_13, %c0_14] : memref<1x6x128x28xf32, #tpu.memory_space<vmem>>, vector<1x1x128x28xf32>
    %9 = vector.shape_cast %8 : vector<1x1x128x28xf32> to vector<128x28xf32>
    %c0_15 = arith.constant 0 : index
    %c5 = arith.constant 5 : index
    %c0_16 = arith.constant 0 : index
    %c0_17 = arith.constant 0 : index
    %10 = vector.load %arg1[%c0_15, %c5, %c0_16, %c0_17] : memref<1x6x128x28xf32, #tpu.memory_space<vmem>>, vector<1x1x128x28xf32>
    %11 = vector.shape_cast %10 : vector<1x1x128x28xf32> to vector<128x28xf32>
    %c0_18 = arith.constant 0 : index
    %c0_19 = arith.constant 0 : index
    %c0_20 = arith.constant 0 : index
    %12 = vector.load %arg2[%c0_18, %c0_19, %c0_20] : memref<5x28x240xf32, #tpu.memory_space<vmem>>, vector<1x28x240xf32>
    %13 = vector.shape_cast %12 : vector<1x28x240xf32> to vector<28x240xf32>
    %cst = arith.constant dense<0.000000e+00> : vector<128x240xf32>
    %14 = tpu.matmul %1, %13, %cst {dimension_numbers = #tpu.dot_dimension_numbers<[1], [0], [0], [1], [0, 0, 1, 1], [], []>} : vector<128x28xf32>, vector<28x240xf32>, vector<128x240xf32> -> vector<128x240xf32>
    %c1_21 = arith.constant 1 : index
    %c0_22 = arith.constant 0 : index
    %c0_23 = arith.constant 0 : index
    %15 = vector.load %arg2[%c1_21, %c0_22, %c0_23] : memref<5x28x240xf32, #tpu.memory_space<vmem>>, vector<1x28x240xf32>
    %16 = vector.shape_cast %15 : vector<1x28x240xf32> to vector<28x240xf32>
    %cst_24 = arith.constant dense<0.000000e+00> : vector<128x240xf32>
    %17 = tpu.matmul %3, %16, %cst_24 {dimension_numbers = #tpu.dot_dimension_numbers<[1], [0], [0], [1], [0, 0, 1, 1], [], []>} : vector<128x28xf32>, vector<28x240xf32>, vector<128x240xf32> -> vector<128x240xf32>
    %18 = arith.addf %14, %17 : vector<128x240xf32>
    %c2_25 = arith.constant 2 : index
    %c0_26 = arith.constant 0 : index
    %c0_27 = arith.constant 0 : index
    %19 = vector.load %arg2[%c2_25, %c0_26, %c0_27] : memref<5x28x240xf32, #tpu.memory_space<vmem>>, vector<1x28x240xf32>
    %20 = vector.shape_cast %19 : vector<1x28x240xf32> to vector<28x240xf32>
    %cst_28 = arith.constant dense<0.000000e+00> : vector<128x240xf32>
    %21 = tpu.matmul %5, %20, %cst_28 {dimension_numbers = #tpu.dot_dimension_numbers<[1], [0], [0], [1], [0, 0, 1, 1], [], []>} : vector<128x28xf32>, vector<28x240xf32>, vector<128x240xf32> -> vector<128x240xf32>
    %22 = arith.addf %18, %21 : vector<128x240xf32>
    %c3_29 = arith.constant 3 : index
    %c0_30 = arith.constant 0 : index
    %c0_31 = arith.constant 0 : index
    %23 = vector.load %arg2[%c3_29, %c0_30, %c0_31] : memref<5x28x240xf32, #tpu.memory_space<vmem>>, vector<1x28x240xf32>
    %24 = vector.shape_cast %23 : vector<1x28x240xf32> to vector<28x240xf32>
    %cst_32 = arith.constant dense<0.000000e+00> : vector<128x240xf32>
    %25 = tpu.matmul %7, %24, %cst_32 {dimension_numbers = #tpu.dot_dimension_numbers<[1], [0], [0], [1], [0, 0, 1, 1], [], []>} : vector<128x28xf32>, vector<28x240xf32>, vector<128x240xf32> -> vector<128x240xf32>
    %26 = arith.addf %22, %25 : vector<128x240xf32>
    %c4_33 = arith.constant 4 : index
    %c0_34 = arith.constant 0 : index
    %c0_35 = arith.constant 0 : index
    %27 = vector.load %arg2[%c4_33, %c0_34, %c0_35] : memref<5x28x240xf32, #tpu.memory_space<vmem>>, vector<1x28x240xf32>
    %28 = vector.shape_cast %27 : vector<1x28x240xf32> to vector<28x240xf32>
    %cst_36 = arith.constant dense<0.000000e+00> : vector<128x240xf32>
    %29 = tpu.matmul %9, %28, %cst_36 {dimension_numbers = #tpu.dot_dimension_numbers<[1], [0], [0], [1], [0, 0, 1, 1], [], []>} : vector<128x28xf32>, vector<28x240xf32>, vector<128x240xf32> -> vector<128x240xf32>
    %30 = arith.addf %26, %29 : vector<128x240xf32>
    %c0_37 = arith.constant 0 : index
    %c0_38 = arith.constant 0 : index
    %c0_39 = arith.constant 0 : index
    %31 = vector.load %arg2[%c0_37, %c0_38, %c0_39] : memref<5x28x240xf32, #tpu.memory_space<vmem>>, vector<1x28x240xf32>
    %32 = vector.shape_cast %31 : vector<1x28x240xf32> to vector<28x240xf32>
    %cst_40 = arith.constant dense<0.000000e+00> : vector<128x240xf32>
    %33 = tpu.matmul %3, %32, %cst_40 {dimension_numbers = #tpu.dot_dimension_numbers<[1], [0], [0], [1], [0, 0, 1, 1], [], []>} : vector<128x28xf32>, vector<28x240xf32>, vector<128x240xf32> -> vector<128x240xf32>
    %c1_41 = arith.constant 1 : index
    %c0_42 = arith.constant 0 : index
    %c0_43 = arith.constant 0 : index
    %34 = vector.load %arg2[%c1_41, %c0_42, %c0_43] : memref<5x28x240xf32, #tpu.memory_space<vmem>>, vector<1x28x240xf32>
    %35 = vector.shape_cast %34 : vector<1x28x240xf32> to vector<28x240xf32>
    %cst_44 = arith.constant dense<0.000000e+00> : vector<128x240xf32>
    %36 = tpu.matmul %5, %35, %cst_44 {dimension_numbers = #tpu.dot_dimension_numbers<[1], [0], [0], [1], [0, 0, 1, 1], [], []>} : vector<128x28xf32>, vector<28x240xf32>, vector<128x240xf32> -> vector<128x240xf32>
    %37 = arith.addf %33, %36 : vector<128x240xf32>
    %c2_45 = arith.constant 2 : index
    %c0_46 = arith.constant 0 : index
    %c0_47 = arith.constant 0 : index
    %38 = vector.load %arg2[%c2_45, %c0_46, %c0_47] : memref<5x28x240xf32, #tpu.memory_space<vmem>>, vector<1x28x240xf32>
    %39 = vector.shape_cast %38 : vector<1x28x240xf32> to vector<28x240xf32>
    %cst_48 = arith.constant dense<0.000000e+00> : vector<128x240xf32>
    %40 = tpu.matmul %7, %39, %cst_48 {dimension_numbers = #tpu.dot_dimension_numbers<[1], [0], [0], [1], [0, 0, 1, 1], [], []>} : vector<128x28xf32>, vector<28x240xf32>, vector<128x240xf32> -> vector<128x240xf32>
    %41 = arith.addf %37, %40 : vector<128x240xf32>
    %c3_49 = arith.constant 3 : index
    %c0_50 = arith.constant 0 : index
    %c0_51 = arith.constant 0 : index
    %42 = vector.load %arg2[%c3_49, %c0_50, %c0_51] : memref<5x28x240xf32, #tpu.memory_space<vmem>>, vector<1x28x240xf32>
    %43 = vector.shape_cast %42 : vector<1x28x240xf32> to vector<28x240xf32>
    %cst_52 = arith.constant dense<0.000000e+00> : vector<128x240xf32>
    %44 = tpu.matmul %9, %43, %cst_52 {dimension_numbers = #tpu.dot_dimension_numbers<[1], [0], [0], [1], [0, 0, 1, 1], [], []>} : vector<128x28xf32>, vector<28x240xf32>, vector<128x240xf32> -> vector<128x240xf32>
    %45 = arith.addf %41, %44 : vector<128x240xf32>
    %c4_53 = arith.constant 4 : index
    %c0_54 = arith.constant 0 : index
    %c0_55 = arith.constant 0 : index
    %46 = vector.load %arg2[%c4_53, %c0_54, %c0_55] : memref<5x28x240xf32, #tpu.memory_space<vmem>>, vector<1x28x240xf32>
    %47 = vector.shape_cast %46 : vector<1x28x240xf32> to vector<28x240xf32>
    %cst_56 = arith.constant dense<0.000000e+00> : vector<128x240xf32>
    %48 = tpu.matmul %11, %47, %cst_56 {dimension_numbers = #tpu.dot_dimension_numbers<[1], [0], [0], [1], [0, 0, 1, 1], [], []>} : vector<128x28xf32>, vector<28x240xf32>, vector<128x240xf32> -> vector<128x240xf32>
    %49 = arith.addf %45, %48 : vector<128x240xf32>
    %50 = arith.maximumf %30, %49 : vector<128x240xf32>
    %51 = vector.extract_strided_slice %50 {offsets = [0, 0], sizes = [128, 120], strides = [1, 1]} : vector<128x240xf32> to vector<128x120xf32>
    %52 = vector.extract_strided_slice %50 {offsets = [0, 120], sizes = [128, 120], strides = [1, 1]} : vector<128x240xf32> to vector<128x120xf32>
    %53 = arith.maximumf %51, %52 : vector<128x120xf32>
    %c0_57 = arith.constant 0 : index
    %c0_58 = arith.constant 0 : index
    %54 = vector.load %arg3[%c0_57, %c0_58] : memref<1x120xf32, #tpu.memory_space<vmem>>, vector<1x120xf32>
    %55 = vector.broadcast %54 : vector<1x120xf32> to vector<128x120xf32>
    %56 = arith.addf %53, %55 : vector<128x120xf32>
    %cst_59 = arith.constant 0.000000e+00 : f32
    %57 = vector.broadcast %cst_59 : f32 to vector<128x120xf32>
    %58 = arith.maximumf %56, %57 : vector<128x120xf32>
    %59 = vector.extract_strided_slice %58 {offsets = [0, 0], sizes = [8, 120], strides = [1, 1]} : vector<128x120xf32> to vector<8x120xf32>
    %60 = vector.extract_strided_slice %58 {offsets = [16, 0], sizes = [8, 120], strides = [1, 1]} : vector<128x120xf32> to vector<8x120xf32>
    %61 = vector.extract_strided_slice %58 {offsets = [32, 0], sizes = [8, 120], strides = [1, 1]} : vector<128x120xf32> to vector<8x120xf32>
    %62 = vector.extract_strided_slice %58 {offsets = [48, 0], sizes = [8, 120], strides = [1, 1]} : vector<128x120xf32> to vector<8x120xf32>
    %63 = tpu.concatenate %59, %60, %61, %62 in 0 : vector<8x120xf32>, vector<8x120xf32>, vector<8x120xf32>, vector<8x120xf32> -> vector<32x120xf32>
    %64 = vector.extract_strided_slice %58 {offsets = [8, 0], sizes = [8, 120], strides = [1, 1]} : vector<128x120xf32> to vector<8x120xf32>
    %65 = vector.extract_strided_slice %58 {offsets = [24, 0], sizes = [8, 120], strides = [1, 1]} : vector<128x120xf32> to vector<8x120xf32>
    %66 = vector.extract_strided_slice %58 {offsets = [40, 0], sizes = [8, 120], strides = [1, 1]} : vector<128x120xf32> to vector<8x120xf32>
    %67 = vector.extract_strided_slice %58 {offsets = [56, 0], sizes = [8, 120], strides = [1, 1]} : vector<128x120xf32> to vector<8x120xf32>
    %68 = tpu.concatenate %64, %65, %66, %67 in 0 : vector<8x120xf32>, vector<8x120xf32>, vector<8x120xf32>, vector<8x120xf32> -> vector<32x120xf32>
    %69 = vector.extract_strided_slice %58 {offsets = [16, 0], sizes = [8, 120], strides = [1, 1]} : vector<128x120xf32> to vector<8x120xf32>
    %70 = vector.extract_strided_slice %58 {offsets = [32, 0], sizes = [8, 120], strides = [1, 1]} : vector<128x120xf32> to vector<8x120xf32>
    %71 = vector.extract_strided_slice %58 {offsets = [48, 0], sizes = [8, 120], strides = [1, 1]} : vector<128x120xf32> to vector<8x120xf32>
    %72 = vector.extract_strided_slice %58 {offsets = [64, 0], sizes = [8, 120], strides = [1, 1]} : vector<128x120xf32> to vector<8x120xf32>
    %73 = tpu.concatenate %69, %70, %71, %72 in 0 : vector<8x120xf32>, vector<8x120xf32>, vector<8x120xf32>, vector<8x120xf32> -> vector<32x120xf32>
    %74 = vector.extract_strided_slice %58 {offsets = [24, 0], sizes = [8, 120], strides = [1, 1]} : vector<128x120xf32> to vector<8x120xf32>
    %75 = vector.extract_strided_slice %58 {offsets = [40, 0], sizes = [8, 120], strides = [1, 1]} : vector<128x120xf32> to vector<8x120xf32>
    %76 = vector.extract_strided_slice %58 {offsets = [56, 0], sizes = [8, 120], strides = [1, 1]} : vector<128x120xf32> to vector<8x120xf32>
    %77 = vector.extract_strided_slice %58 {offsets = [72, 0], sizes = [8, 120], strides = [1, 1]} : vector<128x120xf32> to vector<8x120xf32>
    %78 = tpu.concatenate %74, %75, %76, %77 in 0 : vector<8x120xf32>, vector<8x120xf32>, vector<8x120xf32>, vector<8x120xf32> -> vector<32x120xf32>
    %79 = vector.extract_strided_slice %58 {offsets = [32, 0], sizes = [8, 120], strides = [1, 1]} : vector<128x120xf32> to vector<8x120xf32>
    %80 = vector.extract_strided_slice %58 {offsets = [48, 0], sizes = [8, 120], strides = [1, 1]} : vector<128x120xf32> to vector<8x120xf32>
    %81 = vector.extract_strided_slice %58 {offsets = [64, 0], sizes = [8, 120], strides = [1, 1]} : vector<128x120xf32> to vector<8x120xf32>
    %82 = vector.extract_strided_slice %58 {offsets = [80, 0], sizes = [8, 120], strides = [1, 1]} : vector<128x120xf32> to vector<8x120xf32>
    %83 = tpu.concatenate %79, %80, %81, %82 in 0 : vector<8x120xf32>, vector<8x120xf32>, vector<8x120xf32>, vector<8x120xf32> -> vector<32x120xf32>
    %84 = vector.extract_strided_slice %58 {offsets = [40, 0], sizes = [8, 120], strides = [1, 1]} : vector<128x120xf32> to vector<8x120xf32>
    %85 = vector.extract_strided_slice %58 {offsets = [56, 0], sizes = [8, 120], strides = [1, 1]} : vector<128x120xf32> to vector<8x120xf32>
    %86 = vector.extract_strided_slice %58 {offsets = [72, 0], sizes = [8, 120], strides = [1, 1]} : vector<128x120xf32> to vector<8x120xf32>
    %87 = vector.extract_strided_slice %58 {offsets = [88, 0], sizes = [8, 120], strides = [1, 1]} : vector<128x120xf32> to vector<8x120xf32>
    %88 = tpu.concatenate %84, %85, %86, %87 in 0 : vector<8x120xf32>, vector<8x120xf32>, vector<8x120xf32>, vector<8x120xf32> -> vector<32x120xf32>
    %c0_60 = arith.constant 0 : index
    %c0_61 = arith.constant 0 : index
    %c0_62 = arith.constant 0 : index
    %89 = vector.load %arg4[%c0_60, %c0_61, %c0_62] : memref<5x120x160xf32, #tpu.memory_space<vmem>>, vector<1x120x160xf32>
    %90 = vector.shape_cast %89 : vector<1x120x160xf32> to vector<120x160xf32>
    %cst_63 = arith.constant dense<0.000000e+00> : vector<32x160xf32>
    %91 = tpu.matmul %63, %90, %cst_63 {dimension_numbers = #tpu.dot_dimension_numbers<[1], [0], [0], [1], [0, 0, 1, 1], [], []>} : vector<32x120xf32>, vector<120x160xf32>, vector<32x160xf32> -> vector<32x160xf32>
    %c1_64 = arith.constant 1 : index
    %c0_65 = arith.constant 0 : index
    %c0_66 = arith.constant 0 : index
    %92 = vector.load %arg4[%c1_64, %c0_65, %c0_66] : memref<5x120x160xf32, #tpu.memory_space<vmem>>, vector<1x120x160xf32>
    %93 = vector.shape_cast %92 : vector<1x120x160xf32> to vector<120x160xf32>
    %cst_67 = arith.constant dense<0.000000e+00> : vector<32x160xf32>
    %94 = tpu.matmul %68, %93, %cst_67 {dimension_numbers = #tpu.dot_dimension_numbers<[1], [0], [0], [1], [0, 0, 1, 1], [], []>} : vector<32x120xf32>, vector<120x160xf32>, vector<32x160xf32> -> vector<32x160xf32>
    %95 = arith.addf %91, %94 : vector<32x160xf32>
    %c2_68 = arith.constant 2 : index
    %c0_69 = arith.constant 0 : index
    %c0_70 = arith.constant 0 : index
    %96 = vector.load %arg4[%c2_68, %c0_69, %c0_70] : memref<5x120x160xf32, #tpu.memory_space<vmem>>, vector<1x120x160xf32>
    %97 = vector.shape_cast %96 : vector<1x120x160xf32> to vector<120x160xf32>
    %cst_71 = arith.constant dense<0.000000e+00> : vector<32x160xf32>
    %98 = tpu.matmul %73, %97, %cst_71 {dimension_numbers = #tpu.dot_dimension_numbers<[1], [0], [0], [1], [0, 0, 1, 1], [], []>} : vector<32x120xf32>, vector<120x160xf32>, vector<32x160xf32> -> vector<32x160xf32>
    %99 = arith.addf %95, %98 : vector<32x160xf32>
    %c3_72 = arith.constant 3 : index
    %c0_73 = arith.constant 0 : index
    %c0_74 = arith.constant 0 : index
    %100 = vector.load %arg4[%c3_72, %c0_73, %c0_74] : memref<5x120x160xf32, #tpu.memory_space<vmem>>, vector<1x120x160xf32>
    %101 = vector.shape_cast %100 : vector<1x120x160xf32> to vector<120x160xf32>
    %cst_75 = arith.constant dense<0.000000e+00> : vector<32x160xf32>
    %102 = tpu.matmul %78, %101, %cst_75 {dimension_numbers = #tpu.dot_dimension_numbers<[1], [0], [0], [1], [0, 0, 1, 1], [], []>} : vector<32x120xf32>, vector<120x160xf32>, vector<32x160xf32> -> vector<32x160xf32>
    %103 = arith.addf %99, %102 : vector<32x160xf32>
    %c4_76 = arith.constant 4 : index
    %c0_77 = arith.constant 0 : index
    %c0_78 = arith.constant 0 : index
    %104 = vector.load %arg4[%c4_76, %c0_77, %c0_78] : memref<5x120x160xf32, #tpu.memory_space<vmem>>, vector<1x120x160xf32>
    %105 = vector.shape_cast %104 : vector<1x120x160xf32> to vector<120x160xf32>
    %cst_79 = arith.constant dense<0.000000e+00> : vector<32x160xf32>
    %106 = tpu.matmul %83, %105, %cst_79 {dimension_numbers = #tpu.dot_dimension_numbers<[1], [0], [0], [1], [0, 0, 1, 1], [], []>} : vector<32x120xf32>, vector<120x160xf32>, vector<32x160xf32> -> vector<32x160xf32>
    %107 = arith.addf %103, %106 : vector<32x160xf32>
    %c0_80 = arith.constant 0 : index
    %c0_81 = arith.constant 0 : index
    %c0_82 = arith.constant 0 : index
    %108 = vector.load %arg4[%c0_80, %c0_81, %c0_82] : memref<5x120x160xf32, #tpu.memory_space<vmem>>, vector<1x120x160xf32>
    %109 = vector.shape_cast %108 : vector<1x120x160xf32> to vector<120x160xf32>
    %cst_83 = arith.constant dense<0.000000e+00> : vector<32x160xf32>
    %110 = tpu.matmul %68, %109, %cst_83 {dimension_numbers = #tpu.dot_dimension_numbers<[1], [0], [0], [1], [0, 0, 1, 1], [], []>} : vector<32x120xf32>, vector<120x160xf32>, vector<32x160xf32> -> vector<32x160xf32>
    %c1_84 = arith.constant 1 : index
    %c0_85 = arith.constant 0 : index
    %c0_86 = arith.constant 0 : index
    %111 = vector.load %arg4[%c1_84, %c0_85, %c0_86] : memref<5x120x160xf32, #tpu.memory_space<vmem>>, vector<1x120x160xf32>
    %112 = vector.shape_cast %111 : vector<1x120x160xf32> to vector<120x160xf32>
    %cst_87 = arith.constant dense<0.000000e+00> : vector<32x160xf32>
    %113 = tpu.matmul %73, %112, %cst_87 {dimension_numbers = #tpu.dot_dimension_numbers<[1], [0], [0], [1], [0, 0, 1, 1], [], []>} : vector<32x120xf32>, vector<120x160xf32>, vector<32x160xf32> -> vector<32x160xf32>
    %114 = arith.addf %110, %113 : vector<32x160xf32>
    %c2_88 = arith.constant 2 : index
    %c0_89 = arith.constant 0 : index
    %c0_90 = arith.constant 0 : index
    %115 = vector.load %arg4[%c2_88, %c0_89, %c0_90] : memref<5x120x160xf32, #tpu.memory_space<vmem>>, vector<1x120x160xf32>
    %116 = vector.shape_cast %115 : vector<1x120x160xf32> to vector<120x160xf32>
    %cst_91 = arith.constant dense<0.000000e+00> : vector<32x160xf32>
    %117 = tpu.matmul %78, %116, %cst_91 {dimension_numbers = #tpu.dot_dimension_numbers<[1], [0], [0], [1], [0, 0, 1, 1], [], []>} : vector<32x120xf32>, vector<120x160xf32>, vector<32x160xf32> -> vector<32x160xf32>
    %118 = arith.addf %114, %117 : vector<32x160xf32>
    %c3_92 = arith.constant 3 : index
    %c0_93 = arith.constant 0 : index
    %c0_94 = arith.constant 0 : index
    %119 = vector.load %arg4[%c3_92, %c0_93, %c0_94] : memref<5x120x160xf32, #tpu.memory_space<vmem>>, vector<1x120x160xf32>
    %120 = vector.shape_cast %119 : vector<1x120x160xf32> to vector<120x160xf32>
    %cst_95 = arith.constant dense<0.000000e+00> : vector<32x160xf32>
    %121 = tpu.matmul %83, %120, %cst_95 {dimension_numbers = #tpu.dot_dimension_numbers<[1], [0], [0], [1], [0, 0, 1, 1], [], []>} : vector<32x120xf32>, vector<120x160xf32>, vector<32x160xf32> -> vector<32x160xf32>
    %122 = arith.addf %118, %121 : vector<32x160xf32>
    %c4_96 = arith.constant 4 : index
    %c0_97 = arith.constant 0 : index
    %c0_98 = arith.constant 0 : index
    %123 = vector.load %arg4[%c4_96, %c0_97, %c0_98] : memref<5x120x160xf32, #tpu.memory_space<vmem>>, vector<1x120x160xf32>
    %124 = vector.shape_cast %123 : vector<1x120x160xf32> to vector<120x160xf32>
    %cst_99 = arith.constant dense<0.000000e+00> : vector<32x160xf32>
    %125 = tpu.matmul %88, %124, %cst_99 {dimension_numbers = #tpu.dot_dimension_numbers<[1], [0], [0], [1], [0, 0, 1, 1], [], []>} : vector<32x120xf32>, vector<120x160xf32>, vector<32x160xf32> -> vector<32x160xf32>
    %126 = arith.addf %122, %125 : vector<32x160xf32>
    %127 = arith.maximumf %107, %126 : vector<32x160xf32>
    %128 = vector.extract_strided_slice %127 {offsets = [0, 0], sizes = [32, 80], strides = [1, 1]} : vector<32x160xf32> to vector<32x80xf32>
    %129 = vector.extract_strided_slice %127 {offsets = [0, 80], sizes = [32, 80], strides = [1, 1]} : vector<32x160xf32> to vector<32x80xf32>
    %130 = arith.maximumf %128, %129 : vector<32x80xf32>
    %c0_100 = arith.constant 0 : index
    %c0_101 = arith.constant 0 : index
    %131 = vector.load %arg5[%c0_100, %c0_101] : memref<1x80xf32, #tpu.memory_space<vmem>>, vector<1x80xf32>
    %132 = vector.broadcast %131 : vector<1x80xf32> to vector<32x80xf32>
    %133 = arith.addf %130, %132 : vector<32x80xf32>
    %cst_102 = arith.constant 0.000000e+00 : f32
    %134 = vector.broadcast %cst_102 : f32 to vector<32x80xf32>
    %135 = arith.maximumf %133, %134 : vector<32x80xf32>
    %136 = vector.extract_strided_slice %135 {offsets = [0, 0], sizes = [8, 80], strides = [1, 1]} : vector<32x80xf32> to vector<8x80xf32>
    %c0_103 = arith.constant 0 : index
    %c0_104 = arith.constant 0 : index
    %c0_105 = arith.constant 0 : index
    %137 = vector.load %arg6[%c0_103, %c0_104, %c0_105] : memref<4x80x100xf32, #tpu.memory_space<vmem>>, vector<1x80x100xf32>
    %138 = vector.shape_cast %137 : vector<1x80x100xf32> to vector<80x100xf32>
    %cst_106 = arith.constant dense<0.000000e+00> : vector<8x100xf32>
    %139 = tpu.matmul %136, %138, %cst_106 {dimension_numbers = #tpu.dot_dimension_numbers<[1], [0], [0], [1], [0, 0, 1, 1], [], []>} : vector<8x80xf32>, vector<80x100xf32>, vector<8x100xf32> -> vector<8x100xf32>
    %140 = vector.extract_strided_slice %135 {offsets = [8, 0], sizes = [8, 80], strides = [1, 1]} : vector<32x80xf32> to vector<8x80xf32>
    %c1_107 = arith.constant 1 : index
    %c0_108 = arith.constant 0 : index
    %c0_109 = arith.constant 0 : index
    %141 = vector.load %arg6[%c1_107, %c0_108, %c0_109] : memref<4x80x100xf32, #tpu.memory_space<vmem>>, vector<1x80x100xf32>
    %142 = vector.shape_cast %141 : vector<1x80x100xf32> to vector<80x100xf32>
    %cst_110 = arith.constant dense<0.000000e+00> : vector<8x100xf32>
    %143 = tpu.matmul %140, %142, %cst_110 {dimension_numbers = #tpu.dot_dimension_numbers<[1], [0], [0], [1], [0, 0, 1, 1], [], []>} : vector<8x80xf32>, vector<80x100xf32>, vector<8x100xf32> -> vector<8x100xf32>
    %144 = arith.addf %139, %143 : vector<8x100xf32>
    %145 = vector.extract_strided_slice %135 {offsets = [16, 0], sizes = [8, 80], strides = [1, 1]} : vector<32x80xf32> to vector<8x80xf32>
    %c2_111 = arith.constant 2 : index
    %c0_112 = arith.constant 0 : index
    %c0_113 = arith.constant 0 : index
    %146 = vector.load %arg6[%c2_111, %c0_112, %c0_113] : memref<4x80x100xf32, #tpu.memory_space<vmem>>, vector<1x80x100xf32>
    %147 = vector.shape_cast %146 : vector<1x80x100xf32> to vector<80x100xf32>
    %cst_114 = arith.constant dense<0.000000e+00> : vector<8x100xf32>
    %148 = tpu.matmul %145, %147, %cst_114 {dimension_numbers = #tpu.dot_dimension_numbers<[1], [0], [0], [1], [0, 0, 1, 1], [], []>} : vector<8x80xf32>, vector<80x100xf32>, vector<8x100xf32> -> vector<8x100xf32>
    %149 = arith.addf %144, %148 : vector<8x100xf32>
    %150 = vector.extract_strided_slice %135 {offsets = [24, 0], sizes = [8, 80], strides = [1, 1]} : vector<32x80xf32> to vector<8x80xf32>
    %c3_115 = arith.constant 3 : index
    %c0_116 = arith.constant 0 : index
    %c0_117 = arith.constant 0 : index
    %151 = vector.load %arg6[%c3_115, %c0_116, %c0_117] : memref<4x80x100xf32, #tpu.memory_space<vmem>>, vector<1x80x100xf32>
    %152 = vector.shape_cast %151 : vector<1x80x100xf32> to vector<80x100xf32>
    %cst_118 = arith.constant dense<0.000000e+00> : vector<8x100xf32>
    %153 = tpu.matmul %150, %152, %cst_118 {dimension_numbers = #tpu.dot_dimension_numbers<[1], [0], [0], [1], [0, 0, 1, 1], [], []>} : vector<8x80xf32>, vector<80x100xf32>, vector<8x100xf32> -> vector<8x100xf32>
    %154 = arith.addf %149, %153 : vector<8x100xf32>
    %c0_119 = arith.constant 0 : index
    %c0_120 = arith.constant 0 : index
    %155 = vector.load %arg7[%c0_119, %c0_120] : memref<1x100xf32, #tpu.memory_space<vmem>>, vector<1x100xf32>
    %156 = vector.broadcast %155 : vector<1x100xf32> to vector<8x100xf32>
    %157 = arith.addf %154, %156 : vector<8x100xf32>
    %cst_121 = arith.constant 0.000000e+00 : f32
    %158 = vector.broadcast %cst_121 : f32 to vector<8x100xf32>
    %159 = arith.maximumf %157, %158 : vector<8x100xf32>
    %c0_122 = arith.constant 0 : index
    %c0_123 = arith.constant 0 : index
    %160 = vector.load %arg8[%c0_122, %c0_123] : memref<100x10xf32, #tpu.memory_space<vmem>>, vector<100x10xf32>
    %cst_124 = arith.constant dense<0.000000e+00> : vector<8x10xf32>
    %161 = tpu.matmul %159, %160, %cst_124 {dimension_numbers = #tpu.dot_dimension_numbers<[1], [0], [0], [1], [0, 0, 1, 1], [], []>} : vector<8x100xf32>, vector<100x10xf32>, vector<8x10xf32> -> vector<8x10xf32>
    %c0_125 = arith.constant 0 : index
    %c0_126 = arith.constant 0 : index
    %162 = vector.load %arg9[%c0_125, %c0_126] : memref<1x10xf32, #tpu.memory_space<vmem>>, vector<1x10xf32>
    %163 = vector.broadcast %162 : vector<1x10xf32> to vector<8x10xf32>
    %164 = arith.addf %161, %163 : vector<8x10xf32>
    %cst_127 = arith.constant dense<0xFF800000> : vector<8xf32>
    %165 = vector.multi_reduction <maximumf>, %164, %cst_127 [1] : vector<8x10xf32> to vector<8xf32>
    %166 = vector.shape_cast %165 : vector<8xf32> to vector<8x1xf32>
    %167 = vector.broadcast %166 : vector<8x1xf32> to vector<8x10xf32>
    %168 = arith.subf %164, %167 : vector<8x10xf32>
    %169 = math.exp %168 : vector<8x10xf32>
    %cst_128 = arith.constant dense<0.000000e+00> : vector<8xf32>
    %170 = vector.multi_reduction <add>, %169, %cst_128 [1] : vector<8x10xf32> to vector<8xf32>
    %171 = vector.shape_cast %170 : vector<8xf32> to vector<8x1xf32>
    %172 = math.log %171 : vector<8x1xf32>
    %173 = arith.addf %172, %166 : vector<8x1xf32>
    %174 = vector.broadcast %173 : vector<8x1xf32> to vector<8x10xf32>
    %175 = arith.subf %164, %174 : vector<8x10xf32>
    %c0_129 = arith.constant 0 : index
    %c0_130 = arith.constant 0 : index
    %176 = vector.load %arg10[%c0_129, %c0_130] : memref<8x10xf32, #tpu.memory_space<vmem>>, vector<8x10xf32>
    tpu.vector_store %arg10[%c0_129, %c0_130], %175 {strides = array<i32>} : memref<8x10xf32, #tpu.memory_space<vmem>>, vector<8x10xf32>,
    return
  }
  func.func @transform_0(%arg0: i32) -> (i32, i32, i32, i32) {
    %c0_i32 = arith.constant 0 : i32
    %c0_i32_0 = arith.constant 0 : i32
    %c0_i32_1 = arith.constant 0 : i32
    %c0_i32_2 = arith.constant 0 : i32
    return %arg0, %c0_i32, %c0_i32_0, %c0_i32_1 : i32, i32, i32, i32
  }
  func.func @transform_1(%arg0: i32) -> (i32, i32, i32) {
    %c0_i32 = arith.constant 0 : i32
    %c0_i32_0 = arith.constant 0 : i32
    %c0_i32_1 = arith.constant 0 : i32
    %c0_i32_2 = arith.constant 0 : i32
    return %c0_i32, %c0_i32_0, %c0_i32_1 : i32, i32, i32
  }
  func.func @transform_2(%arg0: i32) -> (i32, i32) {
    %c0_i32 = arith.constant 0 : i32
    %c0_i32_0 = arith.constant 0 : i32
    %c0_i32_1 = arith.constant 0 : i32
    return %c0_i32, %c0_i32_0 : i32, i32
  }
  func.func @transform_3(%arg0: i32) -> (i32, i32, i32) {
    %c0_i32 = arith.constant 0 : i32
    %c0_i32_0 = arith.constant 0 : i32
    %c0_i32_1 = arith.constant 0 : i32
    %c0_i32_2 = arith.constant 0 : i32
    return %c0_i32, %c0_i32_0, %c0_i32_1 : i32, i32, i32
  }
  func.func @transform_4(%arg0: i32) -> (i32, i32) {
    %c0_i32 = arith.constant 0 : i32
    %c0_i32_0 = arith.constant 0 : i32
    %c0_i32_1 = arith.constant 0 : i32
    return %c0_i32, %c0_i32_0 : i32, i32
  }
  func.func @transform_5(%arg0: i32) -> (i32, i32, i32) {
    %c0_i32 = arith.constant 0 : i32
    %c0_i32_0 = arith.constant 0 : i32
    %c0_i32_1 = arith.constant 0 : i32
    %c0_i32_2 = arith.constant 0 : i32
    return %c0_i32, %c0_i32_0, %c0_i32_1 : i32, i32, i32
  }
  func.func @transform_6(%arg0: i32) -> (i32, i32) {
    %c0_i32 = arith.constant 0 : i32
    %c0_i32_0 = arith.constant 0 : i32
    %c0_i32_1 = arith.constant 0 : i32
    return %c0_i32, %c0_i32_0 : i32, i32
  }
  func.func @transform_7(%arg0: i32) -> (i32, i32) {
    %c0_i32 = arith.constant 0 : i32
    %c0_i32_0 = arith.constant 0 : i32
    %c0_i32_1 = arith.constant 0 : i32
    return %c0_i32, %c0_i32_0 : i32, i32
  }
  func.func @transform_8(%arg0: i32) -> (i32, i32) {
    %c0_i32 = arith.constant 0 : i32
    %c0_i32_0 = arith.constant 0 : i32
    %c0_i32_1 = arith.constant 0 : i32
    return %c0_i32, %c0_i32_0 : i32, i32
  }
  func.func @transform_9(%arg0: i32) -> (i32, i32) {
    %c0_i32 = arith.constant 0 : i32
    %c0_i32_0 = arith.constant 0 : i32
    return %arg0, %c0_i32 : i32, i32
  }
}

</mosaic_0001>

<llo_original>
// kernel: tile.13
$region0: #{tile.13}
  #allocation0 [shape = 's32[1]{0}', space=sflag, size = 0x4, scoped, tag = 'scoped memory for tile.13']
  %s0 = inlined_call_operand.vmem [shape: f32[10], index: 0, kind: input, shape index: {}]
  %s1 = inlined_call_operand.vmem [shape: f32[12,10], index: 1, kind: output, shape index: {}]
  // Predicated region
  $region2: #{tile.13} parent=0 // pred_check
    _
  $region3: #{tile.13} parent=0 // pred_check_branch
    %3 = sbr.rel (0) target = $region5
  $region4: #{tile.13} parent=0 // pred_region
    _
  $region5: #{tile.13} parent=0 // pred_fallthru
    _
  %v4 = vld [vmem:[%s0] ss:$0 sm:$0xff]
  %5 = vst [vmem:[%s1] sm:$0xff] %v4
  %s6 = scalar_lea.vmem %s1, 8
  %7 = vst [vmem:[%s6] sm:$0xff] %v4

// kernel: tile.14
$region0: #{tile.14}
  %s0 = inlined_call_operand.vmem [shape: f32[12,10], index: 0, kind: input, shape index: {}]
  %s1 = inlined_call_operand.vmem [shape: f32[1,120], index: 1, kind: output, shape index: {}]
  $region1: #{tile.14} parent=0
    #allocation0 [shape = 'u8[4096]{0}', space=vmem, size = 0x1000, scoped, tag = 'scoped mem for output reshape']
    %v2 = vld [vmem:[%s0] sm:$0x1]
    %vm3 = vcmask 80896
    %4 = vst.msk [vmem:[#allocation0] sm:$0x1] %vm3, %v2
    %s5 = scalar_lea.vmem %s0, 11
    %v6 = vld [vmem:[%s5] sm:$0x1]
    %7 = vrot.lane.b32.xlu0 %v6, 110
    %v8 = vpop.permute.xlu0 %7
    %vm9 = vcmask 982896
    %10 = vst.msk [vmem:[#allocation0] sm:$0x1] %vm9, %v8
    %s11 = scalar_lea.vmem %s0, 10
    %v12 = vld [vmem:[%s11] sm:$0x1]
    %13 = vrot.lane.b32.xlu0 %v12, 100
    %v14 = vpop.permute.xlu0 %13
    %vm15 = vcmask 900896
    %16 = vst.msk [vmem:[#allocation0] sm:$0x1] %vm15, %v14
    %s17 = scalar_lea.vmem %s0, 9
    %v18 = vld [vmem:[%s17] sm:$0x1]
    %19 = vrot.lane.b32.xlu0 %v18, 90
    %v20 = vpop.permute.xlu0 %19
    %vm21 = vcmask 818896
    %22 = vst.msk [vmem:[#allocation0] sm:$0x1] %vm21, %v20
    %s23 = scalar_lea.vmem %s0, 8
    %v24 = vld [vmem:[%s23] sm:$0x1]
    %25 = vrot.lane.b32.xlu0 %v24, 80
    %v26 = vpop.permute.xlu0 %25
    %vm27 = vcmask 736896
    %28 = vst.msk [vmem:[#allocation0] sm:$0x1] %vm27, %v26
    %s29 = scalar_lea.vmem %s0, 7
    %v30 = vld [vmem:[%s29] sm:$0x1]
    %31 = vrot.lane.b32.xlu0 %v30, 70
    %v32 = vpop.permute.xlu0 %31
    %vm33 = vcmask 654896
    %34 = vst.msk [vmem:[#allocation0] sm:$0x1] %vm33, %v32
    %s35 = scalar_lea.vmem %s0, 6
    %v36 = vld [vmem:[%s35] sm:$0x1]
    %37 = vrot.lane.b32.xlu0 %v36, 60
    %v38 = vpop.permute.xlu0 %37
    %vm39 = vcmask 572896
    %40 = vst.msk [vmem:[#allocation0] sm:$0x1] %vm39, %v38
    %s41 = scalar_lea.vmem %s0, 5
    %v42 = vld [vmem:[%s41] sm:$0x1]
    %43 = vrot.lane.b32.xlu0 %v42, 50
    %v44 = vpop.permute.xlu0 %43
    %vm45 = vcmask 490896
    %46 = vst.msk [vmem:[#allocation0] sm:$0x1] %vm45, %v44
    %s47 = scalar_lea.vmem %s0, 4
    %v48 = vld [vmem:[%s47] sm:$0x1]
    %49 = vrot.lane.b32.xlu0 %v48, 40
    %v50 = vpop.permute.xlu0 %49
    %vm51 = vcmask 408896
    %52 = vst.msk [vmem:[#allocation0] sm:$0x1] %vm51, %v50
    %s53 = scalar_lea.vmem %s0, 3
    %v54 = vld [vmem:[%s53] sm:$0x1]
    %55 = vrot.lane.b32.xlu0 %v54, 30
    %v56 = vpop.permute.xlu0 %55
    %vm57 = vcmask 326896
    %58 = vst.msk [vmem:[#allocation0] sm:$0x1] %vm57, %v56
    %s59 = scalar_lea.vmem %s0, 2
    %v60 = vld [vmem:[%s59] sm:$0x1]
    %61 = vrot.lane.b32.xlu0 %v60, 20
    %v62 = vpop.permute.xlu0 %61
    %vm63 = vcmask 244896
    %64 = vst.msk [vmem:[#allocation0] sm:$0x1] %vm63, %v62
    %s65 = scalar_lea.vmem %s0, 1
    %v66 = vld [vmem:[%s65] sm:$0x1]
    %67 = vrot.lane.b32.xlu0 %v66, 10
    %v68 = vpop.permute.xlu0 %67
    %vm69 = vcmask 162896
    %70 = vst.msk [vmem:[#allocation0] sm:$0x1] %vm69, %v68
    %s72 = sshllo.u32 0, 1
    %v74 = vld [vmem:[#allocation0] sm:%s72]
    %s75 = sshllo.u32 0, 1
    %76 = vst [vmem:[%s1] sm:%s75] %v74

// kernel: tile.18
$region0: #{tile.18}
  #allocation0 [shape = 's32[1]{0}', space=sflag, size = 0x4, scoped, tag = 'scoped memory for tile.18']
  %s0 = inlined_call_operand.vmem [shape: f32[20], index: 0, kind: input, shape index: {}]
  %s1 = inlined_call_operand.vmem [shape: f32[4,20], index: 1, kind: output, shape index: {}]
  // Predicated region
  $region2: #{tile.18} parent=0 // pred_check
    _
  $region3: #{tile.18} parent=0 // pred_check_branch
    %3 = sbr.rel (0) target = $region5
  $region4: #{tile.18} parent=0 // pred_region
    _
  $region5: #{tile.18} parent=0 // pred_fallthru
    _
  %v4 = vld [vmem:[%s0] ss:$0 sm:$0xff]
  %5 = vst [vmem:[%s1] sm:$0xf] %v4

// kernel: tile.19
$region0: #{tile.19}
  %s0 = inlined_call_operand.vmem [shape: f32[4,20], index: 0, kind: input, shape index: {}]
  %s1 = inlined_call_operand.vmem [shape: f32[1,80], index: 1, kind: output, shape index: {}]
  $region1: #{tile.19} parent=0
    #allocation0 [shape = 'u8[4096]{0}', space=vmem, size = 0x1000, scoped, tag = 'scoped mem for output reshape']
    #allocation1 [shape = 'u8[4096]{0}', space=vmem, size = 0x1000, scoped, tag = 'scoped mem for input reshape']
    %s3 = sshllo.u32 0, 4
    %v4 = vld [vmem:[%s0] sm:%s3]
    %5 = vst [vmem:[#allocation1] sm:%s3] %v4
    %v6 = vld [vmem:[#allocation1] sm:$0x1]
    %vm7 = vcmask 162816
    %8 = vst.msk [vmem:[#allocation0] sm:$0x1] %vm7, %v6
    %s9 = scalar_lea.vmem [#allocation1], 3
    %v10 = vld [vmem:[%s9] sm:$0x1]
    %11 = vrot.lane.b32.xlu0 %v10, 60
    %v12 = vpop.permute.xlu0 %11
    %vm13 = vcmask 654816
    %14 = vst.msk [vmem:[#allocation0] sm:$0x1] %vm13, %v12
    %s15 = scalar_lea.vmem [#allocation1], 2
    %v16 = vld [vmem:[%s15] sm:$0x1]
    %17 = vrot.lane.b32.xlu0 %v16, 40
    %v18 = vpop.permute.xlu0 %17
    %vm19 = vcmask 490816
    %20 = vst.msk [vmem:[#allocation0] sm:$0x1] %vm19, %v18
    %s21 = scalar_lea.vmem [#allocation1], 1
    %v22 = vld [vmem:[%s21] sm:$0x1]
    %23 = vrot.lane.b32.xlu0 %v22, 20
    %v24 = vpop.permute.xlu0 %23
    %vm25 = vcmask 326816
    %26 = vst.msk [vmem:[#allocation0] sm:$0x1] %vm25, %v24
    %s28 = sshllo.u32 0, 1
    %v30 = vld [vmem:[#allocation0] sm:%s28]
    %s31 = sshllo.u32 0, 1
    %32 = vst [vmem:[%s1] sm:%s31] %v30

// kernel: net_forward.1
$region0: #{net_forward.1}
  #allocation0 [shape = 'u32[]', space=smem, size = 0x4, offset = 0x4, fixed_abs, tag = 'smem constant byte address 0x4 - core index']
  #allocation1 [shape = 'u32[144,128]{1,0:T(1,128)}', space=vmem, size = 0x12000, scoped, tag = 'internal scratch']
  %s0 = inlined_call_operand.vmem [shape: f32[1,6,128,28], index: 0, kind: input, shape index: {}]
  %s1 = inlined_call_operand.vmem [shape: f32[5,28,240], index: 1, kind: input, shape index: {}]
  %s2 = inlined_call_operand.vmem [shape: f32[1,120], index: 2, kind: input, shape index: {}]
  %s3 = inlined_call_operand.vmem [shape: f32[5,120,160], index: 3, kind: input, shape index: {}]
  %s4 = inlined_call_operand.vmem [shape: f32[1,80], index: 4, kind: input, shape index: {}]
  %s5 = inlined_call_operand.vmem [shape: f32[4,80,100], index: 5, kind: input, shape index: {}]
  %s6 = inlined_call_operand.vmem [shape: f32[1,100], index: 6, kind: input, shape index: {}]
  %s7 = inlined_call_operand.vmem [shape: f32[100,10], index: 7, kind: input, shape index: {}]
  %s8 = inlined_call_operand.vmem [shape: f32[1,10], index: 8, kind: input, shape index: {}]
  %s9 = inlined_call_operand.vmem [shape: f32[8,10], index: 9, kind: output, shape index: {}]
  %s10 = sld [smem:[#allocation0]]
  $region46: #{net_forward.1} parent=0
    _
  %s12 = ssub.s32 1, %s10
  %s13 = scalar_select 0, %s12, %s10
  // Predicated region
  $region2: #{net_forward.1} parent=0 // pred_check
    _
  $region3: #{net_forward.1} parent=0 // pred_check_branch
    %15 = sbr.rel (0) target = $region5
  $region4: #{net_forward.1} parent=0 // pred_region
    _
  $region5: #{net_forward.1} parent=0 // pred_fallthru
    _
  // Predicated region
  $region6: #{net_forward.1} parent=0 // pred_check
    _
  $region7: #{net_forward.1} parent=0 // pred_check_branch
    %17 = sbr.rel (0) target = $region9
  $region8: #{net_forward.1} parent=0 // pred_region
    _
  $region9: #{net_forward.1} parent=0 // pred_fallthru
    _
  // Predicated region
  $region10: #{net_forward.1} parent=0 // pred_check
    _
  $region11: #{net_forward.1} parent=0 // pred_check_branch
    %19 = sbr.rel (0) target = $region13
  $region12: #{net_forward.1} parent=0 // pred_region
    _
  $region13: #{net_forward.1} parent=0 // pred_fallthru
    _
  // Predicated region
  $region14: #{net_forward.1} parent=0 // pred_check
    _
  $region15: #{net_forward.1} parent=0 // pred_check_branch
    %21 = sbr.rel (0) target = $region17
  $region16: #{net_forward.1} parent=0 // pred_region
    _
  $region17: #{net_forward.1} parent=0 // pred_fallthru
    _
  // Predicated region
  $region18: #{net_forward.1} parent=0 // pred_check
    _
  $region19: #{net_forward.1} parent=0 // pred_check_branch
    %23 = sbr.rel (0) target = $region21
  $region20: #{net_forward.1} parent=0 // pred_region
    _
  $region21: #{net_forward.1} parent=0 // pred_fallthru
    _
  // Predicated region
  $region22: #{net_forward.1} parent=0 // pred_check
    _
  $region23: #{net_forward.1} parent=0 // pred_check_branch
    %25 = sbr.rel (0) target = $region25
  $region24: #{net_forward.1} parent=0 // pred_region
    _
  $region25: #{net_forward.1} parent=0 // pred_fallthru
    _
  // Predicated region
  $region26: #{net_forward.1} parent=0 // pred_check
    _
  $region27: #{net_forward.1} parent=0 // pred_check_branch
    %27 = sbr.rel (0) target = $region29
  $region28: #{net_forward.1} parent=0 // pred_region
    _
  $region29: #{net_forward.1} parent=0 // pred_fallthru
    _
  // Predicated region
  $region30: #{net_forward.1} parent=0 // pred_check
    _
  $region31: #{net_forward.1} parent=0 // pred_check_branch
    %29 = sbr.rel (0) target = $region33
  $region32: #{net_forward.1} parent=0 // pred_region
    _
  $region33: #{net_forward.1} parent=0 // pred_fallthru
    _
  // Predicated region
  $region34: #{net_forward.1} parent=0 // pred_check
    _
  $region35: #{net_forward.1} parent=0 // pred_check_branch
    %31 = sbr.rel (0) target = $region37
  $region36: #{net_forward.1} parent=0 // pred_region
    _
  $region37: #{net_forward.1} parent=0 // pred_fallthru
    _
  %v32 = vld [vmem:[%s0] sm:$0xff]
  %v33 = vld [vmem:[%s0 + $0x8] sm:$0xff]
  %v34 = vld [vmem:[%s0 + $0x10] sm:$0xff]
  %v35 = vld [vmem:[%s0 + $0x18] sm:$0xff]
  %v36 = vld [vmem:[%s0 + $0x20] sm:$0xff]
  %v37 = vld [vmem:[%s0 + $0x28] sm:$0xff]
  %v38 = vld [vmem:[%s0 + $0x30] sm:$0xff]
  %v39 = vld [vmem:[%s0 + $0x38] sm:$0xff]
  %v40 = vld [vmem:[%s0 + $0x40] sm:$0xff]
  %v41 = vld [vmem:[%s0 + $0x48] sm:$0xff]
  %v42 = vld [vmem:[%s0 + $0x50] sm:$0xff]
  %v43 = vld [vmem:[%s0 + $0x58] sm:$0xff]
  %v44 = vld [vmem:[%s0 + $0x60] sm:$0xff]
  %v45 = vld [vmem:[%s0 + $0x68] sm:$0xff]
  %v46 = vld [vmem:[%s0 + $0x70] sm:$0xff]
  %v47 = vld [vmem:[%s0 + $0x78] sm:$0xff]
  %s48 = scalar_lea.vmem %s0, 128
  %v49 = vld [vmem:[%s48] sm:$0xff]
  %v50 = vld [vmem:[%s48 + $0x8] sm:$0xff]
  %v51 = vld [vmem:[%s48 + $0x10] sm:$0xff]
  %v52 = vld [vmem:[%s48 + $0x18] sm:$0xff]
  %v53 = vld [vmem:[%s48 + $0x20] sm:$0xff]
  %v54 = vld [vmem:[%s48 + $0x28] sm:$0xff]
  %v55 = vld [vmem:[%s48 + $0x30] sm:$0xff]
  %v56 = vld [vmem:[%s48 + $0x38] sm:$0xff]
  %v57 = vld [vmem:[%s48 + $0x40] sm:$0xff]
  %v58 = vld [vmem:[%s48 + $0x48] sm:$0xff]
  %v59 = vld [vmem:[%s48 + $0x50] sm:$0xff]
  %v60 = vld [vmem:[%s48 + $0x58] sm:$0xff]
  %v61 = vld [vmem:[%s48 + $0x60] sm:$0xff]
  %v62 = vld [vmem:[%s48 + $0x68] sm:$0xff]
  %v63 = vld [vmem:[%s48 + $0x70] sm:$0xff]
  %v64 = vld [vmem:[%s48 + $0x78] sm:$0xff]
  %s65 = scalar_lea.vmem %s0, 256
  %v66 = vld [vmem:[%s65] sm:$0xff]
  %v67 = vld [vmem:[%s65 + $0x8] sm:$0xff]
  %v68 = vld [vmem:[%s65 + $0x10] sm:$0xff]
  %v69 = vld [vmem:[%s65 + $0x18] sm:$0xff]
  %v70 = vld [vmem:[%s65 + $0x20] sm:$0xff]
  %v71 = vld [vmem:[%s65 + $0x28] sm:$0xff]
  %v72 = vld [vmem:[%s65 + $0x30] sm:$0xff]
  %v73 = vld [vmem:[%s65 + $0x38] sm:$0xff]
  %v74 = vld [vmem:[%s65 + $0x40] sm:$0xff]
  %v75 = vld [vmem:[%s65 + $0x48] sm:$0xff]
  %v76 = vld [vmem:[%s65 + $0x50] sm:$0xff]
  %v77 = vld [vmem:[%s65 + $0x58] sm:$0xff]
  %v78 = vld [vmem:[%s65 + $0x60] sm:$0xff]
  %v79 = vld [vmem:[%s65 + $0x68] sm:$0xff]
  %v80 = vld [vmem:[%s65 + $0x70] sm:$0xff]
  %v81 = vld [vmem:[%s65 + $0x78] sm:$0xff]
  %s82 = scalar_lea.vmem %s0, 384
  %v83 = vld [vmem:[%s82] sm:$0xff]
  %v84 = vld [vmem:[%s82 + $0x8] sm:$0xff]
  %v85 = vld [vmem:[%s82 + $0x10] sm:$0xff]
  %v86 = vld [vmem:[%s82 + $0x18] sm:$0xff]
  %v87 = vld [vmem:[%s82 + $0x20] sm:$0xff]
  %v88 = vld [vmem:[%s82 + $0x28] sm:$0xff]
  %v89 = vld [vmem:[%s82 + $0x30] sm:$0xff]
  %v90 = vld [vmem:[%s82 + $0x38] sm:$0xff]
  %v91 = vld [vmem:[%s82 + $0x40] sm:$0xff]
  %v92 = vld [vmem:[%s82 + $0x48] sm:$0xff]
  %v93 = vld [vmem:[%s82 + $0x50] sm:$0xff]
  %v94 = vld [vmem:[%s82 + $0x58] sm:$0xff]
  %v95 = vld [vmem:[%s82 + $0x60] sm:$0xff]
  %v96 = vld [vmem:[%s82 + $0x68] sm:$0xff]
  %v97 = vld [vmem:[%s82 + $0x70] sm:$0xff]
  %v98 = vld [vmem:[%s82 + $0x78] sm:$0xff]
  %s99 = scalar_lea.vmem %s0, 512
  %v100 = vld [vmem:[%s99] sm:$0xff]
  %v101 = vld [vmem:[%s99 + $0x8] sm:$0xff]
  %v102 = vld [vmem:[%s99 + $0x10] sm:$0xff]
  %v103 = vld [vmem:[%s99 + $0x18] sm:$0xff]
  %v104 = vld [vmem:[%s99 + $0x20] sm:$0xff]
  %v105 = vld [vmem:[%s99 + $0x28] sm:$0xff]
  %v106 = vld [vmem:[%s99 + $0x30] sm:$0xff]
  %v107 = vld [vmem:[%s99 + $0x38] sm:$0xff]
  %v108 = vld [vmem:[%s99 + $0x40] sm:$0xff]
  %v109 = vld [vmem:[%s99 + $0x48] sm:$0xff]
  %v110 = vld [vmem:[%s99 + $0x50] sm:$0xff]
  %v111 = vld [vmem:[%s99 + $0x58] sm:$0xff]
  %v112 = vld [vmem:[%s99 + $0x60] sm:$0xff]
  %v113 = vld [vmem:[%s99 + $0x68] sm:$0xff]
  %v114 = vld [vmem:[%s99 + $0x70] sm:$0xff]
  %v115 = vld [vmem:[%s99 + $0x78] sm:$0xff]
  %s116 = scalar_lea.vmem %s0, 640
  %v117 = vld [vmem:[%s116] sm:$0xff]
  %v118 = vld [vmem:[%s116 + $0x8] sm:$0xff]
  %v119 = vld [vmem:[%s116 + $0x10] sm:$0xff]
  %v120 = vld [vmem:[%s116 + $0x18] sm:$0xff]
  %v121 = vld [vmem:[%s116 + $0x20] sm:$0xff]
  %v122 = vld [vmem:[%s116 + $0x28] sm:$0xff]
  %v123 = vld [vmem:[%s116 + $0x30] sm:$0xff]
  %v124 = vld [vmem:[%s116 + $0x38] sm:$0xff]
  %v125 = vld [vmem:[%s116 + $0x40] sm:$0xff]
  %v126 = vld [vmem:[%s116 + $0x48] sm:$0xff]
  %v127 = vld [vmem:[%s116 + $0x50] sm:$0xff]
  %v128 = vld [vmem:[%s116 + $0x58] sm:$0xff]
  %v129 = vld [vmem:[%s116 + $0x60] sm:$0xff]
  %v130 = vld [vmem:[%s116 + $0x68] sm:$0xff]
  %v131 = vld [vmem:[%s116 + $0x70] sm:$0xff]
  %v132 = vld [vmem:[%s116 + $0x78] sm:$0xff]
  %v133 = vld [vmem:[%s1] sm:$0xff]
  %v134 = vld [vmem:[%s1 + $0x8] sm:$0xff]
  %v135 = vld [vmem:[%s1 + $0x10] sm:$0xff]
  %v136 = vld [vmem:[%s1 + $0x18] sm:$0xff]
  %v137 = vld [vmem:[%s1 + $0x20] sm:$0xff]
  %v138 = vld [vmem:[%s1 + $0x28] sm:$0xff]
  %v139 = vld [vmem:[%s1 + $0x30] sm:$0xf]
  %v140 = vld [vmem:[%s1 + $0x38] sm:$0xf]
  %s141 = scalar_lea.vmem %s1, 64
  %v142 = vld [vmem:[%s141] sm:$0xff]
  %v143 = vld [vmem:[%s141 + $0x8] sm:$0xff]
  %v144 = vld [vmem:[%s141 + $0x10] sm:$0xff]
  %v145 = vld [vmem:[%s141 + $0x18] sm:$0xff]
  %v146 = vld [vmem:[%s141 + $0x20] sm:$0xff]
  %v147 = vld [vmem:[%s141 + $0x28] sm:$0xff]
  %v148 = vld [vmem:[%s141 + $0x30] sm:$0xf]
  %v149 = vld [vmem:[%s141 + $0x38] sm:$0xf]
  %vm150 = vcmask 228352
  %v152 = vsel %vm150, %v49, 0
  %v155 = vsel %vm150, %v50, 0
  %v158 = vsel %vm150, %v51, 0
  %v161 = vsel %vm150, %v52, 0
  %v164 = vsel %vm150, %v53, 0
  %v167 = vsel %vm150, %v54, 0
  %v170 = vsel %vm150, %v55, 0
  %v173 = vsel %vm150, %v56, 0
  %v176 = vsel %vm150, %v57, 0
  %v179 = vsel %vm150, %v58, 0
  %v182 = vsel %vm150, %v59, 0
  %v185 = vsel %vm150, %v60, 0
  %v188 = vsel %vm150, %v61, 0
  %v191 = vsel %vm150, %v62, 0
  %v194 = vsel %vm150, %v63, 0
  %v197 = vsel %vm150, %v64, 0
  %vm199 = vcmask 1043456
  %v201 = vsel %vm199, %v148, 0
  %v204 = vsel %vm199, %v149, 0
  %206 = vmatprep.subr.mxu0 %v143
  %207 = vmatpush1.msra.mxu0 %v142
  %208 = vmatprep.subr.mxu0 %v145
  %209 = vmatpush1.msra.mxu0 %v144
  %210 = vmatprep.subr.mxu0 %v147
  %211 = vmatpush1.msra.mxu0 %v146
  %212 = vmatprep.subr.mxu0 %v204
  %213 = vmatpush1.msra.mxu0 %v201
  %214 = vmatprep.subr.mxu0 0.0
  %215 = vmatpush1.msra.mxu0 0.0
  %216 = vmatprep.subr.mxu0 0.0
  %217 = vmatpush1.msra.mxu0 0.0
  %218 = vmatprep.subr.mxu0 0.0
  %219 = vmatpush1.msra.mxu0 0.0
  %220 = vmatprep.subr.mxu0 0.0
  %221 = vmatpush1.msra.mxu0 0.0
  %222 = vmatprep.subr.mxu0 0.0
  %223 = vmatpush1.msra.mxu0 0.0
  %224 = vmatprep.subr.mxu0 0.0
  %225 = vmatpush1.msra.mxu0 0.0
  %226 = vmatprep.subr.mxu0 0.0
  %227 = vmatpush1.msra.mxu0 0.0
  %228 = vmatprep.subr.mxu0 0.0
  %229 = vmatpush1.msra.mxu0 0.0
  %230 = vmatprep.subr.mxu0 0.0
  %231 = vmatpush1.msra.mxu0 0.0
  %232 = vmatprep.subr.mxu0 0.0
  %233 = vmatpush1.msra.mxu0 0.0
  %234 = vmatprep.subr.mxu0 0.0
  %235 = vmatpush1.msra.mxu0 0.0
  %236 = vmatprep.subr.mxu0 0.0
  %237 = vmatpush1.msra.mxu0 0.0
  %238 = vmatprep.subr.mxu0 0.0
  %239 = vmatpush1.msra.mxu0 0.0
  %240 = vmatprep.subr.mxu0 0.0
  %241 = vmatpush1.msra.mxu0 0.0
  %242 = vmatprep.subr.mxu0 0.0
  %243 = vmatpush1.msra.mxu0 0.0
  %244 = vmatprep.subr.mxu0 0.0
  %245 = vmatpush1.msra.mxu0 0.0
  %246 = vmatprep.subr.mxu0 0.0
  %247 = vmatpush1.msra.mxu0 0.0
  %248 = vmatprep.subr.mxu0 0.0
  %249 = vmatpush1.msra.mxu0 0.0
  %250 = vmatprep.subr.mxu0 0.0
  %251 = vmatpush1.msra.mxu0 0.0
  %252 = vmatprep.subr.mxu0 0.0
  %253 = vmatpush1.msra.mxu0 0.0
  %254 = vmatprep.subr.mxu0 0.0
  %255 = vmatpush1.msra.mxu0 0.0
  %256 = vmatprep.subr.mxu0 0.0
  %257 = vmatpush1.msra.mxu0 0.0
  %258 = vmatprep.subr.mxu0 0.0
  %259 = vmatpush1.msra.mxu0 0.0
  %260 = vmatprep.subr.mxu0 0.0
  %261 = vmatpush1.msra.mxu0 0.0
  %262 = vmatprep.subr.mxu0 0.0
  %263 = vmatpush1.msra.mxu0 0.0
  %264 = vmatprep.subr.mxu0 0.0
  %265 = vmatpush1.msra.mxu0 0.0
  %266 = vmatprep.subr.mxu0 0.0
  %267 = vmatpush1.msra.mxu0 0.0
  %268 = vmatprep.subr.mxu0 0.0
  %269 = vmatpush1.msra.mxu0 0.0
  %270 = vmatprep.mubr.f32.mxu0 0.0
  %271 = vmatmul.mubr.f32.gmra.mrb[0].mxu0 %v152
  %v272 = vpop.f32.mrb[0].mxu0
  %v273 = vadd.f32 0.0, %v272
  %v274 = vpop.f32.mrb[0].mxu0
  %v275 = vadd.f32 0.0, %v274
  %276 = vmatprep.mubr.f32.mxu0 0.0
  %277 = vmatmul.mubr.f32.gmra.mrb[0].mxu0 %v155
  %v278 = vpop.f32.mrb[0].mxu0
  %v279 = vadd.f32 0.0, %v278
  %v280 = vpop.f32.mrb[0].mxu0
  %v281 = vadd.f32 0.0, %v280
  %282 = vmatprep.mubr.f32.mxu0 0.0
  %283 = vmatmul.mubr.f32.gmra.mrb[0].mxu0 %v158
  %v284 = vpop.f32.mrb[0].mxu0
  %v285 = vadd.f32 0.0, %v284
  %v286 = vpop.f32.mrb[0].mxu0
  %v287 = vadd.f32 0.0, %v286
  %288 = vmatprep.mubr.f32.mxu0 0.0
  %289 = vmatmul.mubr.f32.gmra.mrb[0].mxu0 %v161
  %v290 = vpop.f32.mrb[0].mxu0
  %v291 = vadd.f32 0.0, %v290
  %v292 = vpop.f32.mrb[0].mxu0
  %v293 = vadd.f32 0.0, %v292
  %294 = vmatprep.mubr.f32.mxu0 0.0
  %295 = vmatmul.mubr.f32.gmra.mrb[0].mxu0 %v164
  %v296 = vpop.f32.mrb[0].mxu0
  %v297 = vadd.f32 0.0, %v296
  %v298 = vpop.f32.mrb[0].mxu0
  %v299 = vadd.f32 0.0, %v298
  %300 = vmatprep.mubr.f32.mxu0 0.0
  %301 = vmatmul.mubr.f32.gmra.mrb[0].mxu0 %v167
  %v302 = vpop.f32.mrb[0].mxu0
  %v303 = vadd.f32 0.0, %v302
  %v304 = vpop.f32.mrb[0].mxu0
  %v305 = vadd.f32 0.0, %v304
  %306 = vmatprep.mubr.f32.mxu0 0.0
  %307 = vmatmul.mubr.f32.gmra.mrb[0].mxu0 %v170
  %v308 = vpop.f32.mrb[0].mxu0
  %v309 = vadd.f32 0.0, %v308
  %v310 = vpop.f32.mrb[0].mxu0
  %v311 = vadd.f32 0.0, %v310
  %312 = vmatprep.mubr.f32.mxu0 0.0
  %313 = vmatmul.mubr.f32.gmra.mrb[0].mxu0 %v173
  %v314 = vpop.f32.mrb[0].mxu0
  %v315 = vadd.f32 0.0, %v314
  %v316 = vpop.f32.mrb[0].mxu0
  %v317 = vadd.f32 0.0, %v316
  %318 = vmatprep.mubr.f32.mxu0 0.0
  %319 = vmatmul.mubr.f32.gmra.mrb[0].mxu0 %v176
  %v320 = vpop.f32.mrb[0].mxu0
  %v321 = vadd.f32 0.0, %v320
  %v322 = vpop.f32.mrb[0].mxu0
  %v323 = vadd.f32 0.0, %v322
  %324 = vmatprep.mubr.f32.mxu0 0.0
  %325 = vmatmul.mubr.f32.gmra.mrb[0].mxu0 %v179
  %v326 = vpop.f32.mrb[0].mxu0
  %v327 = vadd.f32 0.0, %v326
  %v328 = vpop.f32.mrb[0].mxu0
  %v329 = vadd.f32 0.0, %v328
  %330 = vmatprep.mubr.f32.mxu0 0.0
  %331 = vmatmul.mubr.f32.gmra.mrb[0].mxu0 %v182
  %v332 = vpop.f32.mrb[0].mxu0
  %v333 = vadd.f32 0.0, %v332
  %v334 = vpop.f32.mrb[0].mxu0
  %v335 = vadd.f32 0.0, %v334
  %336 = vmatprep.mubr.f32.mxu0 0.0
  %337 = vmatmul.mubr.f32.gmra.mrb[0].mxu0 %v185
  %v338 = vpop.f32.mrb[0].mxu0
  %v339 = vadd.f32 0.0, %v338
  %v340 = vpop.f32.mrb[0].mxu0
  %v341 = vadd.f32 0.0, %v340
  %342 = vmatprep.mubr.f32.mxu0 0.0
  %343 = vmatmul.mubr.f32.gmra.mrb[0].mxu0 %v188
  %v344 = vpop.f32.mrb[0].mxu0
  %v345 = vpop.f32.mrb[0].mxu0
  %346 = vmatprep.mubr.f32.mxu0 0.0
  %347 = vmatmul.mubr.f32.gmra.mrb[0].mxu0 %v191
  %v348 = vpop.f32.mrb[0].mxu0
  %v349 = vpop.f32.mrb[0].mxu0
  %350 = vmatprep.mubr.f32.mxu0 0.0
  %351 = vmatmul.mubr.f32.gmra.mrb[0].mxu0 %v194
  %v352 = vpop.f32.mrb[0].mxu0
  %v353 = vpop.f32.mrb[0].mxu0
  %354 = vmatprep.mubr.f32.mxu0 0.0
  %355 = vmatmul.mubr.f32.gmra.mrb[0].mxu0 %v197
  %v356 = vpop.f32.mrb[0].mxu0
  %v357 = vpop.f32.mrb[0].mxu0
  %358 = vdwg.mxu0
  %v360 = vsel %vm150, %v32, 0
  %v363 = vsel %vm150, %v33, 0
  %v366 = vsel %vm150, %v34, 0
  %v369 = vsel %vm150, %v35, 0
  %v372 = vsel %vm150, %v36, 0
  %v375 = vsel %vm150, %v37, 0
  %v378 = vsel %vm150, %v38, 0
  %v381 = vsel %vm150, %v39, 0
  %v384 = vsel %vm150, %v40, 0
  %v387 = vsel %vm150, %v41, 0
  %v390 = vsel %vm150, %v42, 0
  %v393 = vsel %vm150, %v43, 0
  %v396 = vsel %vm150, %v44, 0
  %v399 = vsel %vm150, %v45, 0
  %v402 = vsel %vm150, %v46, 0
  %v405 = vsel %vm150, %v47, 0
  %v408 = vsel %vm199, %v139, 0
  %v411 = vsel %vm199, %v140, 0
  %413 = vmatprep.subr.mxu0 %v134
  %414 = vmatpush1.msra.mxu0 %v133
  %415 = vmatprep.subr.mxu0 %v136
  %416 = vmatpush1.msra.mxu0 %v135
  %417 = vmatprep.subr.mxu0 %v138
  %418 = vmatpush1.msra.mxu0 %v137
  %419 = vmatprep.subr.mxu0 %v411
  %420 = vmatpush1.msra.mxu0 %v408
  %421 = vmatprep.subr.mxu0 0.0
  %422 = vmatpush1.msra.mxu0 0.0
  %423 = vmatprep.subr.mxu0 0.0
  %424 = vmatpush1.msra.mxu0 0.0
  %425 = vmatprep.subr.mxu0 0.0
  %426 = vmatpush1.msra.mxu0 0.0
  %427 = vmatprep.subr.mxu0 0.0
  %428 = vmatpush1.msra.mxu0 0.0
  %429 = vmatprep.subr.mxu0 0.0
  %430 = vmatpush1.msra.mxu0 0.0
  %431 = vmatprep.subr.mxu0 0.0
  %432 = vmatpush1.msra.mxu0 0.0
  %433 = vmatprep.subr.mxu0 0.0
  %434 = vmatpush1.msra.mxu0 0.0
  %435 = vmatprep.subr.mxu0 0.0
  %436 = vmatpush1.msra.mxu0 0.0
  %437 = vmatprep.subr.mxu0 0.0
  %438 = vmatpush1.msra.mxu0 0.0
  %439 = vmatprep.subr.mxu0 0.0
  %440 = vmatpush1.msra.mxu0 0.0
  %441 = vmatprep.subr.mxu0 0.0
  %442 = vmatpush1.msra.mxu0 0.0
  %443 = vmatprep.subr.mxu0 0.0
  %444 = vmatpush1.msra.mxu0 0.0
  %445 = vmatprep.subr.mxu0 0.0
  %446 = vmatpush1.msra.mxu0 0.0
  %447 = vmatprep.subr.mxu0 0.0
  %448 = vmatpush1.msra.mxu0 0.0
  %449 = vmatprep.subr.mxu0 0.0
  %450 = vmatpush1.msra.mxu0 0.0
  %451 = vmatprep.subr.mxu0 0.0
  %452 = vmatpush1.msra.mxu0 0.0
  %453 = vmatprep.subr.mxu0 0.0
  %454 = vmatpush1.msra.mxu0 0.0
  %455 = vmatprep.subr.mxu0 0.0
  %456 = vmatpush1.msra.mxu0 0.0
  %457 = vmatprep.subr.mxu0 0.0
  %458 = vmatpush1.msra.mxu0 0.0
  %459 = vmatprep.subr.mxu0 0.0
  %460 = vmatpush1.msra.mxu0 0.0
  %461 = vmatprep.subr.mxu0 0.0
  %462 = vmatpush1.msra.mxu0 0.0
  %463 = vmatprep.subr.mxu0 0.0
  %464 = vmatpush1.msra.mxu0 0.0
  %465 = vmatprep.subr.mxu0 0.0
  %466 = vmatpush1.msra.mxu0 0.0
  %467 = vmatprep.subr.mxu0 0.0
  %468 = vmatpush1.msra.mxu0 0.0
  %469 = vmatprep.subr.mxu0 0.0
  %470 = vmatpush1.msra.mxu0 0.0
  %471 = vmatprep.subr.mxu0 0.0
  %472 = vmatpush1.msra.mxu0 0.0
  %473 = vmatprep.subr.mxu0 0.0
  %474 = vmatpush1.msra.mxu0 0.0
  %475 = vmatprep.subr.mxu0 0.0
  %476 = vmatpush1.msra.mxu0 0.0
  %477 = vmatprep.mubr.f32.mxu0 0.0
  %478 = vmatmul.mubr.f32.gmra.mrb[0].mxu0 %v360
  %v479 = vpop.f32.mrb[0].mxu0
  %v480 = vadd.f32 %v273, %v479
  %v481 = vpop.f32.mrb[0].mxu0
  %v482 = vadd.f32 %v275, %v481
  %483 = vmatprep.mubr.f32.mxu0 0.0
  %484 = vmatmul.mubr.f32.gmra.mrb[0].mxu0 %v363
  %v485 = vpop.f32.mrb[0].mxu0
  %v486 = vadd.f32 %v279, %v485
  %v487 = vpop.f32.mrb[0].mxu0
  %v488 = vadd.f32 %v281, %v487
  %489 = vmatprep.mubr.f32.mxu0 0.0
  %490 = vmatmul.mubr.f32.gmra.mrb[0].mxu0 %v366
  %v491 = vpop.f32.mrb[0].mxu0
  %v492 = vadd.f32 %v285, %v491
  %v493 = vpop.f32.mrb[0].mxu0
  %v494 = vadd.f32 %v287, %v493
  %495 = vmatprep.mubr.f32.mxu0 0.0
  %496 = vmatmul.mubr.f32.gmra.mrb[0].mxu0 %v369
  %v497 = vpop.f32.mrb[0].mxu0
  %v498 = vadd.f32 %v291, %v497
  %v499 = vpop.f32.mrb[0].mxu0
  %v500 = vadd.f32 %v293, %v499
  %501 = vmatprep.mubr.f32.mxu0 0.0
  %502 = vmatmul.mubr.f32.gmra.mrb[0].mxu0 %v372
  %v503 = vpop.f32.mrb[0].mxu0
  %v504 = vadd.f32 %v297, %v503
  %v505 = vpop.f32.mrb[0].mxu0
  %v506 = vadd.f32 %v299, %v505
  %507 = vmatprep.mubr.f32.mxu0 0.0
  %508 = vmatmul.mubr.f32.gmra.mrb[0].mxu0 %v375
  %v509 = vpop.f32.mrb[0].mxu0
  %v510 = vadd.f32 %v303, %v509
  %v511 = vpop.f32.mrb[0].mxu0
  %v512 = vadd.f32 %v305, %v511
  %513 = vmatprep.mubr.f32.mxu0 0.0
  %514 = vmatmul.mubr.f32.gmra.mrb[0].mxu0 %v378
  %v515 = vpop.f32.mrb[0].mxu0
  %v516 = vadd.f32 %v309, %v515
  %v517 = vpop.f32.mrb[0].mxu0
  %v518 = vadd.f32 %v311, %v517
  %519 = vmatprep.mubr.f32.mxu0 0.0
  %520 = vmatmul.mubr.f32.gmra.mrb[0].mxu0 %v381
  %v521 = vpop.f32.mrb[0].mxu0
  %v522 = vadd.f32 %v315, %v521
  %v523 = vpop.f32.mrb[0].mxu0
  %v524 = vadd.f32 %v317, %v523
  %525 = vmatprep.mubr.f32.mxu0 0.0
  %526 = vmatmul.mubr.f32.gmra.mrb[0].mxu0 %v384
  %v527 = vpop.f32.mrb[0].mxu0
  %v528 = vadd.f32 %v321, %v527
  %v529 = vpop.f32.mrb[0].mxu0
  %v530 = vadd.f32 %v323, %v529
  %531 = vmatprep.mubr.f32.mxu0 0.0
  %532 = vmatmul.mubr.f32.gmra.mrb[0].mxu0 %v387
  %v533 = vpop.f32.mrb[0].mxu0
  %v534 = vadd.f32 %v327, %v533
  %v535 = vpop.f32.mrb[0].mxu0
  %v536 = vadd.f32 %v329, %v535
  %537 = vmatprep.mubr.f32.mxu0 0.0
  %538 = vmatmul.mubr.f32.gmra.mrb[0].mxu0 %v390
  %v539 = vpop.f32.mrb[0].mxu0
  %v540 = vadd.f32 %v333, %v539
  %v541 = vpop.f32.mrb[0].mxu0
  %v542 = vadd.f32 %v335, %v541
  %543 = vmatprep.mubr.f32.mxu0 0.0
  %544 = vmatmul.mubr.f32.gmra.mrb[0].mxu0 %v393
  %v545 = vpop.f32.mrb[0].mxu0
  %v546 = vadd.f32 %v339, %v545
  %v547 = vpop.f32.mrb[0].mxu0
  %v548 = vadd.f32 %v341, %v547
  %549 = vmatprep.mubr.f32.mxu0 0.0
  %550 = vmatmul.mubr.f32.gmra.mrb[0].mxu0 %v396
  %v551 = vpop.f32.mrb[0].mxu0
  %v552 = vpop.f32.mrb[0].mxu0
  %553 = vmatprep.mubr.f32.mxu0 0.0
  %554 = vmatmul.mubr.f32.gmra.mrb[0].mxu0 %v399
  %v555 = vpop.f32.mrb[0].mxu0
  %v556 = vpop.f32.mrb[0].mxu0
  %557 = vmatprep.mubr.f32.mxu0 0.0
  %558 = vmatmul.mubr.f32.gmra.mrb[0].mxu0 %v402
  %v559 = vpop.f32.mrb[0].mxu0
  %v560 = vpop.f32.mrb[0].mxu0
  %561 = vmatprep.mubr.f32.mxu0 0.0
  %562 = vmatmul.mubr.f32.gmra.mrb[0].mxu0 %v405
  %v563 = vpop.f32.mrb[0].mxu0
  %v564 = vpop.f32.mrb[0].mxu0
  %565 = vdwg.mxu0
  %s566 = scalar_lea.vmem %s1, 128
  %v567 = vld [vmem:[%s566] sm:$0xff]
  %v568 = vld [vmem:[%s566 + $0x8] sm:$0xff]
  %v569 = vld [vmem:[%s566 + $0x10] sm:$0xff]
  %v570 = vld [vmem:[%s566 + $0x18] sm:$0xff]
  %v571 = vld [vmem:[%s566 + $0x20] sm:$0xff]
  %v572 = vld [vmem:[%s566 + $0x28] sm:$0xff]
  %v573 = vld [vmem:[%s566 + $0x30] sm:$0xf]
  %v574 = vld [vmem:[%s566 + $0x38] sm:$0xf]
  %v576 = vsel %vm150, %v66, 0
  %v579 = vsel %vm150, %v67, 0
  %v582 = vsel %vm150, %v68, 0
  %v585 = vsel %vm150, %v69, 0
  %v588 = vsel %vm150, %v70, 0
  %v591 = vsel %vm150, %v71, 0
  %v594 = vsel %vm150, %v72, 0
  %v597 = vsel %vm150, %v73, 0
  %v600 = vsel %vm150, %v74, 0
  %v603 = vsel %vm150, %v75, 0
  %v606 = vsel %vm150, %v76, 0
  %v609 = vsel %vm150, %v77, 0
  %v612 = vsel %vm150, %v78, 0
  %v615 = vsel %vm150, %v79, 0
  %v618 = vsel %vm150, %v80, 0
  %v621 = vsel %vm150, %v81, 0
  %v624 = vsel %vm199, %v573, 0
  %v627 = vsel %vm199, %v574, 0
  %629 = vmatprep.subr.mxu0 %v568
  %630 = vmatpush1.msra.mxu0 %v567
  %631 = vmatprep.subr.mxu0 %v570
  %632 = vmatpush1.msra.mxu0 %v569
  %633 = vmatprep.subr.mxu0 %v572
  %634 = vmatpush1.msra.mxu0 %v571
  %635 = vmatprep.subr.mxu0 %v627
  %636 = vmatpush1.msra.mxu0 %v624
  %637 = vmatprep.subr.mxu0 0.0
  %638 = vmatpush1.msra.mxu0 0.0
  %639 = vmatprep.subr.mxu0 0.0
  %640 = vmatpush1.msra.mxu0 0.0
  %641 = vmatprep.subr.mxu0 0.0
  %642 = vmatpush1.msra.mxu0 0.0
  %643 = vmatprep.subr.mxu0 0.0
  %644 = vmatpush1.msra.mxu0 0.0
  %645 = vmatprep.subr.mxu0 0.0
  %646 = vmatpush1.msra.mxu0 0.0
  %647 = vmatprep.subr.mxu0 0.0
  %648 = vmatpush1.msra.mxu0 0.0
  %649 = vmatprep.subr.mxu0 0.0
  %650 = vmatpush1.msra.mxu0 0.0
  %651 = vmatprep.subr.mxu0 0.0
  %652 = vmatpush1.msra.mxu0 0.0
  %653 = vmatprep.subr.mxu0 0.0
  %654 = vmatpush1.msra.mxu0 0.0
  %655 = vmatprep.subr.mxu0 0.0
  %656 = vmatpush1.msra.mxu0 0.0
  %657 = vmatprep.subr.mxu0 0.0
  %658 = vmatpush1.msra.mxu0 0.0
  %659 = vmatprep.subr.mxu0 0.0
  %660 = vmatpush1.msra.mxu0 0.0
  %661 = vmatprep.subr.mxu0 0.0
  %662 = vmatpush1.msra.mxu0 0.0
  %663 = vmatprep.subr.mxu0 0.0
  %664 = vmatpush1.msra.mxu0 0.0
  %665 = vmatprep.subr.mxu0 0.0
  %666 = vmatpush1.msra.mxu0 0.0
  %667 = vmatprep.subr.mxu0 0.0
  %668 = vmatpush1.msra.mxu0 0.0
  %669 = vmatprep.subr.mxu0 0.0
  %670 = vmatpush1.msra.mxu0 0.0
  %671 = vmatprep.subr.mxu0 0.0
  %672 = vmatpush1.msra.mxu0 0.0
  %673 = vmatprep.subr.mxu0 0.0
  %674 = vmatpush1.msra.mxu0 0.0
  %675 = vmatprep.subr.mxu0 0.0
  %676 = vmatpush1.msra.mxu0 0.0
  %677 = vmatprep.subr.mxu0 0.0
  %678 = vmatpush1.msra.mxu0 0.0
  %679 = vmatprep.subr.mxu0 0.0
  %680 = vmatpush1.msra.mxu0 0.0
  %681 = vmatprep.subr.mxu0 0.0
  %682 = vmatpush1.msra.mxu0 0.0
  %683 = vmatprep.subr.mxu0 0.0
  %684 = vmatpush1.msra.mxu0 0.0
  %685 = vmatprep.subr.mxu0 0.0
  %686 = vmatpush1.msra.mxu0 0.0
  %687 = vmatprep.subr.mxu0 0.0
  %688 = vmatpush1.msra.mxu0 0.0
  %689 = vmatprep.subr.mxu0 0.0
  %690 = vmatpush1.msra.mxu0 0.0
  %691 = vmatprep.subr.mxu0 0.0
  %692 = vmatpush1.msra.mxu0 0.0
  %693 = vmatprep.mubr.f32.mxu0 0.0
  %694 = vmatmul.mubr.f32.gmra.mrb[0].mxu0 %v576
  %v695 = vpop.f32.mrb[0].mxu0
  %v696 = vadd.f32 0.0, %v695
  %v697 = vpop.f32.mrb[0].mxu0
  %v698 = vadd.f32 0.0, %v697
  %699 = vmatprep.mubr.f32.mxu0 0.0
  %700 = vmatmul.mubr.f32.gmra.mrb[0].mxu0 %v579
  %v701 = vpop.f32.mrb[0].mxu0
  %v702 = vadd.f32 0.0, %v701
  %v703 = vpop.f32.mrb[0].mxu0
  %v704 = vadd.f32 0.0, %v703
  %705 = vmatprep.mubr.f32.mxu0 0.0
  %706 = vmatmul.mubr.f32.gmra.mrb[0].mxu0 %v582
  %v707 = vpop.f32.mrb[0].mxu0
  %v708 = vadd.f32 0.0, %v707
  %v709 = vpop.f32.mrb[0].mxu0
  %v710 = vadd.f32 0.0, %v709
  %711 = vmatprep.mubr.f32.mxu0 0.0
  %712 = vmatmul.mubr.f32.gmra.mrb[0].mxu0 %v585
  %v713 = vpop.f32.mrb[0].mxu0
  %v714 = vadd.f32 0.0, %v713
  %v715 = vpop.f32.mrb[0].mxu0
  %v716 = vadd.f32 0.0, %v715
  %717 = vmatprep.mubr.f32.mxu0 0.0
  %718 = vmatmul.mubr.f32.gmra.mrb[0].mxu0 %v588
  %v719 = vpop.f32.mrb[0].mxu0
  %v720 = vadd.f32 0.0, %v719
  %v721 = vpop.f32.mrb[0].mxu0
  %v722 = vadd.f32 0.0, %v721
  %723 = vmatprep.mubr.f32.mxu0 0.0
  %724 = vmatmul.mubr.f32.gmra.mrb[0].mxu0 %v591
  %v725 = vpop.f32.mrb[0].mxu0
  %v726 = vadd.f32 0.0, %v725
  %v727 = vpop.f32.mrb[0].mxu0
  %v728 = vadd.f32 0.0, %v727
  %729 = vmatprep.mubr.f32.mxu0 0.0
  %730 = vmatmul.mubr.f32.gmra.mrb[0].mxu0 %v594
  %v731 = vpop.f32.mrb[0].mxu0
  %v732 = vadd.f32 0.0, %v731
  %v733 = vpop.f32.mrb[0].mxu0
  %v734 = vadd.f32 0.0, %v733
  %735 = vmatprep.mubr.f32.mxu0 0.0
  %736 = vmatmul.mubr.f32.gmra.mrb[0].mxu0 %v597
  %v737 = vpop.f32.mrb[0].mxu0
  %v738 = vadd.f32 0.0, %v737
  %v739 = vpop.f32.mrb[0].mxu0
  %v740 = vadd.f32 0.0, %v739
  %741 = vmatprep.mubr.f32.mxu0 0.0
  %742 = vmatmul.mubr.f32.gmra.mrb[0].mxu0 %v600
  %v743 = vpop.f32.mrb[0].mxu0
  %v744 = vadd.f32 0.0, %v743
  %v745 = vpop.f32.mrb[0].mxu0
  %v746 = vadd.f32 0.0, %v745
  %747 = vmatprep.mubr.f32.mxu0 0.0
  %748 = vmatmul.mubr.f32.gmra.mrb[0].mxu0 %v603
  %v749 = vpop.f32.mrb[0].mxu0
  %v750 = vadd.f32 0.0, %v749
  %v751 = vpop.f32.mrb[0].mxu0
  %v752 = vadd.f32 0.0, %v751
  %753 = vmatprep.mubr.f32.mxu0 0.0
  %754 = vmatmul.mubr.f32.gmra.mrb[0].mxu0 %v606
  %v755 = vpop.f32.mrb[0].mxu0
  %v756 = vadd.f32 0.0, %v755
  %v757 = vpop.f32.mrb[0].mxu0
  %v758 = vadd.f32 0.0, %v757
  %759 = vmatprep.mubr.f32.mxu0 0.0
  %760 = vmatmul.mubr.f32.gmra.mrb[0].mxu0 %v609
  %v761 = vpop.f32.mrb[0].mxu0
  %v762 = vadd.f32 0.0, %v761
  %v763 = vpop.f32.mrb[0].mxu0
  %v764 = vadd.f32 0.0, %v763
  %765 = vmatprep.mubr.f32.mxu0 0.0
  %766 = vmatmul.mubr.f32.gmra.mrb[0].mxu0 %v612
  %v767 = vpop.f32.mrb[0].mxu0
  %v768 = vpop.f32.mrb[0].mxu0
  %769 = vmatprep.mubr.f32.mxu0 0.0
  %770 = vmatmul.mubr.f32.gmra.mrb[0].mxu0 %v615
  %v771 = vpop.f32.mrb[0].mxu0
  %v772 = vpop.f32.mrb[0].mxu0
  %773 = vmatprep.mubr.f32.mxu0 0.0
  %774 = vmatmul.mubr.f32.gmra.mrb[0].mxu0 %v618
  %v775 = vpop.f32.mrb[0].mxu0
  %v776 = vpop.f32.mrb[0].mxu0
  %777 = vmatprep.mubr.f32.mxu0 0.0
  %778 = vmatmul.mubr.f32.gmra.mrb[0].mxu0 %v621
  %v779 = vpop.f32.mrb[0].mxu0
  %v780 = vpop.f32.mrb[0].mxu0
  %781 = vdwg.mxu0
  %v782 = vadd.f32 %v480, %v696
  %v783 = vadd.f32 %v482, %v698
  %v784 = vadd.f32 %v486, %v702
  %v785 = vadd.f32 %v488, %v704
  %v786 = vadd.f32 %v492, %v708
  %v787 = vadd.f32 %v494, %v710
  %v788 = vadd.f32 %v498, %v714
  %v789 = vadd.f32 %v500, %v716
  %v790 = vadd.f32 %v504, %v720
  %v791 = vadd.f32 %v506, %v722
  %v792 = vadd.f32 %v510, %v726
  %v793 = vadd.f32 %v512, %v728
  %v794 = vadd.f32 %v516, %v732
  %v795 = vadd.f32 %v518, %v734
  %v796 = vadd.f32 %v522, %v738
  %v797 = vadd.f32 %v524, %v740
  %v798 = vadd.f32 %v528, %v744
  %v799 = vadd.f32 %v530, %v746
  %v800 = vadd.f32 %v534, %v750
  %v801 = vadd.f32 %v536, %v752
  %v802 = vadd.f32 %v540, %v756
  %v803 = vadd.f32 %v542, %v758
  %v804 = vadd.f32 %v546, %v762
  %v805 = vadd.f32 %v548, %v764
  %s806 = scalar_lea.vmem %s1, 192
  %v807 = vld [vmem:[%s806] sm:$0xff]
  %v808 = vld [vmem:[%s806 + $0x8] sm:$0xff]
  %v809 = vld [vmem:[%s806 + $0x10] sm:$0xff]
  %v810 = vld [vmem:[%s806 + $0x18] sm:$0xff]
  %v811 = vld [vmem:[%s806 + $0x20] sm:$0xff]
  %v812 = vld [vmem:[%s806 + $0x28] sm:$0xff]
  %v813 = vld [vmem:[%s806 + $0x30] sm:$0xf]
  %v814 = vld [vmem:[%s806 + $0x38] sm:$0xf]
  %v816 = vsel %vm150, %v83, 0
  %v819 = vsel %vm150, %v84, 0
  %v822 = vsel %vm150, %v85, 0
  %v825 = vsel %vm150, %v86, 0
  %v828 = vsel %vm150, %v87, 0
  %v831 = vsel %vm150, %v88, 0
  %v834 = vsel %vm150, %v89, 0
  %v837 = vsel %vm150, %v90, 0
  %v840 = vsel %vm150, %v91, 0
  %v843 = vsel %vm150, %v92, 0
  %v846 = vsel %vm150, %v93, 0
  %v849 = vsel %vm150, %v94, 0
  %v852 = vsel %vm150, %v95, 0
  %v855 = vsel %vm150, %v96, 0
  %v858 = vsel %vm150, %v97, 0
  %v861 = vsel %vm150, %v98, 0
  %v864 = vsel %vm199, %v813, 0
  %v867 = vsel %vm199, %v814, 0
  %869 = vmatprep.subr.mxu0 %v808
  %870 = vmatpush1.msra.mxu0 %v807
  %871 = vmatprep.subr.mxu0 %v810
  %872 = vmatpush1.msra.mxu0 %v809
  %873 = vmatprep.subr.mxu0 %v812
  %874 = vmatpush1.msra.mxu0 %v811
  %875 = vmatprep.subr.mxu0 %v867
  %876 = vmatpush1.msra.mxu0 %v864
  %877 = vmatprep.subr.mxu0 0.0
  %878 = vmatpush1.msra.mxu0 0.0
  %879 = vmatprep.subr.mxu0 0.0
  %880 = vmatpush1.msra.mxu0 0.0
  %881 = vmatprep.subr.mxu0 0.0
  %882 = vmatpush1.msra.mxu0 0.0
  %883 = vmatprep.subr.mxu0 0.0
  %884 = vmatpush1.msra.mxu0 0.0
  %885 = vmatprep.subr.mxu0 0.0
  %886 = vmatpush1.msra.mxu0 0.0
  %887 = vmatprep.subr.mxu0 0.0
  %888 = vmatpush1.msra.mxu0 0.0
  %889 = vmatprep.subr.mxu0 0.0
  %890 = vmatpush1.msra.mxu0 0.0
  %891 = vmatprep.subr.mxu0 0.0
  %892 = vmatpush1.msra.mxu0 0.0
  %893 = vmatprep.subr.mxu0 0.0
  %894 = vmatpush1.msra.mxu0 0.0
  %895 = vmatprep.subr.mxu0 0.0
  %896 = vmatpush1.msra.mxu0 0.0
  %897 = vmatprep.subr.mxu0 0.0
  %898 = vmatpush1.msra.mxu0 0.0
  %899 = vmatprep.subr.mxu0 0.0
  %900 = vmatpush1.msra.mxu0 0.0
  %901 = vmatprep.subr.mxu0 0.0
  %902 = vmatpush1.msra.mxu0 0.0
  %903 = vmatprep.subr.mxu0 0.0
  %904 = vmatpush1.msra.mxu0 0.0
  %905 = vmatprep.subr.mxu0 0.0
  %906 = vmatpush1.msra.mxu0 0.0
  %907 = vmatprep.subr.mxu0 0.0
  %908 = vmatpush1.msra.mxu0 0.0
  %909 = vmatprep.subr.mxu0 0.0
  %910 = vmatpush1.msra.mxu0 0.0
  %911 = vmatprep.subr.mxu0 0.0
  %912 = vmatpush1.msra.mxu0 0.0
  %913 = vmatprep.subr.mxu0 0.0
  %914 = vmatpush1.msra.mxu0 0.0
  %915 = vmatprep.subr.mxu0 0.0
  %916 = vmatpush1.msra.mxu0 0.0
  %917 = vmatprep.subr.mxu0 0.0
  %918 = vmatpush1.msra.mxu0 0.0
  %919 = vmatprep.subr.mxu0 0.0
  %920 = vmatpush1.msra.mxu0 0.0
  %921 = vmatprep.subr.mxu0 0.0
  %922 = vmatpush1.msra.mxu0 0.0
  %923 = vmatprep.subr.mxu0 0.0
  %924 = vmatpush1.msra.mxu0 0.0
  %925 = vmatprep.subr.mxu0 0.0
  %926 = vmatpush1.msra.mxu0 0.0
  %927 = vmatprep.subr.mxu0 0.0
  %928 = vmatpush1.msra.mxu0 0.0
  %929 = vmatprep.subr.mxu0 0.0
  %930 = vmatpush1.msra.mxu0 0.0
  %931 = vmatprep.subr.mxu0 0.0
  %932 = vmatpush1.msra.mxu0 0.0
  %933 = vmatprep.mubr.f32.mxu0 0.0
  %934 = vmatmul.mubr.f32.gmra.mrb[0].mxu0 %v816
  %v935 = vpop.f32.mrb[0].mxu0
  %v936 = vadd.f32 0.0, %v935
  %v937 = vpop.f32.mrb[0].mxu0
  %v938 = vadd.f32 0.0, %v937
  %939 = vmatprep.mubr.f32.mxu0 0.0
  %940 = vmatmul.mubr.f32.gmra.mrb[0].mxu0 %v819
  %v941 = vpop.f32.mrb[0].mxu0
  %v942 = vadd.f32 0.0, %v941
  %v943 = vpop.f32.mrb[0].mxu0
  %v944 = vadd.f32 0.0, %v943
  %945 = vmatprep.mubr.f32.mxu0 0.0
  %946 = vmatmul.mubr.f32.gmra.mrb[0].mxu0 %v822
  %v947 = vpop.f32.mrb[0].mxu0
  %v948 = vadd.f32 0.0, %v947
  %v949 = vpop.f32.mrb[0].mxu0
  %v950 = vadd.f32 0.0, %v949
  %951 = vmatprep.mubr.f32.mxu0 0.0
  %952 = vmatmul.mubr.f32.gmra.mrb[0].mxu0 %v825
  %v953 = vpop.f32.mrb[0].mxu0
  %v954 = vadd.f32 0.0, %v953
  %v955 = vpop.f32.mrb[0].mxu0
  %v956 = vadd.f32 0.0, %v955
  %957 = vmatprep.mubr.f32.mxu0 0.0
  %958 = vmatmul.mubr.f32.gmra.mrb[0].mxu0 %v828
  %v959 = vpop.f32.mrb[0].mxu0
  %v960 = vadd.f32 0.0, %v959
  %v961 = vpop.f32.mrb[0].mxu0
  %v962 = vadd.f32 0.0, %v961
  %963 = vmatprep.mubr.f32.mxu0 0.0
  %964 = vmatmul.mubr.f32.gmra.mrb[0].mxu0 %v831
  %v965 = vpop.f32.mrb[0].mxu0
  %v966 = vadd.f32 0.0, %v965
  %v967 = vpop.f32.mrb[0].mxu0
  %v968 = vadd.f32 0.0, %v967
  %969 = vmatprep.mubr.f32.mxu0 0.0
  %970 = vmatmul.mubr.f32.gmra.mrb[0].mxu0 %v834
  %v971 = vpop.f32.mrb[0].mxu0
  %v972 = vadd.f32 0.0, %v971
  %v973 = vpop.f32.mrb[0].mxu0
  %v974 = vadd.f32 0.0, %v973
  %975 = vmatprep.mubr.f32.mxu0 0.0
  %976 = vmatmul.mubr.f32.gmra.mrb[0].mxu0 %v837
  %v977 = vpop.f32.mrb[0].mxu0
  %v978 = vadd.f32 0.0, %v977
  %v979 = vpop.f32.mrb[0].mxu0
  %v980 = vadd.f32 0.0, %v979
  %981 = vmatprep.mubr.f32.mxu0 0.0
  %982 = vmatmul.mubr.f32.gmra.mrb[0].mxu0 %v840
  %v983 = vpop.f32.mrb[0].mxu0
  %v984 = vadd.f32 0.0, %v983
  %v985 = vpop.f32.mrb[0].mxu0
  %v986 = vadd.f32 0.0, %v985
  %987 = vmatprep.mubr.f32.mxu0 0.0
  %988 = vmatmul.mubr.f32.gmra.mrb[0].mxu0 %v843
  %v989 = vpop.f32.mrb[0].mxu0
  %v990 = vadd.f32 0.0, %v989
  %v991 = vpop.f32.mrb[0].mxu0
  %v992 = vadd.f32 0.0, %v991
  %993 = vmatprep.mubr.f32.mxu0 0.0
  %994 = vmatmul.mubr.f32.gmra.mrb[0].mxu0 %v846
  %v995 = vpop.f32.mrb[0].mxu0
  %v996 = vadd.f32 0.0, %v995
  %v997 = vpop.f32.mrb[0].mxu0
  %v998 = vadd.f32 0.0, %v997
  %999 = vmatprep.mubr.f32.mxu0 0.0
  %1000 = vmatmul.mubr.f32.gmra.mrb[0].mxu0 %v849
  %v1001 = vpop.f32.mrb[0].mxu0
  %v1002 = vadd.f32 0.0, %v1001
  %v1003 = vpop.f32.mrb[0].mxu0
  %v1004 = vadd.f32 0.0, %v1003
  %1005 = vmatprep.mubr.f32.mxu0 0.0
  %1006 = vmatmul.mubr.f32.gmra.mrb[0].mxu0 %v852
  %v1007 = vpop.f32.mrb[0].mxu0
  %v1008 = vpop.f32.mrb[0].mxu0
  %1009 = vmatprep.mubr.f32.mxu0 0.0
  %1010 = vmatmul.mubr.f32.gmra.mrb[0].mxu0 %v855
  %v1011 = vpop.f32.mrb[0].mxu0
  %v1012 = vpop.f32.mrb[0].mxu0
  %1013 = vmatprep.mubr.f32.mxu0 0.0
  %1014 = vmatmul.mubr.f32.gmra.mrb[0].mxu0 %v858
  %v1015 = vpop.f32.mrb[0].mxu0
  %v1016 = vpop.f32.mrb[0].mxu0
  %1017 = vmatprep.mubr.f32.mxu0 0.0
  %1018 = vmatmul.mubr.f32.gmra.mrb[0].mxu0 %v861
  %v1019 = vpop.f32.mrb[0].mxu0
  %v1020 = vpop.f32.mrb[0].mxu0
  %1021 = vdwg.mxu0
  %v1022 = vadd.f32 %v782, %v936
  %v1023 = vadd.f32 %v783, %v938
  %v1024 = vadd.f32 %v784, %v942
  %v1025 = vadd.f32 %v785, %v944
  %v1026 = vadd.f32 %v786, %v948
  %v1027 = vadd.f32 %v787, %v950
  %v1028 = vadd.f32 %v788, %v954
  %v1029 = vadd.f32 %v789, %v956
  %v1030 = vadd.f32 %v790, %v960
  %v1031 = vadd.f32 %v791, %v962
  %v1032 = vadd.f32 %v792, %v966
  %v1033 = vadd.f32 %v793, %v968
  %v1034 = vadd.f32 %v794, %v972
  %v1035 = vadd.f32 %v795, %v974
  %v1036 = vadd.f32 %v796, %v978
  %v1037 = vadd.f32 %v797, %v980
  %v1038 = vadd.f32 %v798, %v984
  %v1039 = vadd.f32 %v799, %v986
  %v1040 = vadd.f32 %v800, %v990
  %v1041 = vadd.f32 %v801, %v992
  %v1042 = vadd.f32 %v802, %v996
  %v1043 = vadd.f32 %v803, %v998
  %v1044 = vadd.f32 %v804, %v1002
  %v1045 = vadd.f32 %v805, %v1004
  %s1046 = scalar_lea.vmem %s1, 256
  %v1047 = vld [vmem:[%s1046] sm:$0xff]
  %v1048 = vld [vmem:[%s1046 + $0x8] sm:$0xff]
  %v1049 = vld [vmem:[%s1046 + $0x10] sm:$0xff]
  %v1050 = vld [vmem:[%s1046 + $0x18] sm:$0xff]
  %v1051 = vld [vmem:[%s1046 + $0x20] sm:$0xff]
  %v1052 = vld [vmem:[%s1046 + $0x28] sm:$0xff]
  %v1053 = vld [vmem:[%s1046 + $0x30] sm:$0xf]
  %v1054 = vld [vmem:[%s1046 + $0x38] sm:$0xf]
  %v1056 = vsel %vm150, %v100, 0
  %v1059 = vsel %vm150, %v101, 0
  %v1062 = vsel %vm150, %v102, 0
  %v1065 = vsel %vm150, %v103, 0
  %v1068 = vsel %vm150, %v104, 0
  %v1071 = vsel %vm150, %v105, 0
  %v1074 = vsel %vm150, %v106, 0
  %v1077 = vsel %vm150, %v107, 0
  %v1080 = vsel %vm150, %v108, 0
  %v1083 = vsel %vm150, %v109, 0
  %v1086 = vsel %vm150, %v110, 0
  %v1089 = vsel %vm150, %v111, 0
  %v1092 = vsel %vm150, %v112, 0
  %v1095 = vsel %vm150, %v113, 0
  %v1098 = vsel %vm150, %v114, 0
  %v1101 = vsel %vm150, %v115, 0
  %v1104 = vsel %vm199, %v1053, 0
  %v1107 = vsel %vm199, %v1054, 0
  %1109 = vmatprep.subr.mxu0 %v1048
  %1110 = vmatpush1.msra.mxu0 %v1047
  %1111 = vmatprep.subr.mxu0 %v1050
  %1112 = vmatpush1.msra.mxu0 %v1049
  %1113 = vmatprep.subr.mxu0 %v1052
  %1114 = vmatpush1.msra.mxu0 %v1051
  %1115 = vmatprep.subr.mxu0 %v1107
  %1116 = vmatpush1.msra.mxu0 %v1104
  %1117 = vmatprep.subr.mxu0 0.0
  %1118 = vmatpush1.msra.mxu0 0.0
  %1119 = vmatprep.subr.mxu0 0.0
  %1120 = vmatpush1.msra.mxu0 0.0
  %1121 = vmatprep.subr.mxu0 0.0
  %1122 = vmatpush1.msra.mxu0 0.0
  %1123 = vmatprep.subr.mxu0 0.0
  %1124 = vmatpush1.msra.mxu0 0.0
  %1125 = vmatprep.subr.mxu0 0.0
  %1126 = vmatpush1.msra.mxu0 0.0
  %1127 = vmatprep.subr.mxu0 0.0
  %1128 = vmatpush1.msra.mxu0 0.0
  %1129 = vmatprep.subr.mxu0 0.0
  %1130 = vmatpush1.msra.mxu0 0.0
  %1131 = vmatprep.subr.mxu0 0.0
  %1132 = vmatpush1.msra.mxu0 0.0
  %1133 = vmatprep.subr.mxu0 0.0
  %1134 = vmatpush1.msra.mxu0 0.0
  %1135 = vmatprep.subr.mxu0 0.0
  %1136 = vmatpush1.msra.mxu0 0.0
  %1137 = vmatprep.subr.mxu0 0.0
  %1138 = vmatpush1.msra.mxu0 0.0
  %1139 = vmatprep.subr.mxu0 0.0
  %1140 = vmatpush1.msra.mxu0 0.0
  %1141 = vmatprep.subr.mxu0 0.0
  %1142 = vmatpush1.msra.mxu0 0.0
  %1143 = vmatprep.subr.mxu0 0.0
  %1144 = vmatpush1.msra.mxu0 0.0
  %1145 = vmatprep.subr.mxu0 0.0
  %1146 = vmatpush1.msra.mxu0 0.0
  %1147 = vmatprep.subr.mxu0 0.0
  %1148 = vmatpush1.msra.mxu0 0.0
  %1149 = vmatprep.subr.mxu0 0.0
  %1150 = vmatpush1.msra.mxu0 0.0
  %1151 = vmatprep.subr.mxu0 0.0
  %1152 = vmatpush1.msra.mxu0 0.0
  %1153 = vmatprep.subr.mxu0 0.0
  %1154 = vmatpush1.msra.mxu0 0.0
  %1155 = vmatprep.subr.mxu0 0.0
  %1156 = vmatpush1.msra.mxu0 0.0
  %1157 = vmatprep.subr.mxu0 0.0
  %1158 = vmatpush1.msra.mxu0 0.0
  %1159 = vmatprep.subr.mxu0 0.0
  %1160 = vmatpush1.msra.mxu0 0.0
  %1161 = vmatprep.subr.mxu0 0.0
  %1162 = vmatpush1.msra.mxu0 0.0
  %1163 = vmatprep.subr.mxu0 0.0
  %1164 = vmatpush1.msra.mxu0 0.0
  %1165 = vmatprep.subr.mxu0 0.0
  %1166 = vmatpush1.msra.mxu0 0.0
  %1167 = vmatprep.subr.mxu0 0.0
  %1168 = vmatpush1.msra.mxu0 0.0
  %1169 = vmatprep.subr.mxu0 0.0
  %1170 = vmatpush1.msra.mxu0 0.0
  %1171 = vmatprep.subr.mxu0 0.0
  %1172 = vmatpush1.msra.mxu0 0.0
  %1173 = vmatprep.mubr.f32.mxu0 0.0
  %1174 = vmatmul.mubr.f32.gmra.mrb[0].mxu0 %v1056
  %v1175 = vpop.f32.mrb[0].mxu0
  %v1176 = vadd.f32 0.0, %v1175
  %v1177 = vpop.f32.mrb[0].mxu0
  %v1178 = vadd.f32 0.0, %v1177
  %1179 = vmatprep.mubr.f32.mxu0 0.0
  %1180 = vmatmul.mubr.f32.gmra.mrb[0].mxu0 %v1059
  %v1181 = vpop.f32.mrb[0].mxu0
  %v1182 = vadd.f32 0.0, %v1181
  %v1183 = vpop.f32.mrb[0].mxu0
  %v1184 = vadd.f32 0.0, %v1183
  %1185 = vmatprep.mubr.f32.mxu0 0.0
  %1186 = vmatmul.mubr.f32.gmra.mrb[0].mxu0 %v1062
  %v1187 = vpop.f32.mrb[0].mxu0
  %v1188 = vadd.f32 0.0, %v1187
  %v1189 = vpop.f32.mrb[0].mxu0
  %v1190 = vadd.f32 0.0, %v1189
  %1191 = vmatprep.mubr.f32.mxu0 0.0
  %1192 = vmatmul.mubr.f32.gmra.mrb[0].mxu0 %v1065
  %v1193 = vpop.f32.mrb[0].mxu0
  %v1194 = vadd.f32 0.0, %v1193
  %v1195 = vpop.f32.mrb[0].mxu0
  %v1196 = vadd.f32 0.0, %v1195
  %1197 = vmatprep.mubr.f32.mxu0 0.0
  %1198 = vmatmul.mubr.f32.gmra.mrb[0].mxu0 %v1068
  %v1199 = vpop.f32.mrb[0].mxu0
  %v1200 = vadd.f32 0.0, %v1199
  %v1201 = vpop.f32.mrb[0].mxu0
  %v1202 = vadd.f32 0.0, %v1201
  %1203 = vmatprep.mubr.f32.mxu0 0.0
  %1204 = vmatmul.mubr.f32.gmra.mrb[0].mxu0 %v1071
  %v1205 = vpop.f32.mrb[0].mxu0
  %v1206 = vadd.f32 0.0, %v1205
  %v1207 = vpop.f32.mrb[0].mxu0
  %v1208 = vadd.f32 0.0, %v1207
  %1209 = vmatprep.mubr.f32.mxu0 0.0
  %1210 = vmatmul.mubr.f32.gmra.mrb[0].mxu0 %v1074
  %v1211 = vpop.f32.mrb[0].mxu0
  %v1212 = vadd.f32 0.0, %v1211
  %v1213 = vpop.f32.mrb[0].mxu0
  %v1214 = vadd.f32 0.0, %v1213
  %1215 = vmatprep.mubr.f32.mxu0 0.0
  %1216 = vmatmul.mubr.f32.gmra.mrb[0].mxu0 %v1077
  %v1217 = vpop.f32.mrb[0].mxu0
  %v1218 = vadd.f32 0.0, %v1217
  %v1219 = vpop.f32.mrb[0].mxu0
  %v1220 = vadd.f32 0.0, %v1219
  %1221 = vmatprep.mubr.f32.mxu0 0.0
  %1222 = vmatmul.mubr.f32.gmra.mrb[0].mxu0 %v1080
  %v1223 = vpop.f32.mrb[0].mxu0
  %v1224 = vadd.f32 0.0, %v1223
  %v1225 = vpop.f32.mrb[0].mxu0
  %v1226 = vadd.f32 0.0, %v1225
  %1227 = vmatprep.mubr.f32.mxu0 0.0
  %1228 = vmatmul.mubr.f32.gmra.mrb[0].mxu0 %v1083
  %v1229 = vpop.f32.mrb[0].mxu0
  %v1230 = vadd.f32 0.0, %v1229
  %v1231 = vpop.f32.mrb[0].mxu0
  %v1232 = vadd.f32 0.0, %v1231
  %1233 = vmatprep.mubr.f32.mxu0 0.0
  %1234 = vmatmul.mubr.f32.gmra.mrb[0].mxu0 %v1086
  %v1235 = vpop.f32.mrb[0].mxu0
  %v1236 = vadd.f32 0.0, %v1235
  %v1237 = vpop.f32.mrb[0].mxu0
  %v1238 = vadd.f32 0.0, %v1237
  %1239 = vmatprep.mubr.f32.mxu0 0.0
  %1240 = vmatmul.mubr.f32.gmra.mrb[0].mxu0 %v1089
  %v1241 = vpop.f32.mrb[0].mxu0
  %v1242 = vadd.f32 0.0, %v1241
  %v1243 = vpop.f32.mrb[0].mxu0
  %v1244 = vadd.f32 0.0, %v1243
  %1245 = vmatprep.mubr.f32.mxu0 0.0
  %1246 = vmatmul.mubr.f32.gmra.mrb[0].mxu0 %v1092
  %v1247 = vpop.f32.mrb[0].mxu0
  %v1248 = vpop.f32.mrb[0].mxu0
  %1249 = vmatprep.mubr.f32.mxu0 0.0
  %1250 = vmatmul.mubr.f32.gmra.mrb[0].mxu0 %v1095
  %v1251 = vpop.f32.mrb[0].mxu0
  %v1252 = vpop.f32.mrb[0].mxu0
  %1253 = vmatprep.mubr.f32.mxu0 0.0
  %1254 = vmatmul.mubr.f32.gmra.mrb[0].mxu0 %v1098
  %v1255 = vpop.f32.mrb[0].mxu0
  %v1256 = vpop.f32.mrb[0].mxu0
  %1257 = vmatprep.mubr.f32.mxu0 0.0
  %1258 = vmatmul.mubr.f32.gmra.mrb[0].mxu0 %v1101
  %v1259 = vpop.f32.mrb[0].mxu0
  %v1260 = vpop.f32.mrb[0].mxu0
  %1261 = vdwg.mxu0
  %v1262 = vadd.f32 %v1022, %v1176
  %v1263 = vadd.f32 %v1023, %v1178
  %v1264 = vadd.f32 %v1024, %v1182
  %v1265 = vadd.f32 %v1025, %v1184
  %v1266 = vadd.f32 %v1026, %v1188
  %v1267 = vadd.f32 %v1027, %v1190
  %v1268 = vadd.f32 %v1028, %v1194
  %v1269 = vadd.f32 %v1029, %v1196
  %v1270 = vadd.f32 %v1030, %v1200
  %v1271 = vadd.f32 %v1031, %v1202
  %v1272 = vadd.f32 %v1032, %v1206
  %v1273 = vadd.f32 %v1033, %v1208
  %v1274 = vadd.f32 %v1034, %v1212
  %v1275 = vadd.f32 %v1035, %v1214
  %v1276 = vadd.f32 %v1036, %v1218
  %v1277 = vadd.f32 %v1037, %v1220
  %v1278 = vadd.f32 %v1038, %v1224
  %v1279 = vadd.f32 %v1039, %v1226
  %v1280 = vadd.f32 %v1040, %v1230
  %v1281 = vadd.f32 %v1041, %v1232
  %v1282 = vadd.f32 %v1042, %v1236
  %v1283 = vadd.f32 %v1043, %v1238
  %v1284 = vadd.f32 %v1044, %v1242
  %v1285 = vadd.f32 %v1045, %v1244
  %1286 = vmatprep.subr.mxu0 %v143
  %1287 = vmatpush1.msra.mxu0 %v142
  %1288 = vmatprep.subr.mxu0 %v145
  %1289 = vmatpush1.msra.mxu0 %v144
  %1290 = vmatprep.subr.mxu0 %v147
  %1291 = vmatpush1.msra.mxu0 %v146
  %1292 = vmatprep.subr.mxu0 %v204
  %1293 = vmatpush1.msra.mxu0 %v201
  %1294 = vmatprep.subr.mxu0 0.0
  %1295 = vmatpush1.msra.mxu0 0.0
  %1296 = vmatprep.subr.mxu0 0.0
  %1297 = vmatpush1.msra.mxu0 0.0
  %1298 = vmatprep.subr.mxu0 0.0
  %1299 = vmatpush1.msra.mxu0 0.0
  %1300 = vmatprep.subr.mxu0 0.0
  %1301 = vmatpush1.msra.mxu0 0.0
  %1302 = vmatprep.subr.mxu0 0.0
  %1303 = vmatpush1.msra.mxu0 0.0
  %1304 = vmatprep.subr.mxu0 0.0
  %1305 = vmatpush1.msra.mxu0 0.0
  %1306 = vmatprep.subr.mxu0 0.0
  %1307 = vmatpush1.msra.mxu0 0.0
  %1308 = vmatprep.subr.mxu0 0.0
  %1309 = vmatpush1.msra.mxu0 0.0
  %1310 = vmatprep.subr.mxu0 0.0
  %1311 = vmatpush1.msra.mxu0 0.0
  %1312 = vmatprep.subr.mxu0 0.0
  %1313 = vmatpush1.msra.mxu0 0.0
  %1314 = vmatprep.subr.mxu0 0.0
  %1315 = vmatpush1.msra.mxu0 0.0
  %1316 = vmatprep.subr.mxu0 0.0
  %1317 = vmatpush1.msra.mxu0 0.0
  %1318 = vmatprep.subr.mxu0 0.0
  %1319 = vmatpush1.msra.mxu0 0.0
  %1320 = vmatprep.subr.mxu0 0.0
  %1321 = vmatpush1.msra.mxu0 0.0
  %1322 = vmatprep.subr.mxu0 0.0
  %1323 = vmatpush1.msra.mxu0 0.0
  %1324 = vmatprep.subr.mxu0 0.0
  %1325 = vmatpush1.msra.mxu0 0.0
  %1326 = vmatprep.subr.mxu0 0.0
  %1327 = vmatpush1.msra.mxu0 0.0
  %1328 = vmatprep.subr.mxu0 0.0
  %1329 = vmatpush1.msra.mxu0 0.0
  %1330 = vmatprep.subr.mxu0 0.0
  %1331 = vmatpush1.msra.mxu0 0.0
  %1332 = vmatprep.subr.mxu0 0.0
  %1333 = vmatpush1.msra.mxu0 0.0
  %1334 = vmatprep.subr.mxu0 0.0
  %1335 = vmatpush1.msra.mxu0 0.0
  %1336 = vmatprep.subr.mxu0 0.0
  %1337 = vmatpush1.msra.mxu0 0.0
  %1338 = vmatprep.subr.mxu0 0.0
  %1339 = vmatpush1.msra.mxu0 0.0
  %1340 = vmatprep.subr.mxu0 0.0
  %1341 = vmatpush1.msra.mxu0 0.0
  %1342 = vmatprep.subr.mxu0 0.0
  %1343 = vmatpush1.msra.mxu0 0.0
  %1344 = vmatprep.subr.mxu0 0.0
  %1345 = vmatpush1.msra.mxu0 0.0
  %1346 = vmatprep.subr.mxu0 0.0
  %1347 = vmatpush1.msra.mxu0 0.0
  %1348 = vmatprep.subr.mxu0 0.0
  %1349 = vmatpush1.msra.mxu0 0.0
  %1350 = vmatprep.mubr.f32.mxu0 0.0
  %1351 = vmatmul.mubr.f32.gmra.mrb[0].mxu0 %v576
  %v1352 = vpop.f32.mrb[0].mxu0
  %v1353 = vadd.f32 0.0, %v1352
  %v1354 = vpop.f32.mrb[0].mxu0
  %v1355 = vadd.f32 0.0, %v1354
  %1356 = vmatprep.mubr.f32.mxu0 0.0
  %1357 = vmatmul.mubr.f32.gmra.mrb[0].mxu0 %v579
  %v1358 = vpop.f32.mrb[0].mxu0
  %v1359 = vadd.f32 0.0, %v1358
  %v1360 = vpop.f32.mrb[0].mxu0
  %v1361 = vadd.f32 0.0, %v1360
  %1362 = vmatprep.mubr.f32.mxu0 0.0
  %1363 = vmatmul.mubr.f32.gmra.mrb[0].mxu0 %v582
  %v1364 = vpop.f32.mrb[0].mxu0
  %v1365 = vadd.f32 0.0, %v1364
  %v1366 = vpop.f32.mrb[0].mxu0
  %v1367 = vadd.f32 0.0, %v1366
  %1368 = vmatprep.mubr.f32.mxu0 0.0
  %1369 = vmatmul.mubr.f32.gmra.mrb[0].mxu0 %v585
  %v1370 = vpop.f32.mrb[0].mxu0
  %v1371 = vadd.f32 0.0, %v1370
  %v1372 = vpop.f32.mrb[0].mxu0
  %v1373 = vadd.f32 0.0, %v1372
  %1374 = vmatprep.mubr.f32.mxu0 0.0
  %1375 = vmatmul.mubr.f32.gmra.mrb[0].mxu0 %v588
  %v1376 = vpop.f32.mrb[0].mxu0
  %v1377 = vadd.f32 0.0, %v1376
  %v1378 = vpop.f32.mrb[0].mxu0
  %v1379 = vadd.f32 0.0, %v1378
  %1380 = vmatprep.mubr.f32.mxu0 0.0
  %1381 = vmatmul.mubr.f32.gmra.mrb[0].mxu0 %v591
  %v1382 = vpop.f32.mrb[0].mxu0
  %v1383 = vadd.f32 0.0, %v1382
  %v1384 = vpop.f32.mrb[0].mxu0
  %v1385 = vadd.f32 0.0, %v1384
  %1386 = vmatprep.mubr.f32.mxu0 0.0
  %1387 = vmatmul.mubr.f32.gmra.mrb[0].mxu0 %v594
  %v1388 = vpop.f32.mrb[0].mxu0
  %v1389 = vadd.f32 0.0, %v1388
  %v1390 = vpop.f32.mrb[0].mxu0
  %v1391 = vadd.f32 0.0, %v1390
  %1392 = vmatprep.mubr.f32.mxu0 0.0
  %1393 = vmatmul.mubr.f32.gmra.mrb[0].mxu0 %v597
  %v1394 = vpop.f32.mrb[0].mxu0
  %v1395 = vadd.f32 0.0, %v1394
  %v1396 = vpop.f32.mrb[0].mxu0
  %v1397 = vadd.f32 0.0, %v1396
  %1398 = vmatprep.mubr.f32.mxu0 0.0
  %1399 = vmatmul.mubr.f32.gmra.mrb[0].mxu0 %v600
  %v1400 = vpop.f32.mrb[0].mxu0
  %v1401 = vadd.f32 0.0, %v1400
  %v1402 = vpop.f32.mrb[0].mxu0
  %v1403 = vadd.f32 0.0, %v1402
  %1404 = vmatprep.mubr.f32.mxu0 0.0
  %1405 = vmatmul.mubr.f32.gmra.mrb[0].mxu0 %v603
  %v1406 = vpop.f32.mrb[0].mxu0
  %v1407 = vadd.f32 0.0, %v1406
  %v1408 = vpop.f32.mrb[0].mxu0
  %v1409 = vadd.f32 0.0, %v1408
  %1410 = vmatprep.mubr.f32.mxu0 0.0
  %1411 = vmatmul.mubr.f32.gmra.mrb[0].mxu0 %v606
  %v1412 = vpop.f32.mrb[0].mxu0
  %v1413 = vadd.f32 0.0, %v1412
  %v1414 = vpop.f32.mrb[0].mxu0
  %v1415 = vadd.f32 0.0, %v1414
  %1416 = vmatprep.mubr.f32.mxu0 0.0
  %1417 = vmatmul.mubr.f32.gmra.mrb[0].mxu0 %v609
  %v1418 = vpop.f32.mrb[0].mxu0
  %v1419 = vadd.f32 0.0, %v1418
  %v1420 = vpop.f32.mrb[0].mxu0
  %v1421 = vadd.f32 0.0, %v1420
  %1422 = vmatprep.mubr.f32.mxu0 0.0
  %1423 = vmatmul.mubr.f32.gmra.mrb[0].mxu0 %v612
  %v1424 = vpop.f32.mrb[0].mxu0
  %v1425 = vpop.f32.mrb[0].mxu0
  %1426 = vmatprep.mubr.f32.mxu0 0.0
  %1427 = vmatmul.mubr.f32.gmra.mrb[0].mxu0 %v615
  %v1428 = vpop.f32.mrb[0].mxu0
  %v1429 = vpop.f32.mrb[0].mxu0
  %1430 = vmatprep.mubr.f32.mxu0 0.0
  %1431 = vmatmul.mubr.f32.gmra.mrb[0].mxu0 %v618
  %v1432 = vpop.f32.mrb[0].mxu0
  %v1433 = vpop.f32.mrb[0].mxu0
  %1434 = vmatprep.mubr.f32.mxu0 0.0
  %1435 = vmatmul.mubr.f32.gmra.mrb[0].mxu0 %v621
  %v1436 = vpop.f32.mrb[0].mxu0
  %v1437 = vpop.f32.mrb[0].mxu0
  %1438 = vdwg.mxu0
  %1439 = vmatprep.subr.mxu0 %v134
  %1440 = vmatpush1.msra.mxu0 %v133
  %1441 = vmatprep.subr.mxu0 %v136
  %1442 = vmatpush1.msra.mxu0 %v135
  %1443 = vmatprep.subr.mxu0 %v138
  %1444 = vmatpush1.msra.mxu0 %v137
  %1445 = vmatprep.subr.mxu0 %v411
  %1446 = vmatpush1.msra.mxu0 %v408
  %1447 = vmatprep.subr.mxu0 0.0
  %1448 = vmatpush1.msra.mxu0 0.0
  %1449 = vmatprep.subr.mxu0 0.0
  %1450 = vmatpush1.msra.mxu0 0.0
  %1451 = vmatprep.subr.mxu0 0.0
  %1452 = vmatpush1.msra.mxu0 0.0
  %1453 = vmatprep.subr.mxu0 0.0
  %1454 = vmatpush1.msra.mxu0 0.0
  %1455 = vmatprep.subr.mxu0 0.0
  %1456 = vmatpush1.msra.mxu0 0.0
  %1457 = vmatprep.subr.mxu0 0.0
  %1458 = vmatpush1.msra.mxu0 0.0
  %1459 = vmatprep.subr.mxu0 0.0
  %1460 = vmatpush1.msra.mxu0 0.0
  %1461 = vmatprep.subr.mxu0 0.0
  %1462 = vmatpush1.msra.mxu0 0.0
  %1463 = vmatprep.subr.mxu0 0.0
  %1464 = vmatpush1.msra.mxu0 0.0
  %1465 = vmatprep.subr.mxu0 0.0
  %1466 = vmatpush1.msra.mxu0 0.0
  %1467 = vmatprep.subr.mxu0 0.0
  %1468 = vmatpush1.msra.mxu0 0.0
  %1469 = vmatprep.subr.mxu0 0.0
  %1470 = vmatpush1.msra.mxu0 0.0
  %1471 = vmatprep.subr.mxu0 0.0
  %1472 = vmatpush1.msra.mxu0 0.0
  %1473 = vmatprep.subr.mxu0 0.0
  %1474 = vmatpush1.msra.mxu0 0.0
  %1475 = vmatprep.subr.mxu0 0.0
  %1476 = vmatpush1.msra.mxu0 0.0
  %1477 = vmatprep.subr.mxu0 0.0
  %1478 = vmatpush1.msra.mxu0 0.0
  %1479 = vmatprep.subr.mxu0 0.0
  %1480 = vmatpush1.msra.mxu0 0.0
  %1481 = vmatprep.subr.mxu0 0.0
  %1482 = vmatpush1.msra.mxu0 0.0
  %1483 = vmatprep.subr.mxu0 0.0
  %1484 = vmatpush1.msra.mxu0 0.0
  %1485 = vmatprep.subr.mxu0 0.0
  %1486 = vmatpush1.msra.mxu0 0.0
  %1487 = vmatprep.subr.mxu0 0.0
  %1488 = vmatpush1.msra.mxu0 0.0
  %1489 = vmatprep.subr.mxu0 0.0
  %1490 = vmatpush1.msra.mxu0 0.0
  %1491 = vmatprep.subr.mxu0 0.0
  %1492 = vmatpush1.msra.mxu0 0.0
  %1493 = vmatprep.subr.mxu0 0.0
  %1494 = vmatpush1.msra.mxu0 0.0
  %1495 = vmatprep.subr.mxu0 0.0
  %1496 = vmatpush1.msra.mxu0 0.0
  %1497 = vmatprep.subr.mxu0 0.0
  %1498 = vmatpush1.msra.mxu0 0.0
  %1499 = vmatprep.subr.mxu0 0.0
  %1500 = vmatpush1.msra.mxu0 0.0
  %1501 = vmatprep.subr.mxu0 0.0
  %1502 = vmatpush1.msra.mxu0 0.0
  %1503 = vmatprep.mubr.f32.mxu0 0.0
  %1504 = vmatmul.mubr.f32.gmra.mrb[0].mxu0 %v152
  %v1505 = vpop.f32.mrb[0].mxu0
  %v1506 = vadd.f32 %v1353, %v1505
  %v1507 = vpop.f32.mrb[0].mxu0
  %v1508 = vadd.f32 %v1355, %v1507
  %1509 = vmatprep.mubr.f32.mxu0 0.0
  %1510 = vmatmul.mubr.f32.gmra.mrb[0].mxu0 %v155
  %v1511 = vpop.f32.mrb[0].mxu0
  %v1512 = vadd.f32 %v1359, %v1511
  %v1513 = vpop.f32.mrb[0].mxu0
  %v1514 = vadd.f32 %v1361, %v1513
  %1515 = vmatprep.mubr.f32.mxu0 0.0
  %1516 = vmatmul.mubr.f32.gmra.mrb[0].mxu0 %v158
  %v1517 = vpop.f32.mrb[0].mxu0
  %v1518 = vadd.f32 %v1365, %v1517
  %v1519 = vpop.f32.mrb[0].mxu0
  %v1520 = vadd.f32 %v1367, %v1519
  %1521 = vmatprep.mubr.f32.mxu0 0.0
  %1522 = vmatmul.mubr.f32.gmra.mrb[0].mxu0 %v161
  %v1523 = vpop.f32.mrb[0].mxu0
  %v1524 = vadd.f32 %v1371, %v1523
  %v1525 = vpop.f32.mrb[0].mxu0
  %v1526 = vadd.f32 %v1373, %v1525
  %1527 = vmatprep.mubr.f32.mxu0 0.0
  %1528 = vmatmul.mubr.f32.gmra.mrb[0].mxu0 %v164
  %v1529 = vpop.f32.mrb[0].mxu0
  %v1530 = vadd.f32 %v1377, %v1529
  %v1531 = vpop.f32.mrb[0].mxu0
  %v1532 = vadd.f32 %v1379, %v1531
  %1533 = vmatprep.mubr.f32.mxu0 0.0
  %1534 = vmatmul.mubr.f32.gmra.mrb[0].mxu0 %v167
  %v1535 = vpop.f32.mrb[0].mxu0
  %v1536 = vadd.f32 %v1383, %v1535
  %v1537 = vpop.f32.mrb[0].mxu0
  %v1538 = vadd.f32 %v1385, %v1537
  %1539 = vmatprep.mubr.f32.mxu0 0.0
  %1540 = vmatmul.mubr.f32.gmra.mrb[0].mxu0 %v170
  %v1541 = vpop.f32.mrb[0].mxu0
  %v1542 = vadd.f32 %v1389, %v1541
  %v1543 = vpop.f32.mrb[0].mxu0
  %v1544 = vadd.f32 %v1391, %v1543
  %1545 = vmatprep.mubr.f32.mxu0 0.0
  %1546 = vmatmul.mubr.f32.gmra.mrb[0].mxu0 %v173
  %v1547 = vpop.f32.mrb[0].mxu0
  %v1548 = vadd.f32 %v1395, %v1547
  %v1549 = vpop.f32.mrb[0].mxu0
  %v1550 = vadd.f32 %v1397, %v1549
  %1551 = vmatprep.mubr.f32.mxu0 0.0
  %1552 = vmatmul.mubr.f32.gmra.mrb[0].mxu0 %v176
  %v1553 = vpop.f32.mrb[0].mxu0
  %v1554 = vadd.f32 %v1401, %v1553
  %v1555 = vpop.f32.mrb[0].mxu0
  %v1556 = vadd.f32 %v1403, %v1555
  %1557 = vmatprep.mubr.f32.mxu0 0.0
  %1558 = vmatmul.mubr.f32.gmra.mrb[0].mxu0 %v179
  %v1559 = vpop.f32.mrb[0].mxu0
  %v1560 = vadd.f32 %v1407, %v1559
  %v1561 = vpop.f32.mrb[0].mxu0
  %v1562 = vadd.f32 %v1409, %v1561
  %1563 = vmatprep.mubr.f32.mxu0 0.0
  %1564 = vmatmul.mubr.f32.gmra.mrb[0].mxu0 %v182
  %v1565 = vpop.f32.mrb[0].mxu0
  %v1566 = vadd.f32 %v1413, %v1565
  %v1567 = vpop.f32.mrb[0].mxu0
  %v1568 = vadd.f32 %v1415, %v1567
  %1569 = vmatprep.mubr.f32.mxu0 0.0
  %1570 = vmatmul.mubr.f32.gmra.mrb[0].mxu0 %v185
  %v1571 = vpop.f32.mrb[0].mxu0
  %v1572 = vadd.f32 %v1419, %v1571
  %v1573 = vpop.f32.mrb[0].mxu0
  %v1574 = vadd.f32 %v1421, %v1573
  %1575 = vmatprep.mubr.f32.mxu0 0.0
  %1576 = vmatmul.mubr.f32.gmra.mrb[0].mxu0 %v188
  %v1577 = vpop.f32.mrb[0].mxu0
  %v1578 = vpop.f32.mrb[0].mxu0
  %1579 = vmatprep.mubr.f32.mxu0 0.0
  %1580 = vmatmul.mubr.f32.gmra.mrb[0].mxu0 %v191
  %v1581 = vpop.f32.mrb[0].mxu0
  %v1582 = vpop.f32.mrb[0].mxu0
  %1583 = vmatprep.mubr.f32.mxu0 0.0
  %1584 = vmatmul.mubr.f32.gmra.mrb[0].mxu0 %v194
  %v1585 = vpop.f32.mrb[0].mxu0
  %v1586 = vpop.f32.mrb[0].mxu0
  %1587 = vmatprep.mubr.f32.mxu0 0.0
  %1588 = vmatmul.mubr.f32.gmra.mrb[0].mxu0 %v197
  %v1589 = vpop.f32.mrb[0].mxu0
  %v1590 = vpop.f32.mrb[0].mxu0
  %1591 = vdwg.mxu0
  %1592 = vmatprep.subr.mxu0 %v568
  %1593 = vmatpush1.msra.mxu0 %v567
  %1594 = vmatprep.subr.mxu0 %v570
  %1595 = vmatpush1.msra.mxu0 %v569
  %1596 = vmatprep.subr.mxu0 %v572
  %1597 = vmatpush1.msra.mxu0 %v571
  %1598 = vmatprep.subr.mxu0 %v627
  %1599 = vmatpush1.msra.mxu0 %v624
  %1600 = vmatprep.subr.mxu0 0.0
  %1601 = vmatpush1.msra.mxu0 0.0
  %1602 = vmatprep.subr.mxu0 0.0
  %1603 = vmatpush1.msra.mxu0 0.0
  %1604 = vmatprep.subr.mxu0 0.0
  %1605 = vmatpush1.msra.mxu0 0.0
  %1606 = vmatprep.subr.mxu0 0.0
  %1607 = vmatpush1.msra.mxu0 0.0
  %1608 = vmatprep.subr.mxu0 0.0
  %1609 = vmatpush1.msra.mxu0 0.0
  %1610 = vmatprep.subr.mxu0 0.0
  %1611 = vmatpush1.msra.mxu0 0.0
  %1612 = vmatprep.subr.mxu0 0.0
  %1613 = vmatpush1.msra.mxu0 0.0
  %1614 = vmatprep.subr.mxu0 0.0
  %1615 = vmatpush1.msra.mxu0 0.0
  %1616 = vmatprep.subr.mxu0 0.0
  %1617 = vmatpush1.msra.mxu0 0.0
  %1618 = vmatprep.subr.mxu0 0.0
  %1619 = vmatpush1.msra.mxu0 0.0
  %1620 = vmatprep.subr.mxu0 0.0
  %1621 = vmatpush1.msra.mxu0 0.0
  %1622 = vmatprep.subr.mxu0 0.0
  %1623 = vmatpush1.msra.mxu0 0.0
  %1624 = vmatprep.subr.mxu0 0.0
  %1625 = vmatpush1.msra.mxu0 0.0
  %1626 = vmatprep.subr.mxu0 0.0
  %1627 = vmatpush1.msra.mxu0 0.0
  %1628 = vmatprep.subr.mxu0 0.0
  %1629 = vmatpush1.msra.mxu0 0.0
  %1630 = vmatprep.subr.mxu0 0.0
  %1631 = vmatpush1.msra.mxu0 0.0
  %1632 = vmatprep.subr.mxu0 0.0
  %1633 = vmatpush1.msra.mxu0 0.0
  %1634 = vmatprep.subr.mxu0 0.0
  %1635 = vmatpush1.msra.mxu0 0.0
  %1636 = vmatprep.subr.mxu0 0.0
  %1637 = vmatpush1.msra.mxu0 0.0
  %1638 = vmatprep.subr.mxu0 0.0
  %1639 = vmatpush1.msra.mxu0 0.0
  %1640 = vmatprep.subr.mxu0 0.0
  %1641 = vmatpush1.msra.mxu0 0.0
  %1642 = vmatprep.subr.mxu0 0.0
  %1643 = vmatpush1.msra.mxu0 0.0
  %1644 = vmatprep.subr.mxu0 0.0
  %1645 = vmatpush1.msra.mxu0 0.0
  %1646 = vmatprep.subr.mxu0 0.0
  %1647 = vmatpush1.msra.mxu0 0.0
  %1648 = vmatprep.subr.mxu0 0.0
  %1649 = vmatpush1.msra.mxu0 0.0
  %1650 = vmatprep.subr.mxu0 0.0
  %1651 = vmatpush1.msra.mxu0 0.0
  %1652 = vmatprep.subr.mxu0 0.0
  %1653 = vmatpush1.msra.mxu0 0.0
  %1654 = vmatprep.subr.mxu0 0.0
  %1655 = vmatpush1.msra.mxu0 0.0
  %1656 = vmatprep.mubr.f32.mxu0 0.0
  %1657 = vmatmul.mubr.f32.gmra.mrb[0].mxu0 %v816
  %v1658 = vpop.f32.mrb[0].mxu0
  %v1659 = vadd.f32 0.0, %v1658
  %v1660 = vpop.f32.mrb[0].mxu0
  %v1661 = vadd.f32 0.0, %v1660
  %1662 = vmatprep.mubr.f32.mxu0 0.0
  %1663 = vmatmul.mubr.f32.gmra.mrb[0].mxu0 %v819
  %v1664 = vpop.f32.mrb[0].mxu0
  %v1665 = vadd.f32 0.0, %v1664
  %v1666 = vpop.f32.mrb[0].mxu0
  %v1667 = vadd.f32 0.0, %v1666
  %1668 = vmatprep.mubr.f32.mxu0 0.0
  %1669 = vmatmul.mubr.f32.gmra.mrb[0].mxu0 %v822
  %v1670 = vpop.f32.mrb[0].mxu0
  %v1671 = vadd.f32 0.0, %v1670
  %v1672 = vpop.f32.mrb[0].mxu0
  %v1673 = vadd.f32 0.0, %v1672
  %1674 = vmatprep.mubr.f32.mxu0 0.0
  %1675 = vmatmul.mubr.f32.gmra.mrb[0].mxu0 %v825
  %v1676 = vpop.f32.mrb[0].mxu0
  %v1677 = vadd.f32 0.0, %v1676
  %v1678 = vpop.f32.mrb[0].mxu0
  %v1679 = vadd.f32 0.0, %v1678
  %1680 = vmatprep.mubr.f32.mxu0 0.0
  %1681 = vmatmul.mubr.f32.gmra.mrb[0].mxu0 %v828
  %v1682 = vpop.f32.mrb[0].mxu0
  %v1683 = vadd.f32 0.0, %v1682
  %v1684 = vpop.f32.mrb[0].mxu0
  %v1685 = vadd.f32 0.0, %v1684
  %1686 = vmatprep.mubr.f32.mxu0 0.0
  %1687 = vmatmul.mubr.f32.gmra.mrb[0].mxu0 %v831
  %v1688 = vpop.f32.mrb[0].mxu0
  %v1689 = vadd.f32 0.0, %v1688
  %v1690 = vpop.f32.mrb[0].mxu0
  %v1691 = vadd.f32 0.0, %v1690
  %1692 = vmatprep.mubr.f32.mxu0 0.0
  %1693 = vmatmul.mubr.f32.gmra.mrb[0].mxu0 %v834
  %v1694 = vpop.f32.mrb[0].mxu0
  %v1695 = vadd.f32 0.0, %v1694
  %v1696 = vpop.f32.mrb[0].mxu0
  %v1697 = vadd.f32 0.0, %v1696
  %1698 = vmatprep.mubr.f32.mxu0 0.0
  %1699 = vmatmul.mubr.f32.gmra.mrb[0].mxu0 %v837
  %v1700 = vpop.f32.mrb[0].mxu0
  %v1701 = vadd.f32 0.0, %v1700
  %v1702 = vpop.f32.mrb[0].mxu0
  %v1703 = vadd.f32 0.0, %v1702
  %1704 = vmatprep.mubr.f32.mxu0 0.0
  %1705 = vmatmul.mubr.f32.gmra.mrb[0].mxu0 %v840
  %v1706 = vpop.f32.mrb[0].mxu0
  %v1707 = vadd.f32 0.0, %v1706
  %v1708 = vpop.f32.mrb[0].mxu0
  %v1709 = vadd.f32 0.0, %v1708
  %1710 = vmatprep.mubr.f32.mxu0 0.0
  %1711 = vmatmul.mubr.f32.gmra.mrb[0].mxu0 %v843
  %v1712 = vpop.f32.mrb[0].mxu0
  %v1713 = vadd.f32 0.0, %v1712
  %v1714 = vpop.f32.mrb[0].mxu0
  %v1715 = vadd.f32 0.0, %v1714
  %1716 = vmatprep.mubr.f32.mxu0 0.0
  %1717 = vmatmul.mubr.f32.gmra.mrb[0].mxu0 %v846
  %v1718 = vpop.f32.mrb[0].mxu0
  %v1719 = vadd.f32 0.0, %v1718
  %v1720 = vpop.f32.mrb[0].mxu0
  %v1721 = vadd.f32 0.0, %v1720
  %1722 = vmatprep.mubr.f32.mxu0 0.0
  %1723 = vmatmul.mubr.f32.gmra.mrb[0].mxu0 %v849
  %v1724 = vpop.f32.mrb[0].mxu0
  %v1725 = vadd.f32 0.0, %v1724
  %v1726 = vpop.f32.mrb[0].mxu0
  %v1727 = vadd.f32 0.0, %v1726
  %1728 = vmatprep.mubr.f32.mxu0 0.0
  %1729 = vmatmul.mubr.f32.gmra.mrb[0].mxu0 %v852
  %v1730 = vpop.f32.mrb[0].mxu0
  %v1731 = vpop.f32.mrb[0].mxu0
  %1732 = vmatprep.mubr.f32.mxu0 0.0
  %1733 = vmatmul.mubr.f32.gmra.mrb[0].mxu0 %v855
  %v1734 = vpop.f32.mrb[0].mxu0
  %v1735 = vpop.f32.mrb[0].mxu0
  %1736 = vmatprep.mubr.f32.mxu0 0.0
  %1737 = vmatmul.mubr.f32.gmra.mrb[0].mxu0 %v858
  %v1738 = vpop.f32.mrb[0].mxu0
  %v1739 = vpop.f32.mrb[0].mxu0
  %1740 = vmatprep.mubr.f32.mxu0 0.0
  %1741 = vmatmul.mubr.f32.gmra.mrb[0].mxu0 %v861
  %v1742 = vpop.f32.mrb[0].mxu0
  %v1743 = vpop.f32.mrb[0].mxu0
  %1744 = vdwg.mxu0
  %v1745 = vadd.f32 %v1506, %v1659
  %v1746 = vadd.f32 %v1508, %v1661
  %v1747 = vadd.f32 %v1512, %v1665
  %v1748 = vadd.f32 %v1514, %v1667
  %v1749 = vadd.f32 %v1518, %v1671
  %v1750 = vadd.f32 %v1520, %v1673
  %v1751 = vadd.f32 %v1524, %v1677
  %v1752 = vadd.f32 %v1526, %v1679
  %v1753 = vadd.f32 %v1530, %v1683
  %v1754 = vadd.f32 %v1532, %v1685
  %v1755 = vadd.f32 %v1536, %v1689
  %v1756 = vadd.f32 %v1538, %v1691
  %v1757 = vadd.f32 %v1542, %v1695
  %v1758 = vadd.f32 %v1544, %v1697
  %v1759 = vadd.f32 %v1548, %v1701
  %v1760 = vadd.f32 %v1550, %v1703
  %v1761 = vadd.f32 %v1554, %v1707
  %v1762 = vadd.f32 %v1556, %v1709
  %v1763 = vadd.f32 %v1560, %v1713
  %v1764 = vadd.f32 %v1562, %v1715
  %v1765 = vadd.f32 %v1566, %v1719
  %v1766 = vadd.f32 %v1568, %v1721
  %v1767 = vadd.f32 %v1572, %v1725
  %v1768 = vadd.f32 %v1574, %v1727
  %1769 = vmatprep.subr.mxu0 %v808
  %1770 = vmatpush1.msra.mxu0 %v807
  %1771 = vmatprep.subr.mxu0 %v810
  %1772 = vmatpush1.msra.mxu0 %v809
  %1773 = vmatprep.subr.mxu0 %v812
  %1774 = vmatpush1.msra.mxu0 %v811
  %1775 = vmatprep.subr.mxu0 %v867
  %1776 = vmatpush1.msra.mxu0 %v864
  %1777 = vmatprep.subr.mxu0 0.0
  %1778 = vmatpush1.msra.mxu0 0.0
  %1779 = vmatprep.subr.mxu0 0.0
  %1780 = vmatpush1.msra.mxu0 0.0
  %1781 = vmatprep.subr.mxu0 0.0
  %1782 = vmatpush1.msra.mxu0 0.0
  %1783 = vmatprep.subr.mxu0 0.0
  %1784 = vmatpush1.msra.mxu0 0.0
  %1785 = vmatprep.subr.mxu0 0.0
  %1786 = vmatpush1.msra.mxu0 0.0
  %1787 = vmatprep.subr.mxu0 0.0
  %1788 = vmatpush1.msra.mxu0 0.0
  %1789 = vmatprep.subr.mxu0 0.0
  %1790 = vmatpush1.msra.mxu0 0.0
  %1791 = vmatprep.subr.mxu0 0.0
  %1792 = vmatpush1.msra.mxu0 0.0
  %1793 = vmatprep.subr.mxu0 0.0
  %1794 = vmatpush1.msra.mxu0 0.0
  %1795 = vmatprep.subr.mxu0 0.0
  %1796 = vmatpush1.msra.mxu0 0.0
  %1797 = vmatprep.subr.mxu0 0.0
  %1798 = vmatpush1.msra.mxu0 0.0
  %1799 = vmatprep.subr.mxu0 0.0
  %1800 = vmatpush1.msra.mxu0 0.0
  %1801 = vmatprep.subr.mxu0 0.0
  %1802 = vmatpush1.msra.mxu0 0.0
  %1803 = vmatprep.subr.mxu0 0.0
  %1804 = vmatpush1.msra.mxu0 0.0
  %1805 = vmatprep.subr.mxu0 0.0
  %1806 = vmatpush1.msra.mxu0 0.0
  %1807 = vmatprep.subr.mxu0 0.0
  %1808 = vmatpush1.msra.mxu0 0.0
  %1809 = vmatprep.subr.mxu0 0.0
  %1810 = vmatpush1.msra.mxu0 0.0
  %1811 = vmatprep.subr.mxu0 0.0
  %1812 = vmatpush1.msra.mxu0 0.0
  %1813 = vmatprep.subr.mxu0 0.0
  %1814 = vmatpush1.msra.mxu0 0.0
  %1815 = vmatprep.subr.mxu0 0.0
  %1816 = vmatpush1.msra.mxu0 0.0
  %1817 = vmatprep.subr.mxu0 0.0
  %1818 = vmatpush1.msra.mxu0 0.0
  %1819 = vmatprep.subr.mxu0 0.0
  %1820 = vmatpush1.msra.mxu0 0.0
  %1821 = vmatprep.subr.mxu0 0.0
  %1822 = vmatpush1.msra.mxu0 0.0
  %1823 = vmatprep.subr.mxu0 0.0
  %1824 = vmatpush1.msra.mxu0 0.0
  %1825 = vmatprep.subr.mxu0 0.0
  %1826 = vmatpush1.msra.mxu0 0.0
  %1827 = vmatprep.subr.mxu0 0.0
  %1828 = vmatpush1.msra.mxu0 0.0
  %1829 = vmatprep.subr.mxu0 0.0
  %1830 = vmatpush1.msra.mxu0 0.0
  %1831 = vmatprep.subr.mxu0 0.0
  %1832 = vmatpush1.msra.mxu0 0.0
  %1833 = vmatprep.mubr.f32.mxu0 0.0
  %1834 = vmatmul.mubr.f32.gmra.mrb[0].mxu0 %v1056
  %v1835 = vpop.f32.mrb[0].mxu0
  %v1836 = vadd.f32 0.0, %v1835
  %v1837 = vpop.f32.mrb[0].mxu0
  %v1838 = vadd.f32 0.0, %v1837
  %1839 = vmatprep.mubr.f32.mxu0 0.0
  %1840 = vmatmul.mubr.f32.gmra.mrb[0].mxu0 %v1059
  %v1841 = vpop.f32.mrb[0].mxu0
  %v1842 = vadd.f32 0.0, %v1841
  %v1843 = vpop.f32.mrb[0].mxu0
  %v1844 = vadd.f32 0.0, %v1843
  %1845 = vmatprep.mubr.f32.mxu0 0.0
  %1846 = vmatmul.mubr.f32.gmra.mrb[0].mxu0 %v1062
  %v1847 = vpop.f32.mrb[0].mxu0
  %v1848 = vadd.f32 0.0, %v1847
  %v1849 = vpop.f32.mrb[0].mxu0
  %v1850 = vadd.f32 0.0, %v1849
  %1851 = vmatprep.mubr.f32.mxu0 0.0
  %1852 = vmatmul.mubr.f32.gmra.mrb[0].mxu0 %v1065
  %v1853 = vpop.f32.mrb[0].mxu0
  %v1854 = vadd.f32 0.0, %v1853
  %v1855 = vpop.f32.mrb[0].mxu0
  %v1856 = vadd.f32 0.0, %v1855
  %1857 = vmatprep.mubr.f32.mxu0 0.0
  %1858 = vmatmul.mubr.f32.gmra.mrb[0].mxu0 %v1068
  %v1859 = vpop.f32.mrb[0].mxu0
  %v1860 = vadd.f32 0.0, %v1859
  %v1861 = vpop.f32.mrb[0].mxu0
  %v1862 = vadd.f32 0.0, %v1861
  %1863 = vmatprep.mubr.f32.mxu0 0.0
  %1864 = vmatmul.mubr.f32.gmra.mrb[0].mxu0 %v1071
  %v1865 = vpop.f32.mrb[0].mxu0
  %v1866 = vadd.f32 0.0, %v1865
  %v1867 = vpop.f32.mrb[0].mxu0
  %v1868 = vadd.f32 0.0, %v1867
  %1869 = vmatprep.mubr.f32.mxu0 0.0
  %1870 = vmatmul.mubr.f32.gmra.mrb[0].mxu0 %v1074
  %v1871 = vpop.f32.mrb[0].mxu0
  %v1872 = vadd.f32 0.0, %v1871
  %v1873 = vpop.f32.mrb[0].mxu0
  %v1874 = vadd.f32 0.0, %v1873
  %1875 = vmatprep.mubr.f32.mxu0 0.0
  %1876 = vmatmul.mubr.f32.gmra.mrb[0].mxu0 %v1077
  %v1877 = vpop.f32.mrb[0].mxu0
  %v1878 = vadd.f32 0.0, %v1877
  %v1879 = vpop.f32.mrb[0].mxu0
  %v1880 = vadd.f32 0.0, %v1879
  %1881 = vmatprep.mubr.f32.mxu0 0.0
  %1882 = vmatmul.mubr.f32.gmra.mrb[0].mxu0 %v1080
  %v1883 = vpop.f32.mrb[0].mxu0
  %v1884 = vadd.f32 0.0, %v1883
  %v1885 = vpop.f32.mrb[0].mxu0
  %v1886 = vadd.f32 0.0, %v1885
  %1887 = vmatprep.mubr.f32.mxu0 0.0
  %1888 = vmatmul.mubr.f32.gmra.mrb[0].mxu0 %v1083
  %v1889 = vpop.f32.mrb[0].mxu0
  %v1890 = vadd.f32 0.0, %v1889
  %v1891 = vpop.f32.mrb[0].mxu0
  %v1892 = vadd.f32 0.0, %v1891
  %1893 = vmatprep.mubr.f32.mxu0 0.0
  %1894 = vmatmul.mubr.f32.gmra.mrb[0].mxu0 %v1086
  %v1895 = vpop.f32.mrb[0].mxu0
  %v1896 = vadd.f32 0.0, %v1895
  %v1897 = vpop.f32.mrb[0].mxu0
  %v1898 = vadd.f32 0.0, %v1897
  %1899 = vmatprep.mubr.f32.mxu0 0.0
  %1900 = vmatmul.mubr.f32.gmra.mrb[0].mxu0 %v1089
  %v1901 = vpop.f32.mrb[0].mxu0
  %v1902 = vadd.f32 0.0, %v1901
  %v1903 = vpop.f32.mrb[0].mxu0
  %v1904 = vadd.f32 0.0, %v1903
  %1905 = vmatprep.mubr.f32.mxu0 0.0
  %1906 = vmatmul.mubr.f32.gmra.mrb[0].mxu0 %v1092
  %v1907 = vpop.f32.mrb[0].mxu0
  %v1908 = vpop.f32.mrb[0].mxu0
  %1909 = vmatprep.mubr.f32.mxu0 0.0
  %1910 = vmatmul.mubr.f32.gmra.mrb[0].mxu0 %v1095
  %v1911 = vpop.f32.mrb[0].mxu0
  %v1912 = vpop.f32.mrb[0].mxu0
  %1913 = vmatprep.mubr.f32.mxu0 0.0
  %1914 = vmatmul.mubr.f32.gmra.mrb[0].mxu0 %v1098
  %v1915 = vpop.f32.mrb[0].mxu0
  %v1916 = vpop.f32.mrb[0].mxu0
  %1917 = vmatprep.mubr.f32.mxu0 0.0
  %1918 = vmatmul.mubr.f32.gmra.mrb[0].mxu0 %v1101
  %v1919 = vpop.f32.mrb[0].mxu0
  %v1920 = vpop.f32.mrb[0].mxu0
  %1921 = vdwg.mxu0
  %v1922 = vadd.f32 %v1745, %v1836
  %v1923 = vadd.f32 %v1746, %v1838
  %v1924 = vadd.f32 %v1747, %v1842
  %v1925 = vadd.f32 %v1748, %v1844
  %v1926 = vadd.f32 %v1749, %v1848
  %v1927 = vadd.f32 %v1750, %v1850
  %v1928 = vadd.f32 %v1751, %v1854
  %v1929 = vadd.f32 %v1752, %v1856
  %v1930 = vadd.f32 %v1753, %v1860
  %v1931 = vadd.f32 %v1754, %v1862
  %v1932 = vadd.f32 %v1755, %v1866
  %v1933 = vadd.f32 %v1756, %v1868
  %v1934 = vadd.f32 %v1757, %v1872
  %v1935 = vadd.f32 %v1758, %v1874
  %v1936 = vadd.f32 %v1759, %v1878
  %v1937 = vadd.f32 %v1760, %v1880
  %v1938 = vadd.f32 %v1761, %v1884
  %v1939 = vadd.f32 %v1762, %v1886
  %v1940 = vadd.f32 %v1763, %v1890
  %v1941 = vadd.f32 %v1764, %v1892
  %v1942 = vadd.f32 %v1765, %v1896
  %v1943 = vadd.f32 %v1766, %v1898
  %v1944 = vadd.f32 %v1767, %v1902
  %v1945 = vadd.f32 %v1768, %v1904
  %v1947 = vsel %vm150, %v117, 0
  %v1950 = vsel %vm150, %v118, 0
  %v1953 = vsel %vm150, %v119, 0
  %v1956 = vsel %vm150, %v120, 0
  %v1959 = vsel %vm150, %v121, 0
  %v1962 = vsel %vm150, %v122, 0
  %v1965 = vsel %vm150, %v123, 0
  %v1968 = vsel %vm150, %v124, 0
  %v1971 = vsel %vm150, %v125, 0
  %v1974 = vsel %vm150, %v126, 0
  %v1977 = vsel %vm150, %v127, 0
  %v1980 = vsel %vm150, %v128, 0
  %v1983 = vsel %vm150, %v129, 0
  %v1986 = vsel %vm150, %v130, 0
  %v1989 = vsel %vm150, %v131, 0
  %v1992 = vsel %vm150, %v132, 0
  %1994 = vmatprep.subr.mxu0 %v1048
  %1995 = vmatpush1.msra.mxu0 %v1047
  %1996 = vmatprep.subr.mxu0 %v1050
  %1997 = vmatpush1.msra.mxu0 %v1049
  %1998 = vmatprep.subr.mxu0 %v1052
  %1999 = vmatpush1.msra.mxu0 %v1051
  %2000 = vmatprep.subr.mxu0 %v1107
  %2001 = vmatpush1.msra.mxu0 %v1104
  %2002 = vmatprep.subr.mxu0 0.0
  %2003 = vmatpush1.msra.mxu0 0.0
  %2004 = vmatprep.subr.mxu0 0.0
  %2005 = vmatpush1.msra.mxu0 0.0
  %2006 = vmatprep.subr.mxu0 0.0
  %2007 = vmatpush1.msra.mxu0 0.0
  %2008 = vmatprep.subr.mxu0 0.0
  %2009 = vmatpush1.msra.mxu0 0.0
  %2010 = vmatprep.subr.mxu0 0.0
  %2011 = vmatpush1.msra.mxu0 0.0
  %2012 = vmatprep.subr.mxu0 0.0
  %2013 = vmatpush1.msra.mxu0 0.0
  %2014 = vmatprep.subr.mxu0 0.0
  %2015 = vmatpush1.msra.mxu0 0.0
  %2016 = vmatprep.subr.mxu0 0.0
  %2017 = vmatpush1.msra.mxu0 0.0
  %2018 = vmatprep.subr.mxu0 0.0
  %2019 = vmatpush1.msra.mxu0 0.0
  %2020 = vmatprep.subr.mxu0 0.0
  %2021 = vmatpush1.msra.mxu0 0.0
  %2022 = vmatprep.subr.mxu0 0.0
  %2023 = vmatpush1.msra.mxu0 0.0
  %2024 = vmatprep.subr.mxu0 0.0
  %2025 = vmatpush1.msra.mxu0 0.0
  %2026 = vmatprep.subr.mxu0 0.0
  %2027 = vmatpush1.msra.mxu0 0.0
  %2028 = vmatprep.subr.mxu0 0.0
  %2029 = vmatpush1.msra.mxu0 0.0
  %2030 = vmatprep.subr.mxu0 0.0
  %2031 = vmatpush1.msra.mxu0 0.0
  %2032 = vmatprep.subr.mxu0 0.0
  %2033 = vmatpush1.msra.mxu0 0.0
  %2034 = vmatprep.subr.mxu0 0.0
  %2035 = vmatpush1.msra.mxu0 0.0
  %2036 = vmatprep.subr.mxu0 0.0
  %2037 = vmatpush1.msra.mxu0 0.0
  %2038 = vmatprep.subr.mxu0 0.0
  %2039 = vmatpush1.msra.mxu0 0.0
  %2040 = vmatprep.subr.mxu0 0.0
  %2041 = vmatpush1.msra.mxu0 0.0
  %2042 = vmatprep.subr.mxu0 0.0
  %2043 = vmatpush1.msra.mxu0 0.0
  %2044 = vmatprep.subr.mxu0 0.0
  %2045 = vmatpush1.msra.mxu0 0.0
  %2046 = vmatprep.subr.mxu0 0.0
  %2047 = vmatpush1.msra.mxu0 0.0
  %2048 = vmatprep.subr.mxu0 0.0
  %2049 = vmatpush1.msra.mxu0 0.0
  %2050 = vmatprep.subr.mxu0 0.0
  %2051 = vmatpush1.msra.mxu0 0.0
  %2052 = vmatprep.subr.mxu0 0.0
  %2053 = vmatpush1.msra.mxu0 0.0
  %2054 = vmatprep.subr.mxu0 0.0
  %2055 = vmatpush1.msra.mxu0 0.0
  %2056 = vmatprep.subr.mxu0 0.0
  %2057 = vmatpush1.msra.mxu0 0.0
  %2058 = vmatprep.mubr.f32.mxu0 0.0
  %2059 = vmatmul.mubr.f32.gmra.mrb[0].mxu0 %v1947
  %v2060 = vpop.f32.mrb[0].mxu0
  %v2061 = vadd.f32 0.0, %v2060
  %v2062 = vpop.f32.mrb[0].mxu0
  %v2063 = vadd.f32 0.0, %v2062
  %2064 = vmatprep.mubr.f32.mxu0 0.0
  %2065 = vmatmul.mubr.f32.gmra.mrb[0].mxu0 %v1950
  %v2066 = vpop.f32.mrb[0].mxu0
  %v2067 = vadd.f32 0.0, %v2066
  %v2068 = vpop.f32.mrb[0].mxu0
  %v2069 = vadd.f32 0.0, %v2068
  %2070 = vmatprep.mubr.f32.mxu0 0.0
  %2071 = vmatmul.mubr.f32.gmra.mrb[0].mxu0 %v1953
  %v2072 = vpop.f32.mrb[0].mxu0
  %v2073 = vadd.f32 0.0, %v2072
  %v2074 = vpop.f32.mrb[0].mxu0
  %v2075 = vadd.f32 0.0, %v2074
  %2076 = vmatprep.mubr.f32.mxu0 0.0
  %2077 = vmatmul.mubr.f32.gmra.mrb[0].mxu0 %v1956
  %v2078 = vpop.f32.mrb[0].mxu0
  %v2079 = vadd.f32 0.0, %v2078
  %v2080 = vpop.f32.mrb[0].mxu0
  %v2081 = vadd.f32 0.0, %v2080
  %2082 = vmatprep.mubr.f32.mxu0 0.0
  %2083 = vmatmul.mubr.f32.gmra.mrb[0].mxu0 %v1959
  %v2084 = vpop.f32.mrb[0].mxu0
  %v2085 = vadd.f32 0.0, %v2084
  %v2086 = vpop.f32.mrb[0].mxu0
  %v2087 = vadd.f32 0.0, %v2086
  %2088 = vmatprep.mubr.f32.mxu0 0.0
  %2089 = vmatmul.mubr.f32.gmra.mrb[0].mxu0 %v1962
  %v2090 = vpop.f32.mrb[0].mxu0
  %v2091 = vadd.f32 0.0, %v2090
  %v2092 = vpop.f32.mrb[0].mxu0
  %v2093 = vadd.f32 0.0, %v2092
  %2094 = vmatprep.mubr.f32.mxu0 0.0
  %2095 = vmatmul.mubr.f32.gmra.mrb[0].mxu0 %v1965
  %v2096 = vpop.f32.mrb[0].mxu0
  %v2097 = vadd.f32 0.0, %v2096
  %v2098 = vpop.f32.mrb[0].mxu0
  %v2099 = vadd.f32 0.0, %v2098
  %2100 = vmatprep.mubr.f32.mxu0 0.0
  %2101 = vmatmul.mubr.f32.gmra.mrb[0].mxu0 %v1968
  %v2102 = vpop.f32.mrb[0].mxu0
  %v2103 = vadd.f32 0.0, %v2102
  %v2104 = vpop.f32.mrb[0].mxu0
  %v2105 = vadd.f32 0.0, %v2104
  %2106 = vmatprep.mubr.f32.mxu0 0.0
  %2107 = vmatmul.mubr.f32.gmra.mrb[0].mxu0 %v1971
  %v2108 = vpop.f32.mrb[0].mxu0
  %v2109 = vadd.f32 0.0, %v2108
  %v2110 = vpop.f32.mrb[0].mxu0
  %v2111 = vadd.f32 0.0, %v2110
  %2112 = vmatprep.mubr.f32.mxu0 0.0
  %2113 = vmatmul.mubr.f32.gmra.mrb[0].mxu0 %v1974
  %v2114 = vpop.f32.mrb[0].mxu0
  %v2115 = vadd.f32 0.0, %v2114
  %v2116 = vpop.f32.mrb[0].mxu0
  %v2117 = vadd.f32 0.0, %v2116
  %2118 = vmatprep.mubr.f32.mxu0 0.0
  %2119 = vmatmul.mubr.f32.gmra.mrb[0].mxu0 %v1977
  %v2120 = vpop.f32.mrb[0].mxu0
  %v2121 = vadd.f32 0.0, %v2120
  %v2122 = vpop.f32.mrb[0].mxu0
  %v2123 = vadd.f32 0.0, %v2122
  %2124 = vmatprep.mubr.f32.mxu0 0.0
  %2125 = vmatmul.mubr.f32.gmra.mrb[0].mxu0 %v1980
  %v2126 = vpop.f32.mrb[0].mxu0
  %v2127 = vadd.f32 0.0, %v2126
  %v2128 = vpop.f32.mrb[0].mxu0
  %v2129 = vadd.f32 0.0, %v2128
  %2130 = vmatprep.mubr.f32.mxu0 0.0
  %2131 = vmatmul.mubr.f32.gmra.mrb[0].mxu0 %v1983
  %v2132 = vpop.f32.mrb[0].mxu0
  %v2133 = vpop.f32.mrb[0].mxu0
  %2134 = vmatprep.mubr.f32.mxu0 0.0
  %2135 = vmatmul.mubr.f32.gmra.mrb[0].mxu0 %v1986
  %v2136 = vpop.f32.mrb[0].mxu0
  %v2137 = vpop.f32.mrb[0].mxu0
  %2138 = vmatprep.mubr.f32.mxu0 0.0
  %2139 = vmatmul.mubr.f32.gmra.mrb[0].mxu0 %v1989
  %v2140 = vpop.f32.mrb[0].mxu0
  %v2141 = vpop.f32.mrb[0].mxu0
  %2142 = vmatprep.mubr.f32.mxu0 0.0
  %2143 = vmatmul.mubr.f32.gmra.mrb[0].mxu0 %v1992
  %v2144 = vpop.f32.mrb[0].mxu0
  %v2145 = vpop.f32.mrb[0].mxu0
  %2146 = vdwg.mxu0
  %v2147 = vadd.f32 %v1922, %v2061
  %v2148 = vadd.f32 %v1923, %v2063
  %v2149 = vadd.f32 %v1924, %v2067
  %v2150 = vadd.f32 %v1925, %v2069
  %v2151 = vadd.f32 %v1926, %v2073
  %v2152 = vadd.f32 %v1927, %v2075
  %v2153 = vadd.f32 %v1928, %v2079
  %v2154 = vadd.f32 %v1929, %v2081
  %v2155 = vadd.f32 %v1930, %v2085
  %v2156 = vadd.f32 %v1931, %v2087
  %v2157 = vadd.f32 %v1932, %v2091
  %v2158 = vadd.f32 %v1933, %v2093
  %v2159 = vadd.f32 %v1934, %v2097
  %v2160 = vadd.f32 %v1935, %v2099
  %v2161 = vadd.f32 %v1936, %v2103
  %v2162 = vadd.f32 %v1937, %v2105
  %v2163 = vadd.f32 %v1938, %v2109
  %v2164 = vadd.f32 %v1939, %v2111
  %v2165 = vadd.f32 %v1940, %v2115
  %v2166 = vadd.f32 %v1941, %v2117
  %v2167 = vadd.f32 %v1942, %v2121
  %v2168 = vadd.f32 %v1943, %v2123
  %v2169 = vadd.f32 %v1944, %v2127
  %v2170 = vadd.f32 %v1945, %v2129
  %v2171 = vmax.f32 %v1262, %v2147
  %v2172 = vmax.f32 %v1263, %v2148
  %v2173 = vmax.f32 %v1264, %v2149
  %v2174 = vmax.f32 %v1265, %v2150
  %v2175 = vmax.f32 %v1266, %v2151
  %v2176 = vmax.f32 %v1267, %v2152
  %v2177 = vmax.f32 %v1268, %v2153
  %v2178 = vmax.f32 %v1269, %v2154
  %v2179 = vmax.f32 %v1270, %v2155
  %v2180 = vmax.f32 %v1271, %v2156
  %v2181 = vmax.f32 %v1272, %v2157
  %v2182 = vmax.f32 %v1273, %v2158
  %v2183 = vmax.f32 %v1274, %v2159
  %v2184 = vmax.f32 %v1275, %v2160
  %v2185 = vmax.f32 %v1276, %v2161
  %v2186 = vmax.f32 %v1277, %v2162
  %v2187 = vmax.f32 %v1278, %v2163
  %v2188 = vmax.f32 %v1279, %v2164
  %v2189 = vmax.f32 %v1280, %v2165
  %v2190 = vmax.f32 %v1281, %v2166
  %v2191 = vmax.f32 %v1282, %v2167
  %v2192 = vmax.f32 %v1283, %v2168
  %v2193 = vmax.f32 %v1284, %v2169
  %v2194 = vmax.f32 %v1285, %v2170
  %2219 = vrot.lane.b32.xlu0 %v2171, 8
  %v2220 = vpop.permute.xlu0 %2219
  %2221 = vrot.lane.b32.xlu0 %v2172, 8
  %v2222 = vpop.permute.xlu0 %2221
  %2223 = vrot.lane.b32.xlu0 %v2173, 8
  %v2224 = vpop.permute.xlu0 %2223
  %2225 = vrot.lane.b32.xlu0 %v2174, 8
  %v2226 = vpop.permute.xlu0 %2225
  %2227 = vrot.lane.b32.xlu0 %v2175, 8
  %v2228 = vpop.permute.xlu0 %2227
  %2229 = vrot.lane.b32.xlu0 %v2176, 8
  %v2230 = vpop.permute.xlu0 %2229
  %2231 = vrot.lane.b32.xlu0 %v2177, 8
  %v2232 = vpop.permute.xlu0 %2231
  %2233 = vrot.lane.b32.xlu0 %v2178, 8
  %v2234 = vpop.permute.xlu0 %2233
  %2235 = vrot.lane.b32.xlu0 %v2179, 8
  %v2236 = vpop.permute.xlu0 %2235
  %2237 = vrot.lane.b32.xlu0 %v2180, 8
  %v2238 = vpop.permute.xlu0 %2237
  %2239 = vrot.lane.b32.xlu0 %v2181, 8
  %v2240 = vpop.permute.xlu0 %2239
  %2241 = vrot.lane.b32.xlu0 %v2182, 8
  %v2242 = vpop.permute.xlu0 %2241
  %2243 = vrot.lane.b32.xlu0 %v2183, 8
  %v2244 = vpop.permute.xlu0 %2243
  %2245 = vrot.lane.b32.xlu0 %v2184, 8
  %v2246 = vpop.permute.xlu0 %2245
  %2247 = vrot.lane.b32.xlu0 %v2185, 8
  %v2248 = vpop.permute.xlu0 %2247
  %2249 = vrot.lane.b32.xlu0 %v2186, 8
  %v2250 = vpop.permute.xlu0 %2249
  %2251 = vrot.lane.b32.xlu0 %v2187, 8
  %v2252 = vpop.permute.xlu0 %2251
  %2253 = vrot.lane.b32.xlu0 %v2188, 8
  %v2254 = vpop.permute.xlu0 %2253
  %2255 = vrot.lane.b32.xlu0 %v2189, 8
  %v2256 = vpop.permute.xlu0 %2255
  %2257 = vrot.lane.b32.xlu0 %v2190, 8
  %v2258 = vpop.permute.xlu0 %2257
  %2259 = vrot.lane.b32.xlu0 %v2191, 8
  %v2260 = vpop.permute.xlu0 %2259
  %2261 = vrot.lane.b32.xlu0 %v2192, 8
  %v2262 = vpop.permute.xlu0 %2261
  %2263 = vrot.lane.b32.xlu0 %v2193, 8
  %v2264 = vpop.permute.xlu0 %2263
  %2265 = vrot.lane.b32.xlu0 %v2194, 8
  %v2266 = vpop.permute.xlu0 %2265
  %vm2267 = vcmask 64512
  %v2268 = vsel %vm2267, %v2220, %v2222
  %v2269 = vsel %vm2267, %v2224, %v2226
  %v2270 = vsel %vm2267, %v2228, %v2230
  %v2271 = vsel %vm2267, %v2232, %v2234
  %v2272 = vsel %vm2267, %v2236, %v2238
  %v2273 = vsel %vm2267, %v2240, %v2242
  %v2274 = vsel %vm2267, %v2244, %v2246
  %v2275 = vsel %vm2267, %v2248, %v2250
  %v2276 = vsel %vm2267, %v2252, %v2254
  %v2277 = vsel %vm2267, %v2256, %v2258
  %v2278 = vsel %vm2267, %v2260, %v2262
  %v2279 = vsel %vm2267, %v2264, %v2266
  %v2292 = vmax.f32 %v2171, %v2268
  %v2293 = vmax.f32 %v2173, %v2269
  %v2294 = vmax.f32 %v2175, %v2270
  %v2295 = vmax.f32 %v2177, %v2271
  %v2296 = vmax.f32 %v2179, %v2272
  %v2297 = vmax.f32 %v2181, %v2273
  %v2298 = vmax.f32 %v2183, %v2274
  %v2299 = vmax.f32 %v2185, %v2275
  %v2300 = vmax.f32 %v2187, %v2276
  %v2301 = vmax.f32 %v2189, %v2277
  %v2302 = vmax.f32 %v2191, %v2278
  %v2303 = vmax.f32 %v2193, %v2279
  %v2304 = vld [vmem:[%s2] sm:$0x1]
  %v2306 = vlaneseq
  %v2307 = vshrl.u32 %v2306, 7
  %v2308 = vsub.s32 0, %v2307
  %v2309 = vrot.slane %v2304, %v2308
  %v2311 = vadd.f32 %v2292, %v2309
  %v2312 = vadd.f32 %v2293, %v2309
  %v2313 = vadd.f32 %v2294, %v2309
  %v2314 = vadd.f32 %v2295, %v2309
  %v2315 = vadd.f32 %v2296, %v2309
  %v2316 = vadd.f32 %v2297, %v2309
  %v2317 = vadd.f32 %v2298, %v2309
  %v2318 = vadd.f32 %v2299, %v2309
  %v2319 = vadd.f32 %v2300, %v2309
  %v2320 = vadd.f32 %v2301, %v2309
  %v2321 = vadd.f32 %v2302, %v2309
  %v2322 = vadd.f32 %v2303, %v2309
  %v2323 = vmax.f32 %v2311, 0.0
  %v2324 = vmax.f32 %v2312, 0.0
  %v2325 = vmax.f32 %v2313, 0.0
  %v2326 = vmax.f32 %v2314, 0.0
  %v2327 = vmax.f32 %v2315, 0.0
  %v2328 = vmax.f32 %v2316, 0.0
  %v2329 = vmax.f32 %v2317, 0.0
  %v2330 = vmax.f32 %v2318, 0.0
  %v2331 = vmax.f32 %v2319, 0.0
  %v2332 = vmax.f32 %v2320, 0.0
  %v2333 = vmax.f32 %v2321, 0.0
  %v2334 = vmax.f32 %v2322, 0.0
  %v2335 = vld [vmem:[%s3] sm:$0xff]
  %v2336 = vld [vmem:[%s3 + $0x8] sm:$0xff]
  %v2337 = vld [vmem:[%s3 + $0x10] sm:$0xff]
  %v2338 = vld [vmem:[%s3 + $0x18] sm:$0xff]
  %v2339 = vld [vmem:[%s3 + $0x20] sm:$0xff]
  %v2340 = vld [vmem:[%s3 + $0x28] sm:$0xff]
  %v2341 = vld [vmem:[%s3 + $0x30] sm:$0xff]
  %v2342 = vld [vmem:[%s3 + $0x38] sm:$0xff]
  %v2343 = vld [vmem:[%s3 + $0x40] sm:$0xff]
  %v2344 = vld [vmem:[%s3 + $0x48] sm:$0xff]
  %v2345 = vld [vmem:[%s3 + $0x50] sm:$0xff]
  %v2346 = vld [vmem:[%s3 + $0x58] sm:$0xff]
  %v2347 = vld [vmem:[%s3 + $0x60] sm:$0xff]
  %v2348 = vld [vmem:[%s3 + $0x68] sm:$0xff]
  %v2349 = vld [vmem:[%s3 + $0x70] sm:$0xff]
  %v2350 = vld [vmem:[%s3 + $0x78] sm:$0xff]
  %v2351 = vld [vmem:[%s3 + $0x80] sm:$0xff]
  %v2352 = vld [vmem:[%s3 + $0x88] sm:$0xff]
  %v2353 = vld [vmem:[%s3 + $0x90] sm:$0xff]
  %v2354 = vld [vmem:[%s3 + $0x98] sm:$0xff]
  %v2355 = vld [vmem:[%s3 + $0xa0] sm:$0xff]
  %v2356 = vld [vmem:[%s3 + $0xa8] sm:$0xff]
  %v2357 = vld [vmem:[%s3 + $0xb0] sm:$0xff]
  %v2358 = vld [vmem:[%s3 + $0xb8] sm:$0xff]
  %v2359 = vld [vmem:[%s3 + $0xc0] sm:$0xff]
  %v2360 = vld [vmem:[%s3 + $0xc8] sm:$0xff]
  %v2361 = vld [vmem:[%s3 + $0xd0] sm:$0xff]
  %v2362 = vld [vmem:[%s3 + $0xd8] sm:$0xff]
  %v2363 = vld [vmem:[%s3 + $0xe0] sm:$0xff]
  %v2364 = vld [vmem:[%s3 + $0xe8] sm:$0xff]
  %s2365 = scalar_lea.vmem %s3, 240
  %v2366 = vld [vmem:[%s2365] sm:$0xff]
  %v2367 = vld [vmem:[%s2365 + $0x8] sm:$0xff]
  %v2368 = vld [vmem:[%s2365 + $0x10] sm:$0xff]
  %v2369 = vld [vmem:[%s2365 + $0x18] sm:$0xff]
  %v2370 = vld [vmem:[%s2365 + $0x20] sm:$0xff]
  %v2371 = vld [vmem:[%s2365 + $0x28] sm:$0xff]
  %v2372 = vld [vmem:[%s2365 + $0x30] sm:$0xff]
  %v2373 = vld [vmem:[%s2365 + $0x38] sm:$0xff]
  %v2374 = vld [vmem:[%s2365 + $0x40] sm:$0xff]
  %v2375 = vld [vmem:[%s2365 + $0x48] sm:$0xff]
  %v2376 = vld [vmem:[%s2365 + $0x50] sm:$0xff]
  %v2377 = vld [vmem:[%s2365 + $0x58] sm:$0xff]
  %v2378 = vld [vmem:[%s2365 + $0x60] sm:$0xff]
  %v2379 = vld [vmem:[%s2365 + $0x68] sm:$0xff]
  %v2380 = vld [vmem:[%s2365 + $0x70] sm:$0xff]
  %v2381 = vld [vmem:[%s2365 + $0x78] sm:$0xff]
  %v2382 = vld [vmem:[%s2365 + $0x80] sm:$0xff]
  %v2383 = vld [vmem:[%s2365 + $0x88] sm:$0xff]
  %v2384 = vld [vmem:[%s2365 + $0x90] sm:$0xff]
  %v2385 = vld [vmem:[%s2365 + $0x98] sm:$0xff]
  %v2386 = vld [vmem:[%s2365 + $0xa0] sm:$0xff]
  %v2387 = vld [vmem:[%s2365 + $0xa8] sm:$0xff]
  %v2388 = vld [vmem:[%s2365 + $0xb0] sm:$0xff]
  %v2389 = vld [vmem:[%s2365 + $0xb8] sm:$0xff]
  %v2390 = vld [vmem:[%s2365 + $0xc0] sm:$0xff]
  %v2391 = vld [vmem:[%s2365 + $0xc8] sm:$0xff]
  %v2392 = vld [vmem:[%s2365 + $0xd0] sm:$0xff]
  %v2393 = vld [vmem:[%s2365 + $0xd8] sm:$0xff]
  %v2394 = vld [vmem:[%s2365 + $0xe0] sm:$0xff]
  %v2395 = vld [vmem:[%s2365 + $0xe8] sm:$0xff]
  %vm2396 = vcmask 982016
  %v2398 = vsel %vm2396, %v2324, 0
  %v2401 = vsel %vm2396, %v2326, 0
  %v2404 = vsel %vm2396, %v2328, 0
  %v2407 = vsel %vm2396, %v2330, 0
  %2409 = vmatprep.subr.mxu0 %v2367
  %2410 = vmatpush1.msra.mxu0 %v2366
  %2411 = vmatprep.subr.mxu0 %v2369
  %2412 = vmatpush1.msra.mxu0 %v2368
  %2413 = vmatprep.subr.mxu0 %v2371
  %2414 = vmatpush1.msra.mxu0 %v2370
  %2415 = vmatprep.subr.mxu0 %v2373
  %2416 = vmatpush1.msra.mxu0 %v2372
  %2417 = vmatprep.subr.mxu0 %v2375
  %2418 = vmatpush1.msra.mxu0 %v2374
  %2419 = vmatprep.subr.mxu0 %v2377
  %2420 = vmatpush1.msra.mxu0 %v2376
  %2421 = vmatprep.subr.mxu0 %v2379
  %2422 = vmatpush1.msra.mxu0 %v2378
  %2423 = vmatprep.subr.mxu0 %v2381
  %2424 = vmatpush1.msra.mxu0 %v2380
  %2425 = vmatprep.subr.mxu0 %v2383
  %2426 = vmatpush1.msra.mxu0 %v2382
  %2427 = vmatprep.subr.mxu0 %v2385
  %2428 = vmatpush1.msra.mxu0 %v2384
  %2429 = vmatprep.subr.mxu0 %v2387
  %2430 = vmatpush1.msra.mxu0 %v2386
  %2431 = vmatprep.subr.mxu0 %v2389
  %2432 = vmatpush1.msra.mxu0 %v2388
  %2433 = vmatprep.subr.mxu0 %v2391
  %2434 = vmatpush1.msra.mxu0 %v2390
  %2435 = vmatprep.subr.mxu0 %v2393
  %2436 = vmatpush1.msra.mxu0 %v2392
  %2437 = vmatprep.subr.mxu0 %v2395
  %2438 = vmatpush1.msra.mxu0 %v2394
  %2439 = vmatprep.subr.mxu0 0.0
  %2440 = vmatpush1.msra.mxu0 0.0
  %2441 = vmatprep.subr.mxu0 0.0
  %2442 = vmatpush1.msra.mxu0 0.0
  %2443 = vmatprep.subr.mxu0 0.0
  %2444 = vmatpush1.msra.mxu0 0.0
  %2445 = vmatprep.subr.mxu0 0.0
  %2446 = vmatpush1.msra.mxu0 0.0
  %2447 = vmatprep.subr.mxu0 0.0
  %2448 = vmatpush1.msra.mxu0 0.0
  %2449 = vmatprep.subr.mxu0 0.0
  %2450 = vmatpush1.msra.mxu0 0.0
  %2451 = vmatprep.subr.mxu0 0.0
  %2452 = vmatpush1.msra.mxu0 0.0
  %2453 = vmatprep.subr.mxu0 0.0
  %2454 = vmatpush1.msra.mxu0 0.0
  %2455 = vmatprep.subr.mxu0 0.0
  %2456 = vmatpush1.msra.mxu0 0.0
  %2457 = vmatprep.subr.mxu0 0.0
  %2458 = vmatpush1.msra.mxu0 0.0
  %2459 = vmatprep.subr.mxu0 0.0
  %2460 = vmatpush1.msra.mxu0 0.0
  %2461 = vmatprep.subr.mxu0 0.0
  %2462 = vmatpush1.msra.mxu0 0.0
  %2463 = vmatprep.subr.mxu0 0.0
  %2464 = vmatpush1.msra.mxu0 0.0
  %2465 = vmatprep.subr.mxu0 0.0
  %2466 = vmatpush1.msra.mxu0 0.0
  %2467 = vmatprep.subr.mxu0 0.0
  %2468 = vmatpush1.msra.mxu0 0.0
  %2469 = vmatprep.subr.mxu0 0.0
  %2470 = vmatpush1.msra.mxu0 0.0
  %2471 = vmatprep.subr.mxu0 0.0
  %2472 = vmatpush1.msra.mxu0 0.0
  %2473 = vmatprep.mubr.f32.mxu0 0.0
  %2474 = vmatmul.mubr.f32.gmra.mrb[0].mxu0 %v2398
  %v2475 = vpop.f32.mrb[0].mxu0
  %v2476 = vadd.f32 0.0, %v2475
  %v2477 = vpop.f32.mrb[0].mxu0
  %v2478 = vadd.f32 0.0, %v2477
  %2479 = vmatprep.mubr.f32.mxu0 0.0
  %2480 = vmatmul.mubr.f32.gmra.mrb[0].mxu0 %v2401
  %v2481 = vpop.f32.mrb[0].mxu0
  %v2482 = vadd.f32 0.0, %v2481
  %v2483 = vpop.f32.mrb[0].mxu0
  %v2484 = vadd.f32 0.0, %v2483
  %2485 = vmatprep.mubr.f32.mxu0 0.0
  %2486 = vmatmul.mubr.f32.gmra.mrb[0].mxu0 %v2404
  %v2487 = vpop.f32.mrb[0].mxu0
  %v2488 = vadd.f32 0.0, %v2487
  %v2489 = vpop.f32.mrb[0].mxu0
  %v2490 = vadd.f32 0.0, %v2489
  %2491 = vmatprep.mubr.f32.mxu0 0.0
  %2492 = vmatmul.mubr.f32.gmra.mrb[0].mxu0 %v2407
  %v2493 = vpop.f32.mrb[0].mxu0
  %v2494 = vadd.f32 0.0, %v2493
  %v2495 = vpop.f32.mrb[0].mxu0
  %v2496 = vadd.f32 0.0, %v2495
  %2497 = vdwg.mxu0
  %v2499 = vsel %vm2396, %v2323, 0
  %v2502 = vsel %vm2396, %v2325, 0
  %v2505 = vsel %vm2396, %v2327, 0
  %v2508 = vsel %vm2396, %v2329, 0
  %2510 = vmatprep.subr.mxu0 %v2336
  %2511 = vmatpush1.msra.mxu0 %v2335
  %2512 = vmatprep.subr.mxu0 %v2338
  %2513 = vmatpush1.msra.mxu0 %v2337
  %2514 = vmatprep.subr.mxu0 %v2340
  %2515 = vmatpush1.msra.mxu0 %v2339
  %2516 = vmatprep.subr.mxu0 %v2342
  %2517 = vmatpush1.msra.mxu0 %v2341
  %2518 = vmatprep.subr.mxu0 %v2344
  %2519 = vmatpush1.msra.mxu0 %v2343
  %2520 = vmatprep.subr.mxu0 %v2346
  %2521 = vmatpush1.msra.mxu0 %v2345
  %2522 = vmatprep.subr.mxu0 %v2348
  %2523 = vmatpush1.msra.mxu0 %v2347
  %2524 = vmatprep.subr.mxu0 %v2350
  %2525 = vmatpush1.msra.mxu0 %v2349
  %2526 = vmatprep.subr.mxu0 %v2352
  %2527 = vmatpush1.msra.mxu0 %v2351
  %2528 = vmatprep.subr.mxu0 %v2354
  %2529 = vmatpush1.msra.mxu0 %v2353
  %2530 = vmatprep.subr.mxu0 %v2356
  %2531 = vmatpush1.msra.mxu0 %v2355
  %2532 = vmatprep.subr.mxu0 %v2358
  %2533 = vmatpush1.msra.mxu0 %v2357
  %2534 = vmatprep.subr.mxu0 %v2360
  %2535 = vmatpush1.msra.mxu0 %v2359
  %2536 = vmatprep.subr.mxu0 %v2362
  %2537 = vmatpush1.msra.mxu0 %v2361
  %2538 = vmatprep.subr.mxu0 %v2364
  %2539 = vmatpush1.msra.mxu0 %v2363
  %2540 = vmatprep.subr.mxu0 0.0
  %2541 = vmatpush1.msra.mxu0 0.0
  %2542 = vmatprep.subr.mxu0 0.0
  %2543 = vmatpush1.msra.mxu0 0.0
  %2544 = vmatprep.subr.mxu0 0.0
  %2545 = vmatpush1.msra.mxu0 0.0
  %2546 = vmatprep.subr.mxu0 0.0
  %2547 = vmatpush1.msra.mxu0 0.0
  %2548 = vmatprep.subr.mxu0 0.0
  %2549 = vmatpush1.msra.mxu0 0.0
  %2550 = vmatprep.subr.mxu0 0.0
  %2551 = vmatpush1.msra.mxu0 0.0
  %2552 = vmatprep.subr.mxu0 0.0
  %2553 = vmatpush1.msra.mxu0 0.0
  %2554 = vmatprep.subr.mxu0 0.0
  %2555 = vmatpush1.msra.mxu0 0.0
  %2556 = vmatprep.subr.mxu0 0.0
  %2557 = vmatpush1.msra.mxu0 0.0
  %2558 = vmatprep.subr.mxu0 0.0
  %2559 = vmatpush1.msra.mxu0 0.0
  %2560 = vmatprep.subr.mxu0 0.0
  %2561 = vmatpush1.msra.mxu0 0.0
  %2562 = vmatprep.subr.mxu0 0.0
  %2563 = vmatpush1.msra.mxu0 0.0
  %2564 = vmatprep.subr.mxu0 0.0
  %2565 = vmatpush1.msra.mxu0 0.0
  %2566 = vmatprep.subr.mxu0 0.0
  %2567 = vmatpush1.msra.mxu0 0.0
  %2568 = vmatprep.subr.mxu0 0.0
  %2569 = vmatpush1.msra.mxu0 0.0
  %2570 = vmatprep.subr.mxu0 0.0
  %2571 = vmatpush1.msra.mxu0 0.0
  %2572 = vmatprep.subr.mxu0 0.0
  %2573 = vmatpush1.msra.mxu0 0.0
  %2574 = vmatprep.mubr.f32.mxu0 0.0
  %2575 = vmatmul.mubr.f32.gmra.mrb[0].mxu0 %v2499
  %v2576 = vpop.f32.mrb[0].mxu0
  %v2577 = vadd.f32 %v2476, %v2576
  %v2578 = vpop.f32.mrb[0].mxu0
  %v2579 = vadd.f32 %v2478, %v2578
  %2580 = vmatprep.mubr.f32.mxu0 0.0
  %2581 = vmatmul.mubr.f32.gmra.mrb[0].mxu0 %v2502
  %v2582 = vpop.f32.mrb[0].mxu0
  %v2583 = vadd.f32 %v2482, %v2582
  %v2584 = vpop.f32.mrb[0].mxu0
  %v2585 = vadd.f32 %v2484, %v2584
  %2586 = vmatprep.mubr.f32.mxu0 0.0
  %2587 = vmatmul.mubr.f32.gmra.mrb[0].mxu0 %v2505
  %v2588 = vpop.f32.mrb[0].mxu0
  %v2589 = vadd.f32 %v2488, %v2588
  %v2590 = vpop.f32.mrb[0].mxu0
  %v2591 = vadd.f32 %v2490, %v2590
  %2592 = vmatprep.mubr.f32.mxu0 0.0
  %2593 = vmatmul.mubr.f32.gmra.mrb[0].mxu0 %v2508
  %v2594 = vpop.f32.mrb[0].mxu0
  %v2595 = vadd.f32 %v2494, %v2594
  %v2596 = vpop.f32.mrb[0].mxu0
  %v2597 = vadd.f32 %v2496, %v2596
  %2598 = vdwg.mxu0
  %s2599 = scalar_lea.vmem %s3, 480
  %v2600 = vld [vmem:[%s2599] sm:$0xff]
  %v2601 = vld [vmem:[%s2599 + $0x8] sm:$0xff]
  %v2602 = vld [vmem:[%s2599 + $0x10] sm:$0xff]
  %v2603 = vld [vmem:[%s2599 + $0x18] sm:$0xff]
  %v2604 = vld [vmem:[%s2599 + $0x20] sm:$0xff]
  %v2605 = vld [vmem:[%s2599 + $0x28] sm:$0xff]
  %v2606 = vld [vmem:[%s2599 + $0x30] sm:$0xff]
  %v2607 = vld [vmem:[%s2599 + $0x38] sm:$0xff]
  %v2608 = vld [vmem:[%s2599 + $0x40] sm:$0xff]
  %v2609 = vld [vmem:[%s2599 + $0x48] sm:$0xff]
  %v2610 = vld [vmem:[%s2599 + $0x50] sm:$0xff]
  %v2611 = vld [vmem:[%s2599 + $0x58] sm:$0xff]
  %v2612 = vld [vmem:[%s2599 + $0x60] sm:$0xff]
  %v2613 = vld [vmem:[%s2599 + $0x68] sm:$0xff]
  %v2614 = vld [vmem:[%s2599 + $0x70] sm:$0xff]
  %v2615 = vld [vmem:[%s2599 + $0x78] sm:$0xff]
  %v2616 = vld [vmem:[%s2599 + $0x80] sm:$0xff]
  %v2617 = vld [vmem:[%s2599 + $0x88] sm:$0xff]
  %v2618 = vld [vmem:[%s2599 + $0x90] sm:$0xff]
  %v2619 = vld [vmem:[%s2599 + $0x98] sm:$0xff]
  %v2620 = vld [vmem:[%s2599 + $0xa0] sm:$0xff]
  %v2621 = vld [vmem:[%s2599 + $0xa8] sm:$0xff]
  %v2622 = vld [vmem:[%s2599 + $0xb0] sm:$0xff]
  %v2623 = vld [vmem:[%s2599 + $0xb8] sm:$0xff]
  %v2624 = vld [vmem:[%s2599 + $0xc0] sm:$0xff]
  %v2625 = vld [vmem:[%s2599 + $0xc8] sm:$0xff]
  %v2626 = vld [vmem:[%s2599 + $0xd0] sm:$0xff]
  %v2627 = vld [vmem:[%s2599 + $0xd8] sm:$0xff]
  %v2628 = vld [vmem:[%s2599 + $0xe0] sm:$0xff]
  %v2629 = vld [vmem:[%s2599 + $0xe8] sm:$0xff]
  %v2631 = vsel %vm2396, %v2331, 0
  %2633 = vmatprep.subr.mxu0 %v2601
  %2634 = vmatpush1.msra.mxu0 %v2600
  %2635 = vmatprep.subr.mxu0 %v2603
  %2636 = vmatpush1.msra.mxu0 %v2602
  %2637 = vmatprep.subr.mxu0 %v2605
  %2638 = vmatpush1.msra.mxu0 %v2604
  %2639 = vmatprep.subr.mxu0 %v2607
  %2640 = vmatpush1.msra.mxu0 %v2606
  %2641 = vmatprep.subr.mxu0 %v2609
  %2642 = vmatpush1.msra.mxu0 %v2608
  %2643 = vmatprep.subr.mxu0 %v2611
  %2644 = vmatpush1.msra.mxu0 %v2610
  %2645 = vmatprep.subr.mxu0 %v2613
  %2646 = vmatpush1.msra.mxu0 %v2612
  %2647 = vmatprep.subr.mxu0 %v2615
  %2648 = vmatpush1.msra.mxu0 %v2614
  %2649 = vmatprep.subr.mxu0 %v2617
  %2650 = vmatpush1.msra.mxu0 %v2616
  %2651 = vmatprep.subr.mxu0 %v2619
  %2652 = vmatpush1.msra.mxu0 %v2618
  %2653 = vmatprep.subr.mxu0 %v2621
  %2654 = vmatpush1.msra.mxu0 %v2620
  %2655 = vmatprep.subr.mxu0 %v2623
  %2656 = vmatpush1.msra.mxu0 %v2622
  %2657 = vmatprep.subr.mxu0 %v2625
  %2658 = vmatpush1.msra.mxu0 %v2624
  %2659 = vmatprep.subr.mxu0 %v2627
  %2660 = vmatpush1.msra.mxu0 %v2626
  %2661 = vmatprep.subr.mxu0 %v2629
  %2662 = vmatpush1.msra.mxu0 %v2628
  %2663 = vmatprep.subr.mxu0 0.0
  %2664 = vmatpush1.msra.mxu0 0.0
  %2665 = vmatprep.subr.mxu0 0.0
  %2666 = vmatpush1.msra.mxu0 0.0
  %2667 = vmatprep.subr.mxu0 0.0
  %2668 = vmatpush1.msra.mxu0 0.0
  %2669 = vmatprep.subr.mxu0 0.0
  %2670 = vmatpush1.msra.mxu0 0.0
  %2671 = vmatprep.subr.mxu0 0.0
  %2672 = vmatpush1.msra.mxu0 0.0
  %2673 = vmatprep.subr.mxu0 0.0
  %2674 = vmatpush1.msra.mxu0 0.0
  %2675 = vmatprep.subr.mxu0 0.0
  %2676 = vmatpush1.msra.mxu0 0.0
  %2677 = vmatprep.subr.mxu0 0.0
  %2678 = vmatpush1.msra.mxu0 0.0
  %2679 = vmatprep.subr.mxu0 0.0
  %2680 = vmatpush1.msra.mxu0 0.0
  %2681 = vmatprep.subr.mxu0 0.0
  %2682 = vmatpush1.msra.mxu0 0.0
  %2683 = vmatprep.subr.mxu0 0.0
  %2684 = vmatpush1.msra.mxu0 0.0
  %2685 = vmatprep.subr.mxu0 0.0
  %2686 = vmatpush1.msra.mxu0 0.0
  %2687 = vmatprep.subr.mxu0 0.0
  %2688 = vmatpush1.msra.mxu0 0.0
  %2689 = vmatprep.subr.mxu0 0.0
  %2690 = vmatpush1.msra.mxu0 0.0
  %2691 = vmatprep.subr.mxu0 0.0
  %2692 = vmatpush1.msra.mxu0 0.0
  %2693 = vmatprep.subr.mxu0 0.0
  %2694 = vmatpush1.msra.mxu0 0.0
  %2695 = vmatprep.subr.mxu0 0.0
  %2696 = vmatpush1.msra.mxu0 0.0
  %2697 = vmatprep.mubr.f32.mxu0 0.0
  %2698 = vmatmul.mubr.f32.gmra.mrb[0].mxu0 %v2502
  %v2699 = vpop.f32.mrb[0].mxu0
  %v2700 = vadd.f32 0.0, %v2699
  %v2701 = vpop.f32.mrb[0].mxu0
  %v2702 = vadd.f32 0.0, %v2701
  %2703 = vmatprep.mubr.f32.mxu0 0.0
  %2704 = vmatmul.mubr.f32.gmra.mrb[0].mxu0 %v2505
  %v2705 = vpop.f32.mrb[0].mxu0
  %v2706 = vadd.f32 0.0, %v2705
  %v2707 = vpop.f32.mrb[0].mxu0
  %v2708 = vadd.f32 0.0, %v2707
  %2709 = vmatprep.mubr.f32.mxu0 0.0
  %2710 = vmatmul.mubr.f32.gmra.mrb[0].mxu0 %v2508
  %v2711 = vpop.f32.mrb[0].mxu0
  %v2712 = vadd.f32 0.0, %v2711
  %v2713 = vpop.f32.mrb[0].mxu0
  %v2714 = vadd.f32 0.0, %v2713
  %2715 = vmatprep.mubr.f32.mxu0 0.0
  %2716 = vmatmul.mubr.f32.gmra.mrb[0].mxu0 %v2631
  %v2717 = vpop.f32.mrb[0].mxu0
  %v2718 = vadd.f32 0.0, %v2717
  %v2719 = vpop.f32.mrb[0].mxu0
  %v2720 = vadd.f32 0.0, %v2719
  %2721 = vdwg.mxu0
  %v2722 = vadd.f32 %v2577, %v2700
  %v2723 = vadd.f32 %v2579, %v2702
  %v2724 = vadd.f32 %v2583, %v2706
  %v2725 = vadd.f32 %v2585, %v2708
  %v2726 = vadd.f32 %v2589, %v2712
  %v2727 = vadd.f32 %v2591, %v2714
  %v2728 = vadd.f32 %v2595, %v2718
  %v2729 = vadd.f32 %v2597, %v2720
  %s2730 = scalar_lea.vmem %s3, 720
  %v2731 = vld [vmem:[%s2730] sm:$0xff]
  %v2732 = vld [vmem:[%s2730 + $0x8] sm:$0xff]
  %v2733 = vld [vmem:[%s2730 + $0x10] sm:$0xff]
  %v2734 = vld [vmem:[%s2730 + $0x18] sm:$0xff]
  %v2735 = vld [vmem:[%s2730 + $0x20] sm:$0xff]
  %v2736 = vld [vmem:[%s2730 + $0x28] sm:$0xff]
  %v2737 = vld [vmem:[%s2730 + $0x30] sm:$0xff]
  %v2738 = vld [vmem:[%s2730 + $0x38] sm:$0xff]
  %v2739 = vld [vmem:[%s2730 + $0x40] sm:$0xff]
  %v2740 = vld [vmem:[%s2730 + $0x48] sm:$0xff]
  %v2741 = vld [vmem:[%s2730 + $0x50] sm:$0xff]
  %v2742 = vld [vmem:[%s2730 + $0x58] sm:$0xff]
  %v2743 = vld [vmem:[%s2730 + $0x60] sm:$0xff]
  %v2744 = vld [vmem:[%s2730 + $0x68] sm:$0xff]
  %v2745 = vld [vmem:[%s2730 + $0x70] sm:$0xff]
  %v2746 = vld [vmem:[%s2730 + $0x78] sm:$0xff]
  %v2747 = vld [vmem:[%s2730 + $0x80] sm:$0xff]
  %v2748 = vld [vmem:[%s2730 + $0x88] sm:$0xff]
  %v2749 = vld [vmem:[%s2730 + $0x90] sm:$0xff]
  %v2750 = vld [vmem:[%s2730 + $0x98] sm:$0xff]
  %v2751 = vld [vmem:[%s2730 + $0xa0] sm:$0xff]
  %v2752 = vld [vmem:[%s2730 + $0xa8] sm:$0xff]
  %v2753 = vld [vmem:[%s2730 + $0xb0] sm:$0xff]
  %v2754 = vld [vmem:[%s2730 + $0xb8] sm:$0xff]
  %v2755 = vld [vmem:[%s2730 + $0xc0] sm:$0xff]
  %v2756 = vld [vmem:[%s2730 + $0xc8] sm:$0xff]
  %v2757 = vld [vmem:[%s2730 + $0xd0] sm:$0xff]
  %v2758 = vld [vmem:[%s2730 + $0xd8] sm:$0xff]
  %v2759 = vld [vmem:[%s2730 + $0xe0] sm:$0xff]
  %v2760 = vld [vmem:[%s2730 + $0xe8] sm:$0xff]
  %v2762 = vsel %vm2396, %v2332, 0
  %2764 = vmatprep.subr.mxu0 %v2732
  %2765 = vmatpush1.msra.mxu0 %v2731
  %2766 = vmatprep.subr.mxu0 %v2734
  %2767 = vmatpush1.msra.mxu0 %v2733
  %2768 = vmatprep.subr.mxu0 %v2736
  %2769 = vmatpush1.msra.mxu0 %v2735
  %2770 = vmatprep.subr.mxu0 %v2738
  %2771 = vmatpush1.msra.mxu0 %v2737
  %2772 = vmatprep.subr.mxu0 %v2740
  %2773 = vmatpush1.msra.mxu0 %v2739
  %2774 = vmatprep.subr.mxu0 %v2742
  %2775 = vmatpush1.msra.mxu0 %v2741
  %2776 = vmatprep.subr.mxu0 %v2744
  %2777 = vmatpush1.msra.mxu0 %v2743
  %2778 = vmatprep.subr.mxu0 %v2746
  %2779 = vmatpush1.msra.mxu0 %v2745
  %2780 = vmatprep.subr.mxu0 %v2748
  %2781 = vmatpush1.msra.mxu0 %v2747
  %2782 = vmatprep.subr.mxu0 %v2750
  %2783 = vmatpush1.msra.mxu0 %v2749
  %2784 = vmatprep.subr.mxu0 %v2752
  %2785 = vmatpush1.msra.mxu0 %v2751
  %2786 = vmatprep.subr.mxu0 %v2754
  %2787 = vmatpush1.msra.mxu0 %v2753
  %2788 = vmatprep.subr.mxu0 %v2756
  %2789 = vmatpush1.msra.mxu0 %v2755
  %2790 = vmatprep.subr.mxu0 %v2758
  %2791 = vmatpush1.msra.mxu0 %v2757
  %2792 = vmatprep.subr.mxu0 %v2760
  %2793 = vmatpush1.msra.mxu0 %v2759
  %2794 = vmatprep.subr.mxu0 0.0
  %2795 = vmatpush1.msra.mxu0 0.0
  %2796 = vmatprep.subr.mxu0 0.0
  %2797 = vmatpush1.msra.mxu0 0.0
  %2798 = vmatprep.subr.mxu0 0.0
  %2799 = vmatpush1.msra.mxu0 0.0
  %2800 = vmatprep.subr.mxu0 0.0
  %2801 = vmatpush1.msra.mxu0 0.0
  %2802 = vmatprep.subr.mxu0 0.0
  %2803 = vmatpush1.msra.mxu0 0.0
  %2804 = vmatprep.subr.mxu0 0.0
  %2805 = vmatpush1.msra.mxu0 0.0
  %2806 = vmatprep.subr.mxu0 0.0
  %2807 = vmatpush1.msra.mxu0 0.0
  %2808 = vmatprep.subr.mxu0 0.0
  %2809 = vmatpush1.msra.mxu0 0.0
  %2810 = vmatprep.subr.mxu0 0.0
  %2811 = vmatpush1.msra.mxu0 0.0
  %2812 = vmatprep.subr.mxu0 0.0
  %2813 = vmatpush1.msra.mxu0 0.0
  %2814 = vmatprep.subr.mxu0 0.0
  %2815 = vmatpush1.msra.mxu0 0.0
  %2816 = vmatprep.subr.mxu0 0.0
  %2817 = vmatpush1.msra.mxu0 0.0
  %2818 = vmatprep.subr.mxu0 0.0
  %2819 = vmatpush1.msra.mxu0 0.0
  %2820 = vmatprep.subr.mxu0 0.0
  %2821 = vmatpush1.msra.mxu0 0.0
  %2822 = vmatprep.subr.mxu0 0.0
  %2823 = vmatpush1.msra.mxu0 0.0
  %2824 = vmatprep.subr.mxu0 0.0
  %2825 = vmatpush1.msra.mxu0 0.0
  %2826 = vmatprep.subr.mxu0 0.0
  %2827 = vmatpush1.msra.mxu0 0.0
  %2828 = vmatprep.mubr.f32.mxu0 0.0
  %2829 = vmatmul.mubr.f32.gmra.mrb[0].mxu0 %v2401
  %v2830 = vpop.f32.mrb[0].mxu0
  %v2831 = vadd.f32 0.0, %v2830
  %v2832 = vpop.f32.mrb[0].mxu0
  %v2833 = vadd.f32 0.0, %v2832
  %2834 = vmatprep.mubr.f32.mxu0 0.0
  %2835 = vmatmul.mubr.f32.gmra.mrb[0].mxu0 %v2404
  %v2836 = vpop.f32.mrb[0].mxu0
  %v2837 = vadd.f32 0.0, %v2836
  %v2838 = vpop.f32.mrb[0].mxu0
  %v2839 = vadd.f32 0.0, %v2838
  %2840 = vmatprep.mubr.f32.mxu0 0.0
  %2841 = vmatmul.mubr.f32.gmra.mrb[0].mxu0 %v2407
  %v2842 = vpop.f32.mrb[0].mxu0
  %v2843 = vadd.f32 0.0, %v2842
  %v2844 = vpop.f32.mrb[0].mxu0
  %v2845 = vadd.f32 0.0, %v2844
  %2846 = vmatprep.mubr.f32.mxu0 0.0
  %2847 = vmatmul.mubr.f32.gmra.mrb[0].mxu0 %v2762
  %v2848 = vpop.f32.mrb[0].mxu0
  %v2849 = vadd.f32 0.0, %v2848
  %v2850 = vpop.f32.mrb[0].mxu0
  %v2851 = vadd.f32 0.0, %v2850
  %2852 = vdwg.mxu0
  %v2853 = vadd.f32 %v2722, %v2831
  %v2854 = vadd.f32 %v2723, %v2833
  %v2855 = vadd.f32 %v2724, %v2837
  %v2856 = vadd.f32 %v2725, %v2839
  %v2857 = vadd.f32 %v2726, %v2843
  %v2858 = vadd.f32 %v2727, %v2845
  %v2859 = vadd.f32 %v2728, %v2849
  %v2860 = vadd.f32 %v2729, %v2851
  %s2861 = scalar_lea.vmem %s3, 960
  %v2862 = vld [vmem:[%s2861] sm:$0xff]
  %v2863 = vld [vmem:[%s2861 + $0x8] sm:$0xff]
  %v2864 = vld [vmem:[%s2861 + $0x10] sm:$0xff]
  %v2865 = vld [vmem:[%s2861 + $0x18] sm:$0xff]
  %v2866 = vld [vmem:[%s2861 + $0x20] sm:$0xff]
  %v2867 = vld [vmem:[%s2861 + $0x28] sm:$0xff]
  %v2868 = vld [vmem:[%s2861 + $0x30] sm:$0xff]
  %v2869 = vld [vmem:[%s2861 + $0x38] sm:$0xff]
  %v2870 = vld [vmem:[%s2861 + $0x40] sm:$0xff]
  %v2871 = vld [vmem:[%s2861 + $0x48] sm:$0xff]
  %v2872 = vld [vmem:[%s2861 + $0x50] sm:$0xff]
  %v2873 = vld [vmem:[%s2861 + $0x58] sm:$0xff]
  %v2874 = vld [vmem:[%s2861 + $0x60] sm:$0xff]
  %v2875 = vld [vmem:[%s2861 + $0x68] sm:$0xff]
  %v2876 = vld [vmem:[%s2861 + $0x70] sm:$0xff]
  %v2877 = vld [vmem:[%s2861 + $0x78] sm:$0xff]
  %v2878 = vld [vmem:[%s2861 + $0x80] sm:$0xff]
  %v2879 = vld [vmem:[%s2861 + $0x88] sm:$0xff]
  %v2880 = vld [vmem:[%s2861 + $0x90] sm:$0xff]
  %v2881 = vld [vmem:[%s2861 + $0x98] sm:$0xff]
  %v2882 = vld [vmem:[%s2861 + $0xa0] sm:$0xff]
  %v2883 = vld [vmem:[%s2861 + $0xa8] sm:$0xff]
  %v2884 = vld [vmem:[%s2861 + $0xb0] sm:$0xff]
  %v2885 = vld [vmem:[%s2861 + $0xb8] sm:$0xff]
  %v2886 = vld [vmem:[%s2861 + $0xc0] sm:$0xff]
  %v2887 = vld [vmem:[%s2861 + $0xc8] sm:$0xff]
  %v2888 = vld [vmem:[%s2861 + $0xd0] sm:$0xff]
  %v2889 = vld [vmem:[%s2861 + $0xd8] sm:$0xff]
  %v2890 = vld [vmem:[%s2861 + $0xe0] sm:$0xff]
  %v2891 = vld [vmem:[%s2861 + $0xe8] sm:$0xff]
  %v2893 = vsel %vm2396, %v2333, 0
  %2895 = vmatprep.subr.mxu0 %v2863
  %2896 = vmatpush1.msra.mxu0 %v2862
  %2897 = vmatprep.subr.mxu0 %v2865
  %2898 = vmatpush1.msra.mxu0 %v2864
  %2899 = vmatprep.subr.mxu0 %v2867
  %2900 = vmatpush1.msra.mxu0 %v2866
  %2901 = vmatprep.subr.mxu0 %v2869
  %2902 = vmatpush1.msra.mxu0 %v2868
  %2903 = vmatprep.subr.mxu0 %v2871
  %2904 = vmatpush1.msra.mxu0 %v2870
  %2905 = vmatprep.subr.mxu0 %v2873
  %2906 = vmatpush1.msra.mxu0 %v2872
  %2907 = vmatprep.subr.mxu0 %v2875
  %2908 = vmatpush1.msra.mxu0 %v2874
  %2909 = vmatprep.subr.mxu0 %v2877
  %2910 = vmatpush1.msra.mxu0 %v2876
  %2911 = vmatprep.subr.mxu0 %v2879
  %2912 = vmatpush1.msra.mxu0 %v2878
  %2913 = vmatprep.subr.mxu0 %v2881
  %2914 = vmatpush1.msra.mxu0 %v2880
  %2915 = vmatprep.subr.mxu0 %v2883
  %2916 = vmatpush1.msra.mxu0 %v2882
  %2917 = vmatprep.subr.mxu0 %v2885
  %2918 = vmatpush1.msra.mxu0 %v2884
  %2919 = vmatprep.subr.mxu0 %v2887
  %2920 = vmatpush1.msra.mxu0 %v2886
  %2921 = vmatprep.subr.mxu0 %v2889
  %2922 = vmatpush1.msra.mxu0 %v2888
  %2923 = vmatprep.subr.mxu0 %v2891
  %2924 = vmatpush1.msra.mxu0 %v2890
  %2925 = vmatprep.subr.mxu0 0.0
  %2926 = vmatpush1.msra.mxu0 0.0
  %2927 = vmatprep.subr.mxu0 0.0
  %2928 = vmatpush1.msra.mxu0 0.0
  %2929 = vmatprep.subr.mxu0 0.0
  %2930 = vmatpush1.msra.mxu0 0.0
  %2931 = vmatprep.subr.mxu0 0.0
  %2932 = vmatpush1.msra.mxu0 0.0
  %2933 = vmatprep.subr.mxu0 0.0
  %2934 = vmatpush1.msra.mxu0 0.0
  %2935 = vmatprep.subr.mxu0 0.0
  %2936 = vmatpush1.msra.mxu0 0.0
  %2937 = vmatprep.subr.mxu0 0.0
  %2938 = vmatpush1.msra.mxu0 0.0
  %2939 = vmatprep.subr.mxu0 0.0
  %2940 = vmatpush1.msra.mxu0 0.0
  %2941 = vmatprep.subr.mxu0 0.0
  %2942 = vmatpush1.msra.mxu0 0.0
  %2943 = vmatprep.subr.mxu0 0.0
  %2944 = vmatpush1.msra.mxu0 0.0
  %2945 = vmatprep.subr.mxu0 0.0
  %2946 = vmatpush1.msra.mxu0 0.0
  %2947 = vmatprep.subr.mxu0 0.0
  %2948 = vmatpush1.msra.mxu0 0.0
  %2949 = vmatprep.subr.mxu0 0.0
  %2950 = vmatpush1.msra.mxu0 0.0
  %2951 = vmatprep.subr.mxu0 0.0
  %2952 = vmatpush1.msra.mxu0 0.0
  %2953 = vmatprep.subr.mxu0 0.0
  %2954 = vmatpush1.msra.mxu0 0.0
  %2955 = vmatprep.subr.mxu0 0.0
  %2956 = vmatpush1.msra.mxu0 0.0
  %2957 = vmatprep.subr.mxu0 0.0
  %2958 = vmatpush1.msra.mxu0 0.0
  %2959 = vmatprep.mubr.f32.mxu0 0.0
  %2960 = vmatmul.mubr.f32.gmra.mrb[0].mxu0 %v2505
  %v2961 = vpop.f32.mrb[0].mxu0
  %v2962 = vadd.f32 0.0, %v2961
  %v2963 = vpop.f32.mrb[0].mxu0
  %v2964 = vadd.f32 0.0, %v2963
  %2965 = vmatprep.mubr.f32.mxu0 0.0
  %2966 = vmatmul.mubr.f32.gmra.mrb[0].mxu0 %v2508
  %v2967 = vpop.f32.mrb[0].mxu0
  %v2968 = vadd.f32 0.0, %v2967
  %v2969 = vpop.f32.mrb[0].mxu0
  %v2970 = vadd.f32 0.0, %v2969
  %2971 = vmatprep.mubr.f32.mxu0 0.0
  %2972 = vmatmul.mubr.f32.gmra.mrb[0].mxu0 %v2631
  %v2973 = vpop.f32.mrb[0].mxu0
  %v2974 = vadd.f32 0.0, %v2973
  %v2975 = vpop.f32.mrb[0].mxu0
  %v2976 = vadd.f32 0.0, %v2975
  %2977 = vmatprep.mubr.f32.mxu0 0.0
  %2978 = vmatmul.mubr.f32.gmra.mrb[0].mxu0 %v2893
  %v2979 = vpop.f32.mrb[0].mxu0
  %v2980 = vadd.f32 0.0, %v2979
  %v2981 = vpop.f32.mrb[0].mxu0
  %v2982 = vadd.f32 0.0, %v2981
  %2983 = vdwg.mxu0
  %v2984 = vadd.f32 %v2853, %v2962
  %v2985 = vadd.f32 %v2854, %v2964
  %v2986 = vadd.f32 %v2855, %v2968
  %v2987 = vadd.f32 %v2856, %v2970
  %v2988 = vadd.f32 %v2857, %v2974
  %v2989 = vadd.f32 %v2858, %v2976
  %v2990 = vadd.f32 %v2859, %v2980
  %v2991 = vadd.f32 %v2860, %v2982
  %2992 = vmatprep.subr.mxu0 %v2367
  %2993 = vmatpush1.msra.mxu0 %v2366
  %2994 = vmatprep.subr.mxu0 %v2369
  %2995 = vmatpush1.msra.mxu0 %v2368
  %2996 = vmatprep.subr.mxu0 %v2371
  %2997 = vmatpush1.msra.mxu0 %v2370
  %2998 = vmatprep.subr.mxu0 %v2373
  %2999 = vmatpush1.msra.mxu0 %v2372
  %3000 = vmatprep.subr.mxu0 %v2375
  %3001 = vmatpush1.msra.mxu0 %v2374
  %3002 = vmatprep.subr.mxu0 %v2377
  %3003 = vmatpush1.msra.mxu0 %v2376
  %3004 = vmatprep.subr.mxu0 %v2379
  %3005 = vmatpush1.msra.mxu0 %v2378
  %3006 = vmatprep.subr.mxu0 %v2381
  %3007 = vmatpush1.msra.mxu0 %v2380
  %3008 = vmatprep.subr.mxu0 %v2383
  %3009 = vmatpush1.msra.mxu0 %v2382
  %3010 = vmatprep.subr.mxu0 %v2385
  %3011 = vmatpush1.msra.mxu0 %v2384
  %3012 = vmatprep.subr.mxu0 %v2387
  %3013 = vmatpush1.msra.mxu0 %v2386
  %3014 = vmatprep.subr.mxu0 %v2389
  %3015 = vmatpush1.msra.mxu0 %v2388
  %3016 = vmatprep.subr.mxu0 %v2391
  %3017 = vmatpush1.msra.mxu0 %v2390
  %3018 = vmatprep.subr.mxu0 %v2393
  %3019 = vmatpush1.msra.mxu0 %v2392
  %3020 = vmatprep.subr.mxu0 %v2395
  %3021 = vmatpush1.msra.mxu0 %v2394
  %3022 = vmatprep.subr.mxu0 0.0
  %3023 = vmatpush1.msra.mxu0 0.0
  %3024 = vmatprep.subr.mxu0 0.0
  %3025 = vmatpush1.msra.mxu0 0.0
  %3026 = vmatprep.subr.mxu0 0.0
  %3027 = vmatpush1.msra.mxu0 0.0
  %3028 = vmatprep.subr.mxu0 0.0
  %3029 = vmatpush1.msra.mxu0 0.0
  %3030 = vmatprep.subr.mxu0 0.0
  %3031 = vmatpush1.msra.mxu0 0.0
  %3032 = vmatprep.subr.mxu0 0.0
  %3033 = vmatpush1.msra.mxu0 0.0
  %3034 = vmatprep.subr.mxu0 0.0
  %3035 = vmatpush1.msra.mxu0 0.0
  %3036 = vmatprep.subr.mxu0 0.0
  %3037 = vmatpush1.msra.mxu0 0.0
  %3038 = vmatprep.subr.mxu0 0.0
  %3039 = vmatpush1.msra.mxu0 0.0
  %3040 = vmatprep.subr.mxu0 0.0
  %3041 = vmatpush1.msra.mxu0 0.0
  %3042 = vmatprep.subr.mxu0 0.0
  %3043 = vmatpush1.msra.mxu0 0.0
  %3044 = vmatprep.subr.mxu0 0.0
  %3045 = vmatpush1.msra.mxu0 0.0
  %3046 = vmatprep.subr.mxu0 0.0
  %3047 = vmatpush1.msra.mxu0 0.0
  %3048 = vmatprep.subr.mxu0 0.0
  %3049 = vmatpush1.msra.mxu0 0.0
  %3050 = vmatprep.subr.mxu0 0.0
  %3051 = vmatpush1.msra.mxu0 0.0
  %3052 = vmatprep.subr.mxu0 0.0
  %3053 = vmatpush1.msra.mxu0 0.0
  %3054 = vmatprep.subr.mxu0 0.0
  %3055 = vmatpush1.msra.mxu0 0.0
  %3056 = vmatprep.mubr.f32.mxu0 0.0
  %3057 = vmatmul.mubr.f32.gmra.mrb[0].mxu0 %v2502
  %v3058 = vpop.f32.mrb[0].mxu0
  %v3059 = vadd.f32 0.0, %v3058
  %v3060 = vpop.f32.mrb[0].mxu0
  %v3061 = vadd.f32 0.0, %v3060
  %3062 = vmatprep.mubr.f32.mxu0 0.0
  %3063 = vmatmul.mubr.f32.gmra.mrb[0].mxu0 %v2505
  %v3064 = vpop.f32.mrb[0].mxu0
  %v3065 = vadd.f32 0.0, %v3064
  %v3066 = vpop.f32.mrb[0].mxu0
  %v3067 = vadd.f32 0.0, %v3066
  %3068 = vmatprep.mubr.f32.mxu0 0.0
  %3069 = vmatmul.mubr.f32.gmra.mrb[0].mxu0 %v2508
  %v3070 = vpop.f32.mrb[0].mxu0
  %v3071 = vadd.f32 0.0, %v3070
  %v3072 = vpop.f32.mrb[0].mxu0
  %v3073 = vadd.f32 0.0, %v3072
  %3074 = vmatprep.mubr.f32.mxu0 0.0
  %3075 = vmatmul.mubr.f32.gmra.mrb[0].mxu0 %v2631
  %v3076 = vpop.f32.mrb[0].mxu0
  %v3077 = vadd.f32 0.0, %v3076
  %v3078 = vpop.f32.mrb[0].mxu0
  %v3079 = vadd.f32 0.0, %v3078
  %3080 = vdwg.mxu0
  %3081 = vmatprep.subr.mxu0 %v2336
  %3082 = vmatpush1.msra.mxu0 %v2335
  %3083 = vmatprep.subr.mxu0 %v2338
  %3084 = vmatpush1.msra.mxu0 %v2337
  %3085 = vmatprep.subr.mxu0 %v2340
  %3086 = vmatpush1.msra.mxu0 %v2339
  %3087 = vmatprep.subr.mxu0 %v2342
  %3088 = vmatpush1.msra.mxu0 %v2341
  %3089 = vmatprep.subr.mxu0 %v2344
  %3090 = vmatpush1.msra.mxu0 %v2343
  %3091 = vmatprep.subr.mxu0 %v2346
  %3092 = vmatpush1.msra.mxu0 %v2345
  %3093 = vmatprep.subr.mxu0 %v2348
  %3094 = vmatpush1.msra.mxu0 %v2347
  %3095 = vmatprep.subr.mxu0 %v2350
  %3096 = vmatpush1.msra.mxu0 %v2349
  %3097 = vmatprep.subr.mxu0 %v2352
  %3098 = vmatpush1.msra.mxu0 %v2351
  %3099 = vmatprep.subr.mxu0 %v2354
  %3100 = vmatpush1.msra.mxu0 %v2353
  %3101 = vmatprep.subr.mxu0 %v2356
  %3102 = vmatpush1.msra.mxu0 %v2355
  %3103 = vmatprep.subr.mxu0 %v2358
  %3104 = vmatpush1.msra.mxu0 %v2357
  %3105 = vmatprep.subr.mxu0 %v2360
  %3106 = vmatpush1.msra.mxu0 %v2359
  %3107 = vmatprep.subr.mxu0 %v2362
  %3108 = vmatpush1.msra.mxu0 %v2361
  %3109 = vmatprep.subr.mxu0 %v2364
  %3110 = vmatpush1.msra.mxu0 %v2363
  %3111 = vmatprep.subr.mxu0 0.0
  %3112 = vmatpush1.msra.mxu0 0.0
  %3113 = vmatprep.subr.mxu0 0.0
  %3114 = vmatpush1.msra.mxu0 0.0
  %3115 = vmatprep.subr.mxu0 0.0
  %3116 = vmatpush1.msra.mxu0 0.0
  %3117 = vmatprep.subr.mxu0 0.0
  %3118 = vmatpush1.msra.mxu0 0.0
  %3119 = vmatprep.subr.mxu0 0.0
  %3120 = vmatpush1.msra.mxu0 0.0
  %3121 = vmatprep.subr.mxu0 0.0
  %3122 = vmatpush1.msra.mxu0 0.0
  %3123 = vmatprep.subr.mxu0 0.0
  %3124 = vmatpush1.msra.mxu0 0.0
  %3125 = vmatprep.subr.mxu0 0.0
  %3126 = vmatpush1.msra.mxu0 0.0
  %3127 = vmatprep.subr.mxu0 0.0
  %3128 = vmatpush1.msra.mxu0 0.0
  %3129 = vmatprep.subr.mxu0 0.0
  %3130 = vmatpush1.msra.mxu0 0.0
  %3131 = vmatprep.subr.mxu0 0.0
  %3132 = vmatpush1.msra.mxu0 0.0
  %3133 = vmatprep.subr.mxu0 0.0
  %3134 = vmatpush1.msra.mxu0 0.0
  %3135 = vmatprep.subr.mxu0 0.0
  %3136 = vmatpush1.msra.mxu0 0.0
  %3137 = vmatprep.subr.mxu0 0.0
  %3138 = vmatpush1.msra.mxu0 0.0
  %3139 = vmatprep.subr.mxu0 0.0
  %3140 = vmatpush1.msra.mxu0 0.0
  %3141 = vmatprep.subr.mxu0 0.0
  %3142 = vmatpush1.msra.mxu0 0.0
  %3143 = vmatprep.subr.mxu0 0.0
  %3144 = vmatpush1.msra.mxu0 0.0
  %3145 = vmatprep.mubr.f32.mxu0 0.0
  %3146 = vmatmul.mubr.f32.gmra.mrb[0].mxu0 %v2398
  %v3147 = vpop.f32.mrb[0].mxu0
  %v3148 = vadd.f32 %v3059, %v3147
  %v3149 = vpop.f32.mrb[0].mxu0
  %v3150 = vadd.f32 %v3061, %v3149
  %3151 = vmatprep.mubr.f32.mxu0 0.0
  %3152 = vmatmul.mubr.f32.gmra.mrb[0].mxu0 %v2401
  %v3153 = vpop.f32.mrb[0].mxu0
  %v3154 = vadd.f32 %v3065, %v3153
  %v3155 = vpop.f32.mrb[0].mxu0
  %v3156 = vadd.f32 %v3067, %v3155
  %3157 = vmatprep.mubr.f32.mxu0 0.0
  %3158 = vmatmul.mubr.f32.gmra.mrb[0].mxu0 %v2404
  %v3159 = vpop.f32.mrb[0].mxu0
  %v3160 = vadd.f32 %v3071, %v3159
  %v3161 = vpop.f32.mrb[0].mxu0
  %v3162 = vadd.f32 %v3073, %v3161
  %3163 = vmatprep.mubr.f32.mxu0 0.0
  %3164 = vmatmul.mubr.f32.gmra.mrb[0].mxu0 %v2407
  %v3165 = vpop.f32.mrb[0].mxu0
  %v3166 = vadd.f32 %v3077, %v3165
  %v3167 = vpop.f32.mrb[0].mxu0
  %v3168 = vadd.f32 %v3079, %v3167
  %3169 = vdwg.mxu0
  %3170 = vmatprep.subr.mxu0 %v2601
  %3171 = vmatpush1.msra.mxu0 %v2600
  %3172 = vmatprep.subr.mxu0 %v2603
  %3173 = vmatpush1.msra.mxu0 %v2602
  %3174 = vmatprep.subr.mxu0 %v2605
  %3175 = vmatpush1.msra.mxu0 %v2604
  %3176 = vmatprep.subr.mxu0 %v2607
  %3177 = vmatpush1.msra.mxu0 %v2606
  %3178 = vmatprep.subr.mxu0 %v2609
  %3179 = vmatpush1.msra.mxu0 %v2608
  %3180 = vmatprep.subr.mxu0 %v2611
  %3181 = vmatpush1.msra.mxu0 %v2610
  %3182 = vmatprep.subr.mxu0 %v2613
  %3183 = vmatpush1.msra.mxu0 %v2612
  %3184 = vmatprep.subr.mxu0 %v2615
  %3185 = vmatpush1.msra.mxu0 %v2614
  %3186 = vmatprep.subr.mxu0 %v2617
  %3187 = vmatpush1.msra.mxu0 %v2616
  %3188 = vmatprep.subr.mxu0 %v2619
  %3189 = vmatpush1.msra.mxu0 %v2618
  %3190 = vmatprep.subr.mxu0 %v2621
  %3191 = vmatpush1.msra.mxu0 %v2620
  %3192 = vmatprep.subr.mxu0 %v2623
  %3193 = vmatpush1.msra.mxu0 %v2622
  %3194 = vmatprep.subr.mxu0 %v2625
  %3195 = vmatpush1.msra.mxu0 %v2624
  %3196 = vmatprep.subr.mxu0 %v2627
  %3197 = vmatpush1.msra.mxu0 %v2626
  %3198 = vmatprep.subr.mxu0 %v2629
  %3199 = vmatpush1.msra.mxu0 %v2628
  %3200 = vmatprep.subr.mxu0 0.0
  %3201 = vmatpush1.msra.mxu0 0.0
  %3202 = vmatprep.subr.mxu0 0.0
  %3203 = vmatpush1.msra.mxu0 0.0
  %3204 = vmatprep.subr.mxu0 0.0
  %3205 = vmatpush1.msra.mxu0 0.0
  %3206 = vmatprep.subr.mxu0 0.0
  %3207 = vmatpush1.msra.mxu0 0.0
  %3208 = vmatprep.subr.mxu0 0.0
  %3209 = vmatpush1.msra.mxu0 0.0
  %3210 = vmatprep.subr.mxu0 0.0
  %3211 = vmatpush1.msra.mxu0 0.0
  %3212 = vmatprep.subr.mxu0 0.0
  %3213 = vmatpush1.msra.mxu0 0.0
  %3214 = vmatprep.subr.mxu0 0.0
  %3215 = vmatpush1.msra.mxu0 0.0
  %3216 = vmatprep.subr.mxu0 0.0
  %3217 = vmatpush1.msra.mxu0 0.0
  %3218 = vmatprep.subr.mxu0 0.0
  %3219 = vmatpush1.msra.mxu0 0.0
  %3220 = vmatprep.subr.mxu0 0.0
  %3221 = vmatpush1.msra.mxu0 0.0
  %3222 = vmatprep.subr.mxu0 0.0
  %3223 = vmatpush1.msra.mxu0 0.0
  %3224 = vmatprep.subr.mxu0 0.0
  %3225 = vmatpush1.msra.mxu0 0.0
  %3226 = vmatprep.subr.mxu0 0.0
  %3227 = vmatpush1.msra.mxu0 0.0
  %3228 = vmatprep.subr.mxu0 0.0
  %3229 = vmatpush1.msra.mxu0 0.0
  %3230 = vmatprep.subr.mxu0 0.0
  %3231 = vmatpush1.msra.mxu0 0.0
  %3232 = vmatprep.subr.mxu0 0.0
  %3233 = vmatpush1.msra.mxu0 0.0
  %3234 = vmatprep.mubr.f32.mxu0 0.0
  %3235 = vmatmul.mubr.f32.gmra.mrb[0].mxu0 %v2401
  %v3236 = vpop.f32.mrb[0].mxu0
  %v3237 = vadd.f32 0.0, %v3236
  %v3238 = vpop.f32.mrb[0].mxu0
  %v3239 = vadd.f32 0.0, %v3238
  %3240 = vmatprep.mubr.f32.mxu0 0.0
  %3241 = vmatmul.mubr.f32.gmra.mrb[0].mxu0 %v2404
  %v3242 = vpop.f32.mrb[0].mxu0
  %v3243 = vadd.f32 0.0, %v3242
  %v3244 = vpop.f32.mrb[0].mxu0
  %v3245 = vadd.f32 0.0, %v3244
  %3246 = vmatprep.mubr.f32.mxu0 0.0
  %3247 = vmatmul.mubr.f32.gmra.mrb[0].mxu0 %v2407
  %v3248 = vpop.f32.mrb[0].mxu0
  %v3249 = vadd.f32 0.0, %v3248
  %v3250 = vpop.f32.mrb[0].mxu0
  %v3251 = vadd.f32 0.0, %v3250
  %3252 = vmatprep.mubr.f32.mxu0 0.0
  %3253 = vmatmul.mubr.f32.gmra.mrb[0].mxu0 %v2762
  %v3254 = vpop.f32.mrb[0].mxu0
  %v3255 = vadd.f32 0.0, %v3254
  %v3256 = vpop.f32.mrb[0].mxu0
  %v3257 = vadd.f32 0.0, %v3256
  %3258 = vdwg.mxu0
  %v3259 = vadd.f32 %v3148, %v3237
  %v3260 = vadd.f32 %v3150, %v3239
  %v3261 = vadd.f32 %v3154, %v3243
  %v3262 = vadd.f32 %v3156, %v3245
  %v3263 = vadd.f32 %v3160, %v3249
  %v3264 = vadd.f32 %v3162, %v3251
  %v3265 = vadd.f32 %v3166, %v3255
  %v3266 = vadd.f32 %v3168, %v3257
  %3267 = vmatprep.subr.mxu0 %v2732
  %3268 = vmatpush1.msra.mxu0 %v2731
  %3269 = vmatprep.subr.mxu0 %v2734
  %3270 = vmatpush1.msra.mxu0 %v2733
  %3271 = vmatprep.subr.mxu0 %v2736
  %3272 = vmatpush1.msra.mxu0 %v2735
  %3273 = vmatprep.subr.mxu0 %v2738
  %3274 = vmatpush1.msra.mxu0 %v2737
  %3275 = vmatprep.subr.mxu0 %v2740
  %3276 = vmatpush1.msra.mxu0 %v2739
  %3277 = vmatprep.subr.mxu0 %v2742
  %3278 = vmatpush1.msra.mxu0 %v2741
  %3279 = vmatprep.subr.mxu0 %v2744
  %3280 = vmatpush1.msra.mxu0 %v2743
  %3281 = vmatprep.subr.mxu0 %v2746
  %3282 = vmatpush1.msra.mxu0 %v2745
  %3283 = vmatprep.subr.mxu0 %v2748
  %3284 = vmatpush1.msra.mxu0 %v2747
  %3285 = vmatprep.subr.mxu0 %v2750
  %3286 = vmatpush1.msra.mxu0 %v2749
  %3287 = vmatprep.subr.mxu0 %v2752
  %3288 = vmatpush1.msra.mxu0 %v2751
  %3289 = vmatprep.subr.mxu0 %v2754
  %3290 = vmatpush1.msra.mxu0 %v2753
  %3291 = vmatprep.subr.mxu0 %v2756
  %3292 = vmatpush1.msra.mxu0 %v2755
  %3293 = vmatprep.subr.mxu0 %v2758
  %3294 = vmatpush1.msra.mxu0 %v2757
  %3295 = vmatprep.subr.mxu0 %v2760
  %3296 = vmatpush1.msra.mxu0 %v2759
  %3297 = vmatprep.subr.mxu0 0.0
  %3298 = vmatpush1.msra.mxu0 0.0
  %3299 = vmatprep.subr.mxu0 0.0
  %3300 = vmatpush1.msra.mxu0 0.0
  %3301 = vmatprep.subr.mxu0 0.0
  %3302 = vmatpush1.msra.mxu0 0.0
  %3303 = vmatprep.subr.mxu0 0.0
  %3304 = vmatpush1.msra.mxu0 0.0
  %3305 = vmatprep.subr.mxu0 0.0
  %3306 = vmatpush1.msra.mxu0 0.0
  %3307 = vmatprep.subr.mxu0 0.0
  %3308 = vmatpush1.msra.mxu0 0.0
  %3309 = vmatprep.subr.mxu0 0.0
  %3310 = vmatpush1.msra.mxu0 0.0
  %3311 = vmatprep.subr.mxu0 0.0
  %3312 = vmatpush1.msra.mxu0 0.0
  %3313 = vmatprep.subr.mxu0 0.0
  %3314 = vmatpush1.msra.mxu0 0.0
  %3315 = vmatprep.subr.mxu0 0.0
  %3316 = vmatpush1.msra.mxu0 0.0
  %3317 = vmatprep.subr.mxu0 0.0
  %3318 = vmatpush1.msra.mxu0 0.0
  %3319 = vmatprep.subr.mxu0 0.0
  %3320 = vmatpush1.msra.mxu0 0.0
  %3321 = vmatprep.subr.mxu0 0.0
  %3322 = vmatpush1.msra.mxu0 0.0
  %3323 = vmatprep.subr.mxu0 0.0
  %3324 = vmatpush1.msra.mxu0 0.0
  %3325 = vmatprep.subr.mxu0 0.0
  %3326 = vmatpush1.msra.mxu0 0.0
  %3327 = vmatprep.subr.mxu0 0.0
  %3328 = vmatpush1.msra.mxu0 0.0
  %3329 = vmatprep.subr.mxu0 0.0
  %3330 = vmatpush1.msra.mxu0 0.0
  %3331 = vmatprep.mubr.f32.mxu0 0.0
  %3332 = vmatmul.mubr.f32.gmra.mrb[0].mxu0 %v2505
  %v3333 = vpop.f32.mrb[0].mxu0
  %v3334 = vadd.f32 0.0, %v3333
  %v3335 = vpop.f32.mrb[0].mxu0
  %v3336 = vadd.f32 0.0, %v3335
  %3337 = vmatprep.mubr.f32.mxu0 0.0
  %3338 = vmatmul.mubr.f32.gmra.mrb[0].mxu0 %v2508
  %v3339 = vpop.f32.mrb[0].mxu0
  %v3340 = vadd.f32 0.0, %v3339
  %v3341 = vpop.f32.mrb[0].mxu0
  %v3342 = vadd.f32 0.0, %v3341
  %3343 = vmatprep.mubr.f32.mxu0 0.0
  %3344 = vmatmul.mubr.f32.gmra.mrb[0].mxu0 %v2631
  %v3345 = vpop.f32.mrb[0].mxu0
  %v3346 = vadd.f32 0.0, %v3345
  %v3347 = vpop.f32.mrb[0].mxu0
  %v3348 = vadd.f32 0.0, %v3347
  %3349 = vmatprep.mubr.f32.mxu0 0.0
  %3350 = vmatmul.mubr.f32.gmra.mrb[0].mxu0 %v2893
  %v3351 = vpop.f32.mrb[0].mxu0
  %v3352 = vadd.f32 0.0, %v3351
  %v3353 = vpop.f32.mrb[0].mxu0
  %v3354 = vadd.f32 0.0, %v3353
  %3355 = vdwg.mxu0
  %v3356 = vadd.f32 %v3259, %v3334
  %v3357 = vadd.f32 %v3260, %v3336
  %v3358 = vadd.f32 %v3261, %v3340
  %v3359 = vadd.f32 %v3262, %v3342
  %v3360 = vadd.f32 %v3263, %v3346
  %v3361 = vadd.f32 %v3264, %v3348
  %v3362 = vadd.f32 %v3265, %v3352
  %v3363 = vadd.f32 %v3266, %v3354
  %v3365 = vsel %vm2396, %v2334, 0
  %3367 = vmatprep.subr.mxu0 %v2863
  %3368 = vmatpush1.msra.mxu0 %v2862
  %3369 = vmatprep.subr.mxu0 %v2865
  %3370 = vmatpush1.msra.mxu0 %v2864
  %3371 = vmatprep.subr.mxu0 %v2867
  %3372 = vmatpush1.msra.mxu0 %v2866
  %3373 = vmatprep.subr.mxu0 %v2869
  %3374 = vmatpush1.msra.mxu0 %v2868
  %3375 = vmatprep.subr.mxu0 %v2871
  %3376 = vmatpush1.msra.mxu0 %v2870
  %3377 = vmatprep.subr.mxu0 %v2873
  %3378 = vmatpush1.msra.mxu0 %v2872
  %3379 = vmatprep.subr.mxu0 %v2875
  %3380 = vmatpush1.msra.mxu0 %v2874
  %3381 = vmatprep.subr.mxu0 %v2877
  %3382 = vmatpush1.msra.mxu0 %v2876
  %3383 = vmatprep.subr.mxu0 %v2879
  %3384 = vmatpush1.msra.mxu0 %v2878
  %3385 = vmatprep.subr.mxu0 %v2881
  %3386 = vmatpush1.msra.mxu0 %v2880
  %3387 = vmatprep.subr.mxu0 %v2883
  %3388 = vmatpush1.msra.mxu0 %v2882
  %3389 = vmatprep.subr.mxu0 %v2885
  %3390 = vmatpush1.msra.mxu0 %v2884
  %3391 = vmatprep.subr.mxu0 %v2887
  %3392 = vmatpush1.msra.mxu0 %v2886
  %3393 = vmatprep.subr.mxu0 %v2889
  %3394 = vmatpush1.msra.mxu0 %v2888
  %3395 = vmatprep.subr.mxu0 %v2891
  %3396 = vmatpush1.msra.mxu0 %v2890
  %3397 = vmatprep.subr.mxu0 0.0
  %3398 = vmatpush1.msra.mxu0 0.0
  %3399 = vmatprep.subr.mxu0 0.0
  %3400 = vmatpush1.msra.mxu0 0.0
  %3401 = vmatprep.subr.mxu0 0.0
  %3402 = vmatpush1.msra.mxu0 0.0
  %3403 = vmatprep.subr.mxu0 0.0
  %3404 = vmatpush1.msra.mxu0 0.0
  %3405 = vmatprep.subr.mxu0 0.0
  %3406 = vmatpush1.msra.mxu0 0.0
  %3407 = vmatprep.subr.mxu0 0.0
  %3408 = vmatpush1.msra.mxu0 0.0
  %3409 = vmatprep.subr.mxu0 0.0
  %3410 = vmatpush1.msra.mxu0 0.0
  %3411 = vmatprep.subr.mxu0 0.0
  %3412 = vmatpush1.msra.mxu0 0.0
  %3413 = vmatprep.subr.mxu0 0.0
  %3414 = vmatpush1.msra.mxu0 0.0
  %3415 = vmatprep.subr.mxu0 0.0
  %3416 = vmatpush1.msra.mxu0 0.0
  %3417 = vmatprep.subr.mxu0 0.0
  %3418 = vmatpush1.msra.mxu0 0.0
  %3419 = vmatprep.subr.mxu0 0.0
  %3420 = vmatpush1.msra.mxu0 0.0
  %3421 = vmatprep.subr.mxu0 0.0
  %3422 = vmatpush1.msra.mxu0 0.0
  %3423 = vmatprep.subr.mxu0 0.0
  %3424 = vmatpush1.msra.mxu0 0.0
  %3425 = vmatprep.subr.mxu0 0.0
  %3426 = vmatpush1.msra.mxu0 0.0
  %3427 = vmatprep.subr.mxu0 0.0
  %3428 = vmatpush1.msra.mxu0 0.0
  %3429 = vmatprep.subr.mxu0 0.0
  %3430 = vmatpush1.msra.mxu0 0.0
  %3431 = vmatprep.mubr.f32.mxu0 0.0
  %3432 = vmatmul.mubr.f32.gmra.mrb[0].mxu0 %v2404
  %v3433 = vpop.f32.mrb[0].mxu0
  %v3434 = vadd.f32 0.0, %v3433
  %v3435 = vpop.f32.mrb[0].mxu0
  %v3436 = vadd.f32 0.0, %v3435
  %3437 = vmatprep.mubr.f32.mxu0 0.0
  %3438 = vmatmul.mubr.f32.gmra.mrb[0].mxu0 %v2407
  %v3439 = vpop.f32.mrb[0].mxu0
  %v3440 = vadd.f32 0.0, %v3439
  %v3441 = vpop.f32.mrb[0].mxu0
  %v3442 = vadd.f32 0.0, %v3441
  %3443 = vmatprep.mubr.f32.mxu0 0.0
  %3444 = vmatmul.mubr.f32.gmra.mrb[0].mxu0 %v2762
  %v3445 = vpop.f32.mrb[0].mxu0
  %v3446 = vadd.f32 0.0, %v3445
  %v3447 = vpop.f32.mrb[0].mxu0
  %v3448 = vadd.f32 0.0, %v3447
  %3449 = vmatprep.mubr.f32.mxu0 0.0
  %3450 = vmatmul.mubr.f32.gmra.mrb[0].mxu0 %v3365
  %v3451 = vpop.f32.mrb[0].mxu0
  %v3452 = vadd.f32 0.0, %v3451
  %v3453 = vpop.f32.mrb[0].mxu0
  %v3454 = vadd.f32 0.0, %v3453
  %3455 = vdwg.mxu0
  %v3456 = vadd.f32 %v3356, %v3434
  %v3457 = vadd.f32 %v3357, %v3436
  %v3458 = vadd.f32 %v3358, %v3440
  %v3459 = vadd.f32 %v3359, %v3442
  %v3460 = vadd.f32 %v3360, %v3446
  %v3461 = vadd.f32 %v3361, %v3448
  %v3462 = vadd.f32 %v3362, %v3452
  %v3463 = vadd.f32 %v3363, %v3454
  %v3464 = vmax.f32 %v2984, %v3456
  %v3465 = vmax.f32 %v2985, %v3457
  %v3466 = vmax.f32 %v2986, %v3458
  %v3467 = vmax.f32 %v2987, %v3459
  %v3468 = vmax.f32 %v2988, %v3460
  %v3469 = vmax.f32 %v2989, %v3461
  %v3470 = vmax.f32 %v2990, %v3462
  %v3471 = vmax.f32 %v2991, %v3463
  %3480 = vrot.lane.b32.xlu0 %v3464, 48
  %v3481 = vpop.permute.xlu0 %3480
  %3482 = vrot.lane.b32.xlu0 %v3465, 48
  %v3483 = vpop.permute.xlu0 %3482
  %3484 = vrot.lane.b32.xlu0 %v3466, 48
  %v3485 = vpop.permute.xlu0 %3484
  %3486 = vrot.lane.b32.xlu0 %v3467, 48
  %v3487 = vpop.permute.xlu0 %3486
  %3488 = vrot.lane.b32.xlu0 %v3468, 48
  %v3489 = vpop.permute.xlu0 %3488
  %3490 = vrot.lane.b32.xlu0 %v3469, 48
  %v3491 = vpop.permute.xlu0 %3490
  %3492 = vrot.lane.b32.xlu0 %v3470, 48
  %v3493 = vpop.permute.xlu0 %3492
  %3494 = vrot.lane.b32.xlu0 %v3471, 48
  %v3495 = vpop.permute.xlu0 %3494
  %vm3496 = vcmask 392192
  %v3497 = vsel %vm3496, %v3481, %v3483
  %v3498 = vsel %vm3496, %v3485, %v3487
  %v3499 = vsel %vm3496, %v3489, %v3491
  %v3500 = vsel %vm3496, %v3493, %v3495
  %v3505 = vmax.f32 %v3464, %v3497
  %v3506 = vmax.f32 %v3466, %v3498
  %v3507 = vmax.f32 %v3468, %v3499
  %v3508 = vmax.f32 %v3470, %v3500
  %v3509 = vld [vmem:[%s4] sm:$0x1]
  %v3511 = vlaneseq
  %v3512 = vshrl.u32 %v3511, 7
  %v3513 = vsub.s32 0, %v3512
  %v3514 = vrot.slane %v3509, %v3513
  %v3516 = vadd.f32 %v3505, %v3514
  %v3517 = vadd.f32 %v3506, %v3514
  %v3518 = vadd.f32 %v3507, %v3514
  %v3519 = vadd.f32 %v3508, %v3514
  %v3520 = vmax.f32 %v3516, 0.0
  %v3521 = vmax.f32 %v3517, 0.0
  %v3522 = vmax.f32 %v3518, 0.0
  %v3523 = vmax.f32 %v3519, 0.0
  %v3524 = vld [vmem:[%s5] sm:$0xff]
  %v3525 = vld [vmem:[%s5 + $0x8] sm:$0xff]
  %v3526 = vld [vmem:[%s5 + $0x10] sm:$0xff]
  %v3527 = vld [vmem:[%s5 + $0x18] sm:$0xff]
  %v3528 = vld [vmem:[%s5 + $0x20] sm:$0xff]
  %v3529 = vld [vmem:[%s5 + $0x28] sm:$0xff]
  %v3530 = vld [vmem:[%s5 + $0x30] sm:$0xff]
  %v3531 = vld [vmem:[%s5 + $0x38] sm:$0xff]
  %v3532 = vld [vmem:[%s5 + $0x40] sm:$0xff]
  %v3533 = vld [vmem:[%s5 + $0x48] sm:$0xff]
  %s3534 = scalar_lea.vmem %s5, 80
  %v3535 = vld [vmem:[%s3534] sm:$0xff]
  %v3536 = vld [vmem:[%s3534 + $0x8] sm:$0xff]
  %v3537 = vld [vmem:[%s3534 + $0x10] sm:$0xff]
  %v3538 = vld [vmem:[%s3534 + $0x18] sm:$0xff]
  %v3539 = vld [vmem:[%s3534 + $0x20] sm:$0xff]
  %v3540 = vld [vmem:[%s3534 + $0x28] sm:$0xff]
  %v3541 = vld [vmem:[%s3534 + $0x30] sm:$0xff]
  %v3542 = vld [vmem:[%s3534 + $0x38] sm:$0xff]
  %v3543 = vld [vmem:[%s3534 + $0x40] sm:$0xff]
  %v3544 = vld [vmem:[%s3534 + $0x48] sm:$0xff]
  %vm3545 = vcmask 654336
  %v3547 = vsel %vm3545, %v3521, 0
  %3549 = vmatprep.subr.mxu0 0.0
  %3550 = vmatpush1.msra.mxu0 %v3535
  %3551 = vmatprep.subr.mxu0 0.0
  %3552 = vmatpush1.msra.mxu0 %v3536
  %3553 = vmatprep.subr.mxu0 0.0
  %3554 = vmatpush1.msra.mxu0 %v3537
  %3555 = vmatprep.subr.mxu0 0.0
  %3556 = vmatpush1.msra.mxu0 %v3538
  %3557 = vmatprep.subr.mxu0 0.0
  %3558 = vmatpush1.msra.mxu0 %v3539
  %3559 = vmatprep.subr.mxu0 0.0
  %3560 = vmatpush1.msra.mxu0 %v3540
  %3561 = vmatprep.subr.mxu0 0.0
  %3562 = vmatpush1.msra.mxu0 %v3541
  %3563 = vmatprep.subr.mxu0 0.0
  %3564 = vmatpush1.msra.mxu0 %v3542
  %3565 = vmatprep.subr.mxu0 0.0
  %3566 = vmatpush1.msra.mxu0 %v3543
  %3567 = vmatprep.subr.mxu0 0.0
  %3568 = vmatpush1.msra.mxu0 %v3544
  %3569 = vmatprep.subr.mxu0 0.0
  %3570 = vmatpush1.msra.mxu0 0.0
  %3571 = vmatprep.subr.mxu0 0.0
  %3572 = vmatpush1.msra.mxu0 0.0
  %3573 = vmatprep.subr.mxu0 0.0
  %3574 = vmatpush1.msra.mxu0 0.0
  %3575 = vmatprep.subr.mxu0 0.0
  %3576 = vmatpush1.msra.mxu0 0.0
  %3577 = vmatprep.subr.mxu0 0.0
  %3578 = vmatpush1.msra.mxu0 0.0
  %3579 = vmatprep.subr.mxu0 0.0
  %3580 = vmatpush1.msra.mxu0 0.0
  %3581 = vmatprep.subr.mxu0 0.0
  %3582 = vmatpush1.msra.mxu0 0.0
  %3583 = vmatprep.subr.mxu0 0.0
  %3584 = vmatpush1.msra.mxu0 0.0
  %3585 = vmatprep.subr.mxu0 0.0
  %3586 = vmatpush1.msra.mxu0 0.0
  %3587 = vmatprep.subr.mxu0 0.0
  %3588 = vmatpush1.msra.mxu0 0.0
  %3589 = vmatprep.subr.mxu0 0.0
  %3590 = vmatpush1.msra.mxu0 0.0
  %3591 = vmatprep.subr.mxu0 0.0
  %3592 = vmatpush1.msra.mxu0 0.0
  %3593 = vmatprep.subr.mxu0 0.0
  %3594 = vmatpush1.msra.mxu0 0.0
  %3595 = vmatprep.subr.mxu0 0.0
  %3596 = vmatpush1.msra.mxu0 0.0
  %3597 = vmatprep.subr.mxu0 0.0
  %3598 = vmatpush1.msra.mxu0 0.0
  %3599 = vmatprep.subr.mxu0 0.0
  %3600 = vmatpush1.msra.mxu0 0.0
  %3601 = vmatprep.subr.mxu0 0.0
  %3602 = vmatpush1.msra.mxu0 0.0
  %3603 = vmatprep.subr.mxu0 0.0
  %3604 = vmatpush1.msra.mxu0 0.0
  %3605 = vmatprep.subr.mxu0 0.0
  %3606 = vmatpush1.msra.mxu0 0.0
  %3607 = vmatprep.subr.mxu0 0.0
  %3608 = vmatpush1.msra.mxu0 0.0
  %3609 = vmatprep.subr.mxu0 0.0
  %3610 = vmatpush1.msra.mxu0 0.0
  %3611 = vmatprep.subr.mxu0 0.0
  %3612 = vmatpush1.msra.mxu0 0.0
  %3613 = vmatprep.mubr.f32.mxu0 0.0
  %3614 = vmatmul.mubr.f32.gmra.mrb[0].mxu0 %v3547
  %v3615 = vpop.f32.mrb[0].mxu0
  %v3616 = vadd.f32 0.0, %v3615
  %v3617 = vpop.f32.mrb[0].mxu0
  %3618 = vdwg.mxu0
  %v3620 = vsel %vm3545, %v3520, 0
  %3622 = vmatprep.subr.mxu0 0.0
  %3623 = vmatpush1.msra.mxu0 %v3524
  %3624 = vmatprep.subr.mxu0 0.0
  %3625 = vmatpush1.msra.mxu0 %v3525
  %3626 = vmatprep.subr.mxu0 0.0
  %3627 = vmatpush1.msra.mxu0 %v3526
  %3628 = vmatprep.subr.mxu0 0.0
  %3629 = vmatpush1.msra.mxu0 %v3527
  %3630 = vmatprep.subr.mxu0 0.0
  %3631 = vmatpush1.msra.mxu0 %v3528
  %3632 = vmatprep.subr.mxu0 0.0
  %3633 = vmatpush1.msra.mxu0 %v3529
  %3634 = vmatprep.subr.mxu0 0.0
  %3635 = vmatpush1.msra.mxu0 %v3530
  %3636 = vmatprep.subr.mxu0 0.0
  %3637 = vmatpush1.msra.mxu0 %v3531
  %3638 = vmatprep.subr.mxu0 0.0
  %3639 = vmatpush1.msra.mxu0 %v3532
  %3640 = vmatprep.subr.mxu0 0.0
  %3641 = vmatpush1.msra.mxu0 %v3533
  %3642 = vmatprep.subr.mxu0 0.0
  %3643 = vmatpush1.msra.mxu0 0.0
  %3644 = vmatprep.subr.mxu0 0.0
  %3645 = vmatpush1.msra.mxu0 0.0
  %3646 = vmatprep.subr.mxu0 0.0
  %3647 = vmatpush1.msra.mxu0 0.0
  %3648 = vmatprep.subr.mxu0 0.0
  %3649 = vmatpush1.msra.mxu0 0.0
  %3650 = vmatprep.subr.mxu0 0.0
  %3651 = vmatpush1.msra.mxu0 0.0
  %3652 = vmatprep.subr.mxu0 0.0
  %3653 = vmatpush1.msra.mxu0 0.0
  %3654 = vmatprep.subr.mxu0 0.0
  %3655 = vmatpush1.msra.mxu0 0.0
  %3656 = vmatprep.subr.mxu0 0.0
  %3657 = vmatpush1.msra.mxu0 0.0
  %3658 = vmatprep.subr.mxu0 0.0
  %3659 = vmatpush1.msra.mxu0 0.0
  %3660 = vmatprep.subr.mxu0 0.0
  %3661 = vmatpush1.msra.mxu0 0.0
  %3662 = vmatprep.subr.mxu0 0.0
  %3663 = vmatpush1.msra.mxu0 0.0
  %3664 = vmatprep.subr.mxu0 0.0
  %3665 = vmatpush1.msra.mxu0 0.0
  %3666 = vmatprep.subr.mxu0 0.0
  %3667 = vmatpush1.msra.mxu0 0.0
  %3668 = vmatprep.subr.mxu0 0.0
  %3669 = vmatpush1.msra.mxu0 0.0
  %3670 = vmatprep.subr.mxu0 0.0
  %3671 = vmatpush1.msra.mxu0 0.0
  %3672 = vmatprep.subr.mxu0 0.0
  %3673 = vmatpush1.msra.mxu0 0.0
  %3674 = vmatprep.subr.mxu0 0.0
  %3675 = vmatpush1.msra.mxu0 0.0
  %3676 = vmatprep.subr.mxu0 0.0
  %3677 = vmatpush1.msra.mxu0 0.0
  %3678 = vmatprep.subr.mxu0 0.0
  %3679 = vmatpush1.msra.mxu0 0.0
  %3680 = vmatprep.subr.mxu0 0.0
  %3681 = vmatpush1.msra.mxu0 0.0
  %3682 = vmatprep.subr.mxu0 0.0
  %3683 = vmatpush1.msra.mxu0 0.0
  %3684 = vmatprep.subr.mxu0 0.0
  %3685 = vmatpush1.msra.mxu0 0.0
  %3686 = vmatprep.mubr.f32.mxu0 0.0
  %3687 = vmatmul.mubr.f32.gmra.mrb[0].mxu0 %v3620
  %v3688 = vpop.f32.mrb[0].mxu0
  %v3689 = vadd.f32 %v3616, %v3688
  %v3690 = vpop.f32.mrb[0].mxu0
  %3691 = vdwg.mxu0
  %s3692 = scalar_lea.vmem %s5, 160
  %v3693 = vld [vmem:[%s3692] sm:$0xff]
  %v3694 = vld [vmem:[%s3692 + $0x8] sm:$0xff]
  %v3695 = vld [vmem:[%s3692 + $0x10] sm:$0xff]
  %v3696 = vld [vmem:[%s3692 + $0x18] sm:$0xff]
  %v3697 = vld [vmem:[%s3692 + $0x20] sm:$0xff]
  %v3698 = vld [vmem:[%s3692 + $0x28] sm:$0xff]
  %v3699 = vld [vmem:[%s3692 + $0x30] sm:$0xff]
  %v3700 = vld [vmem:[%s3692 + $0x38] sm:$0xff]
  %v3701 = vld [vmem:[%s3692 + $0x40] sm:$0xff]
  %v3702 = vld [vmem:[%s3692 + $0x48] sm:$0xff]
  %v3704 = vsel %vm3545, %v3522, 0
  %3706 = vmatprep.subr.mxu0 0.0
  %3707 = vmatpush1.msra.mxu0 %v3693
  %3708 = vmatprep.subr.mxu0 0.0
  %3709 = vmatpush1.msra.mxu0 %v3694
  %3710 = vmatprep.subr.mxu0 0.0
  %3711 = vmatpush1.msra.mxu0 %v3695
  %3712 = vmatprep.subr.mxu0 0.0
  %3713 = vmatpush1.msra.mxu0 %v3696
  %3714 = vmatprep.subr.mxu0 0.0
  %3715 = vmatpush1.msra.mxu0 %v3697
  %3716 = vmatprep.subr.mxu0 0.0
  %3717 = vmatpush1.msra.mxu0 %v3698
  %3718 = vmatprep.subr.mxu0 0.0
  %3719 = vmatpush1.msra.mxu0 %v3699
  %3720 = vmatprep.subr.mxu0 0.0
  %3721 = vmatpush1.msra.mxu0 %v3700
  %3722 = vmatprep.subr.mxu0 0.0
  %3723 = vmatpush1.msra.mxu0 %v3701
  %3724 = vmatprep.subr.mxu0 0.0
  %3725 = vmatpush1.msra.mxu0 %v3702
  %3726 = vmatprep.subr.mxu0 0.0
  %3727 = vmatpush1.msra.mxu0 0.0
  %3728 = vmatprep.subr.mxu0 0.0
  %3729 = vmatpush1.msra.mxu0 0.0
  %3730 = vmatprep.subr.mxu0 0.0
  %3731 = vmatpush1.msra.mxu0 0.0
  %3732 = vmatprep.subr.mxu0 0.0
  %3733 = vmatpush1.msra.mxu0 0.0
  %3734 = vmatprep.subr.mxu0 0.0
  %3735 = vmatpush1.msra.mxu0 0.0
  %3736 = vmatprep.subr.mxu0 0.0
  %3737 = vmatpush1.msra.mxu0 0.0
  %3738 = vmatprep.subr.mxu0 0.0
  %3739 = vmatpush1.msra.mxu0 0.0
  %3740 = vmatprep.subr.mxu0 0.0
  %3741 = vmatpush1.msra.mxu0 0.0
  %3742 = vmatprep.subr.mxu0 0.0
  %3743 = vmatpush1.msra.mxu0 0.0
  %3744 = vmatprep.subr.mxu0 0.0
  %3745 = vmatpush1.msra.mxu0 0.0
  %3746 = vmatprep.subr.mxu0 0.0
  %3747 = vmatpush1.msra.mxu0 0.0
  %3748 = vmatprep.subr.mxu0 0.0
  %3749 = vmatpush1.msra.mxu0 0.0
  %3750 = vmatprep.subr.mxu0 0.0
  %3751 = vmatpush1.msra.mxu0 0.0
  %3752 = vmatprep.subr.mxu0 0.0
  %3753 = vmatpush1.msra.mxu0 0.0
  %3754 = vmatprep.subr.mxu0 0.0
  %3755 = vmatpush1.msra.mxu0 0.0
  %3756 = vmatprep.subr.mxu0 0.0
  %3757 = vmatpush1.msra.mxu0 0.0
  %3758 = vmatprep.subr.mxu0 0.0
  %3759 = vmatpush1.msra.mxu0 0.0
  %3760 = vmatprep.subr.mxu0 0.0
  %3761 = vmatpush1.msra.mxu0 0.0
  %3762 = vmatprep.subr.mxu0 0.0
  %3763 = vmatpush1.msra.mxu0 0.0
  %3764 = vmatprep.subr.mxu0 0.0
  %3765 = vmatpush1.msra.mxu0 0.0
  %3766 = vmatprep.subr.mxu0 0.0
  %3767 = vmatpush1.msra.mxu0 0.0
  %3768 = vmatprep.subr.mxu0 0.0
  %3769 = vmatpush1.msra.mxu0 0.0
  %3770 = vmatprep.mubr.f32.mxu0 0.0
  %3771 = vmatmul.mubr.f32.gmra.mrb[0].mxu0 %v3704
  %v3772 = vpop.f32.mrb[0].mxu0
  %v3773 = vadd.f32 0.0, %v3772
  %v3774 = vpop.f32.mrb[0].mxu0
  %3775 = vdwg.mxu0
  %v3776 = vadd.f32 %v3689, %v3773
  %s3777 = scalar_lea.vmem %s5, 240
  %v3778 = vld [vmem:[%s3777] sm:$0xff]
  %v3779 = vld [vmem:[%s3777 + $0x8] sm:$0xff]
  %v3780 = vld [vmem:[%s3777 + $0x10] sm:$0xff]
  %v3781 = vld [vmem:[%s3777 + $0x18] sm:$0xff]
  %v3782 = vld [vmem:[%s3777 + $0x20] sm:$0xff]
  %v3783 = vld [vmem:[%s3777 + $0x28] sm:$0xff]
  %v3784 = vld [vmem:[%s3777 + $0x30] sm:$0xff]
  %v3785 = vld [vmem:[%s3777 + $0x38] sm:$0xff]
  %v3786 = vld [vmem:[%s3777 + $0x40] sm:$0xff]
  %v3787 = vld [vmem:[%s3777 + $0x48] sm:$0xff]
  %v3789 = vsel %vm3545, %v3523, 0
  %3791 = vmatprep.subr.mxu0 0.0
  %3792 = vmatpush1.msra.mxu0 %v3778
  %3793 = vmatprep.subr.mxu0 0.0
  %3794 = vmatpush1.msra.mxu0 %v3779
  %3795 = vmatprep.subr.mxu0 0.0
  %3796 = vmatpush1.msra.mxu0 %v3780
  %3797 = vmatprep.subr.mxu0 0.0
  %3798 = vmatpush1.msra.mxu0 %v3781
  %3799 = vmatprep.subr.mxu0 0.0
  %3800 = vmatpush1.msra.mxu0 %v3782
  %3801 = vmatprep.subr.mxu0 0.0
  %3802 = vmatpush1.msra.mxu0 %v3783
  %3803 = vmatprep.subr.mxu0 0.0
  %3804 = vmatpush1.msra.mxu0 %v3784
  %3805 = vmatprep.subr.mxu0 0.0
  %3806 = vmatpush1.msra.mxu0 %v3785
  %3807 = vmatprep.subr.mxu0 0.0
  %3808 = vmatpush1.msra.mxu0 %v3786
  %3809 = vmatprep.subr.mxu0 0.0
  %3810 = vmatpush1.msra.mxu0 %v3787
  %3811 = vmatprep.subr.mxu0 0.0
  %3812 = vmatpush1.msra.mxu0 0.0
  %3813 = vmatprep.subr.mxu0 0.0
  %3814 = vmatpush1.msra.mxu0 0.0
  %3815 = vmatprep.subr.mxu0 0.0
  %3816 = vmatpush1.msra.mxu0 0.0
  %3817 = vmatprep.subr.mxu0 0.0
  %3818 = vmatpush1.msra.mxu0 0.0
  %3819 = vmatprep.subr.mxu0 0.0
  %3820 = vmatpush1.msra.mxu0 0.0
  %3821 = vmatprep.subr.mxu0 0.0
  %3822 = vmatpush1.msra.mxu0 0.0
  %3823 = vmatprep.subr.mxu0 0.0
  %3824 = vmatpush1.msra.mxu0 0.0
  %3825 = vmatprep.subr.mxu0 0.0
  %3826 = vmatpush1.msra.mxu0 0.0
  %3827 = vmatprep.subr.mxu0 0.0
  %3828 = vmatpush1.msra.mxu0 0.0
  %3829 = vmatprep.subr.mxu0 0.0
  %3830 = vmatpush1.msra.mxu0 0.0
  %3831 = vmatprep.subr.mxu0 0.0
  %3832 = vmatpush1.msra.mxu0 0.0
  %3833 = vmatprep.subr.mxu0 0.0
  %3834 = vmatpush1.msra.mxu0 0.0
  %3835 = vmatprep.subr.mxu0 0.0
  %3836 = vmatpush1.msra.mxu0 0.0
  %3837 = vmatprep.subr.mxu0 0.0
  %3838 = vmatpush1.msra.mxu0 0.0
  %3839 = vmatprep.subr.mxu0 0.0
  %3840 = vmatpush1.msra.mxu0 0.0
  %3841 = vmatprep.subr.mxu0 0.0
  %3842 = vmatpush1.msra.mxu0 0.0
  %3843 = vmatprep.subr.mxu0 0.0
  %3844 = vmatpush1.msra.mxu0 0.0
  %3845 = vmatprep.subr.mxu0 0.0
  %3846 = vmatpush1.msra.mxu0 0.0
  %3847 = vmatprep.subr.mxu0 0.0
  %3848 = vmatpush1.msra.mxu0 0.0
  %3849 = vmatprep.subr.mxu0 0.0
  %3850 = vmatpush1.msra.mxu0 0.0
  %3851 = vmatprep.subr.mxu0 0.0
  %3852 = vmatpush1.msra.mxu0 0.0
  %3853 = vmatprep.subr.mxu0 0.0
  %3854 = vmatpush1.msra.mxu0 0.0
  %3855 = vmatprep.mubr.f32.mxu0 0.0
  %3856 = vmatmul.mubr.f32.gmra.mrb[0].mxu0 %v3789
  %v3857 = vpop.f32.mrb[0].mxu0
  %v3858 = vadd.f32 0.0, %v3857
  %v3859 = vpop.f32.mrb[0].mxu0
  %3860 = vdwg.mxu0
  %v3861 = vadd.f32 %v3776, %v3858
  %v3862 = vld [vmem:[%s6] sm:$0x1]
  %v3864 = vlaneseq
  %v3865 = vshrl.u32 %v3864, 7
  %v3866 = vsub.s32 0, %v3865
  %v3867 = vrot.slane %v3862, %v3866
  %v3869 = vadd.f32 %v3861, %v3867
  %v3870 = vmax.f32 %v3869, 0.0
  %v3871 = vld [vmem:[%s7] sm:$0xff]
  %v3872 = vld [vmem:[%s7 + $0x8] sm:$0xff]
  %v3873 = vld [vmem:[%s7 + $0x10] sm:$0xff]
  %v3874 = vld [vmem:[%s7 + $0x18] sm:$0xff]
  %v3875 = vld [vmem:[%s7 + $0x20] sm:$0xff]
  %v3876 = vld [vmem:[%s7 + $0x28] sm:$0xff]
  %v3877 = vld [vmem:[%s7 + $0x30] sm:$0xff]
  %v3878 = vld [vmem:[%s7 + $0x38] sm:$0xff]
  %v3879 = vld [vmem:[%s7 + $0x40] sm:$0xff]
  %v3880 = vld [vmem:[%s7 + $0x48] sm:$0xff]
  %v3881 = vld [vmem:[%s7 + $0x50] sm:$0xff]
  %v3882 = vld [vmem:[%s7 + $0x58] sm:$0xff]
  %v3883 = vld [vmem:[%s7 + $0x60] sm:$0xf]
  %v3884 = vld [vmem:[%s8] sm:$0x1]
  %v3886 = vlaneseq
  %v3887 = vshrl.u32 %v3886, 7
  %v3888 = vsub.s32 0, %v3887
  %v3889 = vrot.slane %v3884, %v3888
  %vm3891 = vcmask 818176
  %v3893 = vsel %vm3891, %v3870, 0
  %v3896 = vsel %vm199, %v3883, 0
  %3898 = vmatprep.subr.mxu0 0.0
  %3899 = vmatpush1.msra.mxu0 %v3871
  %3900 = vmatprep.subr.mxu0 0.0
  %3901 = vmatpush1.msra.mxu0 %v3872
  %3902 = vmatprep.subr.mxu0 0.0
  %3903 = vmatpush1.msra.mxu0 %v3873
  %3904 = vmatprep.subr.mxu0 0.0
  %3905 = vmatpush1.msra.mxu0 %v3874
  %3906 = vmatprep.subr.mxu0 0.0
  %3907 = vmatpush1.msra.mxu0 %v3875
  %3908 = vmatprep.subr.mxu0 0.0
  %3909 = vmatpush1.msra.mxu0 %v3876
  %3910 = vmatprep.subr.mxu0 0.0
  %3911 = vmatpush1.msra.mxu0 %v3877
  %3912 = vmatprep.subr.mxu0 0.0
  %3913 = vmatpush1.msra.mxu0 %v3878
  %3914 = vmatprep.subr.mxu0 0.0
  %3915 = vmatpush1.msra.mxu0 %v3879
  %3916 = vmatprep.subr.mxu0 0.0
  %3917 = vmatpush1.msra.mxu0 %v3880
  %3918 = vmatprep.subr.mxu0 0.0
  %3919 = vmatpush1.msra.mxu0 %v3881
  %3920 = vmatprep.subr.mxu0 0.0
  %3921 = vmatpush1.msra.mxu0 %v3882
  %3922 = vmatprep.subr.mxu0 0.0
  %3923 = vmatpush1.msra.mxu0 %v3896
  %3924 = vmatprep.subr.mxu0 0.0
  %3925 = vmatpush1.msra.mxu0 0.0
  %3926 = vmatprep.subr.mxu0 0.0
  %3927 = vmatpush1.msra.mxu0 0.0
  %3928 = vmatprep.subr.mxu0 0.0
  %3929 = vmatpush1.msra.mxu0 0.0
  %3930 = vmatprep.subr.mxu0 0.0
  %3931 = vmatpush1.msra.mxu0 0.0
  %3932 = vmatprep.subr.mxu0 0.0
  %3933 = vmatpush1.msra.mxu0 0.0
  %3934 = vmatprep.subr.mxu0 0.0
  %3935 = vmatpush1.msra.mxu0 0.0
  %3936 = vmatprep.subr.mxu0 0.0
  %3937 = vmatpush1.msra.mxu0 0.0
  %3938 = vmatprep.subr.mxu0 0.0
  %3939 = vmatpush1.msra.mxu0 0.0
  %3940 = vmatprep.subr.mxu0 0.0
  %3941 = vmatpush1.msra.mxu0 0.0
  %3942 = vmatprep.subr.mxu0 0.0
  %3943 = vmatpush1.msra.mxu0 0.0
  %3944 = vmatprep.subr.mxu0 0.0
  %3945 = vmatpush1.msra.mxu0 0.0
  %3946 = vmatprep.subr.mxu0 0.0
  %3947 = vmatpush1.msra.mxu0 0.0
  %3948 = vmatprep.subr.mxu0 0.0
  %3949 = vmatpush1.msra.mxu0 0.0
  %3950 = vmatprep.subr.mxu0 0.0
  %3951 = vmatpush1.msra.mxu0 0.0
  %3952 = vmatprep.subr.mxu0 0.0
  %3953 = vmatpush1.msra.mxu0 0.0
  %3954 = vmatprep.subr.mxu0 0.0
  %3955 = vmatpush1.msra.mxu0 0.0
  %3956 = vmatprep.subr.mxu0 0.0
  %3957 = vmatpush1.msra.mxu0 0.0
  %3958 = vmatprep.subr.mxu0 0.0
  %3959 = vmatpush1.msra.mxu0 0.0
  %3960 = vmatprep.subr.mxu0 0.0
  %3961 = vmatpush1.msra.mxu0 0.0
  %3962 = vmatprep.mubr.f32.mxu0 0.0
  %3963 = vmatmul.mubr.f32.gmra.mrb[0].mxu0 %v3893
  %v3964 = vpop.f32.mrb[0].mxu0
  %v3965 = vadd.f32 %v3889, %v3964
  %v3966 = vpop.f32.mrb[0].mxu0
  %3967 = vdwg.mxu0
  %vm3968 = vcmask 80896
  %v3969 = vsel %vm3968, %v3965, -inf
  %3970 = vmax.xlane.f32.xlu0 %v3969
  %v3971 = vpop.xlane.xlu0 %3970
  %v3972 = vsub.f32 %v3965, %v3971
  %v3973 = vmul.f32 %v3972, 1.442695
  %v3974 = vpow.pop %v3973
  %v3975 = vsel %vm3968, %v3974, 0.0
  %3976 = vadd.xlane.f32.xlu0 %v3975
  %v3977 = vpop.xlane.xlu0 %3976
  %v3978 = vlog2.pop %v3977
  %v3979 = vmul.f32 %v3978, 0.6931472
  %v3980 = vadd.f32 %v3979, %v3971
  %v3981 = vsub.f32 %v3965, %v3980
  %3982 = vst.msk [vmem:[%s9] sm:$0xff] %vm3968, %v3981
  // Predicated region
  $region38: #{net_forward.1} parent=0 // pred_check
    _
  $region39: #{net_forward.1} parent=0 // pred_check_branch
    %3984 = sbr.rel (0) target = $region41
  $region40: #{net_forward.1} parent=0 // pred_region
    _
  $region41: #{net_forward.1} parent=0 // pred_fallthru
    _
  // Predicated region
  $region42: #{net_forward.1} parent=0 // pred_check
    _
  $region43: #{net_forward.1} parent=0 // pred_check_branch
    %3986 = sbr.rel (0) target = $region45
  $region44: #{net_forward.1} parent=0 // pred_region
    _
  $region45: #{net_forward.1} parent=0 // pred_fallthru
    _

</llo_original>
